<compile_context>
chip_gen: v7x
topology: tpu7x:2x2x1
jax: 0.10.0
libtpu: 0.0.40
codegen_flags: <defaults>
</compile_context>

<pallas_src>
import functools

import jax
import jax.numpy as jnp
from jax import lax
from jax.experimental import pallas as pl
from jax.experimental.pallas import tpu as pltpu

EPS = 1e-5
LANE = 128


def _round_up(x, m):
    return (x + m - 1) // m * m


# ----------------------------- fused Pallas kernel ----------------------------- #

def _res_block_kernel(x_ref, w1_ref, w2_ref, wsc_ref, c_ref, o_ref, out1_scr, *,
                      k, stride, Ho, Wo, cin, coutp, pad2,
                      sc_phase, sc_qh, sc_qw, relu_shortcut):
    M = Ho * Wo

    # Packed per-channel constants: rows 0..4 = bn1 scale, bn1 shift, bn2 scale,
    # bn2 shift, shortcut bias (rows 5..7 are padding).
    s1 = c_ref[0:1, :]
    t1 = c_ref[1:2, :]
    s2 = c_ref[2:3, :]
    t2 = c_ref[3:4, :]
    bsc = c_ref[4:5, :]

    # One upcast of the whole (phase-decomposed) input block; all tap slicing /
    # reshaping then happens on f32 values (tile-aligned sublane collapses), dropping
    # back to bf16 right before each MXU dot.
    ximg = x_ref[...].astype(jnp.float32)          # (stride*stride, Hh, Wh, cin)

    def tap(phase, h0, w0):
        v = ximg[phase, h0:h0 + Ho, w0:w0 + Wo, :]
        return v.reshape(M, cin).astype(jnp.bfloat16)

    # ---- conv1: direct conv as a sum of k*k shifted matmuls (no HBM im2col) ----
    acc = jnp.zeros((M, coutp), jnp.float32)
    for kh in range(k):
        for kw in range(k):
            phase = (kh % stride) * stride + (kw % stride)
            lhs = tap(phase, kh // stride, kw // stride)
            acc += jnp.dot(lhs, w1_ref[kh * k + kw],
                           preferred_element_type=jnp.float32)
    out1 = jnp.maximum(acc * s1 + t1, 0.0)          # bn1 + relu1 (f32)

    # ---- stage out1 in VMEM with a zero halo for conv2's SAME padding ----
    # (re-zeroed every grid step so megacore grid sharding stays correct)
    out1_scr[...] = jnp.zeros_like(out1_scr)
    out1_scr[pad2:pad2 + Ho, pad2:pad2 + Wo, :] = out1.reshape(Ho, Wo, coutp)

    # ---- conv2: reads out1 straight from VMEM (never goes to HBM) ----
    acc = jnp.zeros((M, coutp), jnp.float32)
    for kh in range(k):
        for kw in range(k):
            lhs = out1_scr[kh:kh + Ho, kw:kw + Wo, :].reshape(M, coutp)
            acc += jnp.dot(lhs.astype(jnp.bfloat16), w2_ref[kh * k + kw],
                           preferred_element_type=jnp.float32)
    out2 = jnp.maximum(acc * s2 + t2, 0.0)          # bn2 + relu2 (f32)

    # ---- fused shortcut: 1x1 conv (+ReLU) or identity-as-eye matmul ----
    xs = tap(sc_phase, sc_qh, sc_qw)
    sc = jnp.dot(xs, wsc_ref[...], preferred_element_type=jnp.float32) + bsc
    if relu_shortcut:
        sc = jnp.maximum(sc, 0.0)

    # ---- residual add + end relu, lane-dense store ----
    o_ref[0] = jnp.maximum(out2 + sc, 0.0).astype(o_ref.dtype)


# ------------------------- wrapper / parameter plumbing ------------------------ #

def _build_phases(x_nhwc, k, s):
    """TF-style SAME pad + stride-s phase decomposition of an NHWC image.

    Returns xph of shape (N*s*s, Hh, Wh, C) with
      xph[n*s*s + rh*s + rw, a, b, c] == x_padded[n, a*s + rh, b*s + rw, c]
    so every conv tap is a *contiguous* (Ho, Wo, C) window inside the kernel.
    """
    N, H, W, C = x_nhwc.shape
    Ho, Wo = -(-H // s), -(-W // s)
    pad_h = max((Ho - 1) * s + k - H, 0)
    pad_w = max((Wo - 1) * s + k - W, 0)
    pt, plft = pad_h // 2, pad_w // 2
    Hh = Ho + max((k - 1) // s, pt // s)
    Wh = Wo + max((k - 1) // s, plft // s)
    xp = jnp.pad(x_nhwc, ((0, 0),
                          (pt, s * Hh - H - pt),
                          (plft, s * Wh - W - plft),
                          (0, 0)))
    xph = xp.reshape(N, Hh, s, Wh, s, C).transpose(0, 2, 4, 1, 3, 5)
    return xph.reshape(N * s * s, Hh, Wh, C), (Ho, Wo, pt, plft, Hh, Wh)


def _fold_bn(conv_b, gamma, beta, mean, var):
    scale = gamma / jnp.sqrt(var + EPS)
    shift = (conv_b - mean) * scale + beta
    return scale.astype(jnp.float32), shift.astype(jnp.float32)


def res_conv2d_forward(x_nchw, params, kernel_size, downsample):
    k = kernel_size
    stride = 2 if downsample else 1
    N, in_ch, H, W = x_nchw.shape
    out_ch = params["conv1_w"].shape[0]
    coutp = _round_up(out_ch, LANE)            # lane-dense output channels
    proj = downsample or (in_ch != out_ch)

    # NHWC activations across the whole block; bf16 in HBM / into the MXU.
    x = jnp.transpose(x_nchw, (0, 2, 3, 1)).astype(jnp.bfloat16)
    xph, (Ho, Wo, pt, plft, Hh, Wh) = _build_phases(x, k, stride)
    M = Ho * Wo

    def wmat(w, cin_pad):
        # (Cout, Cin, kh, kw) -> (kh*kw, Cin_pad, Coutp), bf16, zero-padded.
        kh, kw = w.shape[2], w.shape[3]
        wm = jnp.transpose(w, (2, 3, 1, 0)).reshape(kh * kw, w.shape[1], w.shape[0])
        wm = jnp.pad(wm, ((0, 0), (0, cin_pad - w.shape[1]), (0, coutp - w.shape[0])))
        return wm.astype(jnp.bfloat16)

    w1 = wmat(params["conv1_w"], in_ch)        # (k*k, in_ch, coutp)
    w2 = wmat(params["conv2_w"], coutp)        # (k*k, coutp, coutp); padded in-channels = zero rows
    s1, t1 = _fold_bn(params["conv1_b"], params["bn1_g"], params["bn1_b"],
                      params["bn1_m"], params["bn1_v"])
    s2, t2 = _fold_bn(params["conv2_b"], params["bn2_g"], params["bn2_b"],
                      params["bn2_m"], params["bn2_v"])

    if proj:
        wsc = jnp.transpose(params["sc_w"].reshape(out_ch, in_ch), (1, 0))
        bsc = params["sc_b"].astype(jnp.float32)
    else:
        wsc = jnp.eye(in_ch, dtype=jnp.float32)    # identity shortcut as an eye matmul
        bsc = jnp.zeros((out_ch,), jnp.float32)
    wsc = jnp.pad(wsc, ((0, 0), (0, coutp - out_ch))).astype(jnp.bfloat16)

    # Pack the five per-channel f32 constant vectors into a single (8, coutp) block.
    consts = jnp.stack([s1, t1, s2, t2, bsc], axis=0)               # (5, out_ch)
    consts = jnp.pad(consts, ((0, 3), (0, coutp - out_ch))).astype(jnp.float32)

    kern = functools.partial(
        _res_block_kernel, k=k, stride=stride, Ho=Ho, Wo=Wo, cin=in_ch, coutp=coutp,
        pad2=(k - 1) // 2,
        sc_phase=(pt % stride) * stride + (plft % stride),
        sc_qh=pt // stride, sc_qw=plft // stride,
        relu_shortcut=proj)

    flops = 2 * N * M * coutp * (k * k * in_ch + k * k * coutp + in_ch)
    bytes_accessed = (xph.size * 2 + w1.size * 2 + w2.size * 2 + wsc.size * 2
                      + consts.size * 4 + N * M * coutp * 4)

    out = pl.pallas_call(
        kern,
        out_shape=jax.ShapeDtypeStruct((N, M, coutp), jnp.float32),
        grid_spec=pltpu.PrefetchScalarGridSpec(
            num_scalar_prefetch=0,
            grid=(N,),                                   # one image per grid step
            in_specs=[
                pl.BlockSpec((stride * stride, Hh, Wh, in_ch), lambda n: (n, 0, 0, 0)),
                pl.BlockSpec((k * k, in_ch, coutp), lambda n: (0, 0, 0)),
                pl.BlockSpec((k * k, coutp, coutp), lambda n: (0, 0, 0)),
                pl.BlockSpec((in_ch, coutp), lambda n: (0, 0)),
                pl.BlockSpec((8, coutp), lambda n: (0, 0)),
            ],
            out_specs=pl.BlockSpec((1, M, coutp), lambda n: (n, 0, 0)),
            scratch_shapes=[pltpu.VMEM((Ho + k - 1, Wo + k - 1, coutp), jnp.float32)],
        ),
        compiler_params=pltpu.CompilerParams(dimension_semantics=("parallel",)),
        cost_estimate=pl.CostEstimate(flops=flops, transcendentals=0,
                                      bytes_accessed=bytes_accessed),
    )(xph, w1, w2, wsc, consts)

    out = out[:, :, :out_ch].reshape(N, Ho, Wo, out_ch)   # drop lane padding once
    return jnp.transpose(out, (0, 3, 1, 2)).astype(x_nchw.dtype)   # -> NCHW


# ------------------------------ pure-JAX reference ----------------------------- #

def _ref_conv(x, w, b, stride):
    y = lax.conv_general_dilated(
        x, w, window_strides=(stride, stride), padding="SAME",
        dimension_numbers=("NCHW", "OIHW", "NCHW"))
    return y + b[None, :, None, None]


def _ref_bn(x, g, b, m, v):
    return (x - m[None, :, None, None]) / jnp.sqrt(v[None, :, None, None] + EPS) \
        * g[None, :, None, None] + b[None, :, None, None]


def ref_forward(x, params, kernel_size, downsample):
    in_ch = x.shape[1]
    out_ch = params["conv1_w"].shape[0]
    stride = 2 if downsample else 1
    out = jax.nn.relu(_ref_bn(_ref_conv(x, params["conv1_w"], params["conv1_b"], stride),
                              params["bn1_g"], params["bn1_b"], params["bn1_m"], params["bn1_v"]))
    out = jax.nn.relu(_ref_bn(_ref_conv(out, params["conv2_w"], params["conv2_b"], 1),
                              params["bn2_g"], params["bn2_b"], params["bn2_m"], params["bn2_v"]))
    if downsample or in_ch != out_ch:
        sc = jax.nn.relu(_ref_conv(x, params["sc_w"], params["sc_b"], stride))
    else:
        sc = x
    return jax.nn.relu(out + sc)


# ----------------------------------- main --------------------------------------- #

def _init_params(key, in_ch, out_ch, k):
    ks = jax.random.split(key, 12)
    return {
        "conv1_w": 0.1 * jax.random.normal(ks[0], (out_ch, in_ch, k, k), jnp.float32),
        "conv1_b": 0.1 * jax.random.normal(ks[1], (out_ch,), jnp.float32),
        "conv2_w": 0.1 * jax.random.normal(ks[2], (out_ch, out_ch, k, k), jnp.float32),
        "conv2_b": 0.1 * jax.random.normal(ks[3], (out_ch,), jnp.float32),
        "sc_w":    0.1 * jax.random.normal(ks[4], (out_ch, in_ch, 1, 1), jnp.float32),
        "sc_b":    0.1 * jax.random.normal(ks[5], (out_ch,), jnp.float32),
        "bn1_g": 1.0 + 0.1 * jax.random.normal(ks[6], (out_ch,), jnp.float32),
        "bn1_b": 0.1 * jax.random.normal(ks[7], (out_ch,), jnp.float32),
        "bn1_m": 0.1 * jax.random.normal(ks[8], (out_ch,), jnp.float32),
        "bn1_v": jax.random.uniform(ks[9], (out_ch,), jnp.float32, 0.5, 1.5),
        "bn2_g": 1.0 + 0.1 * jax.random.normal(ks[10], (out_ch,), jnp.float32),
        "bn2_b": 0.1 * jax.random.normal(ks[11], (out_ch,), jnp.float32),
        "bn2_m": jnp.zeros((out_ch,), jnp.float32),
        "bn2_v": jnp.ones((out_ch,), jnp.float32),
    }


def _bf16_round(a):
    # Mimic the kernel's bf16 MXU inputs in the f32 reference.
    return a.astype(jnp.bfloat16).astype(jnp.float32)


if __name__ == "__main__":
    key = jax.random.PRNGKey(0)

    configs = [
        # (batch, in_ch, out_ch, hw, ksize, downsample)
        (2, 4, 8, 16, 3, False),   # projection shortcut (channel change), stride 1
        (2, 8, 8, 16, 3, False),   # identity shortcut
        (2, 4, 8, 16, 3, True),    # downsample: stride-2 conv1 + stride-2 1x1 shortcut
    ]

    for idx, (batch, in_ch, out_ch, hw, ksize, down) in enumerate(configs):
        k_x, k_p, key = jax.random.split(key, 3)
        x = jax.random.normal(k_x, (batch, in_ch, hw, hw), jnp.float32)  # NCHW, like PyTorch
        params = _init_params(k_p, in_ch, out_ch, ksize)

        fwd = jax.jit(functools.partial(res_conv2d_forward,
                                        kernel_size=ksize, downsample=down))
        y = fwd(x, params)
        jax.block_until_ready(y)

        # Reference with the same bf16 rounding of x / conv weights as the kernel.
        pq = dict(params)
        for w_name in ("conv1_w", "conv2_w", "sc_w"):
            pq[w_name] = _bf16_round(params[w_name])
        y_ref = ref_forward(_bf16_round(x), pq, ksize, down)

        assert y.shape == y_ref.shape, (y.shape, y_ref.shape)
        err = float(jnp.max(jnp.abs(y - y_ref)))
        assert jnp.allclose(y, y_ref, atol=3e-2, rtol=3e-2), (idx, err)

    print("KERNEL_OK")
</pallas_src>

<mosaic_0001>
module attributes {stable_mosaic.version = 11 : i64} {
  func.func @_res_block_kernel(%arg0: i32, %arg1: memref<1x18x18x4xbf16, #tpu.memory_space<vmem>>, %arg2: memref<9x4x128xbf16, #tpu.memory_space<vmem>>, %arg3: memref<9x128x128xbf16, #tpu.memory_space<vmem>>, %arg4: memref<4x128xbf16, #tpu.memory_space<vmem>>, %arg5: memref<8x128xf32, #tpu.memory_space<vmem>>, %arg6: memref<1x256x128xf32, #tpu.memory_space<vmem>>, %arg7: memref<18x18x128xf32, #tpu.memory_space<vmem>>) attributes {dimension_semantics = [#tpu.dimension_semantics<parallel>], iteration_bounds = array<i64: 2>, scalar_prefetch = 0 : i64, scratch_operands = 1 : i64, tpu.core_type = #tpu.core_type<tc>, window_params = [{transform_indices = @transform_0, window_bounds = array<i64: 1, 18, 18, 4>}, {pipeline_mode = #tpu.pipeline_mode<synchronous>, transform_indices = @transform_1, window_bounds = array<i64: 9, 4, 128>}, {pipeline_mode = #tpu.pipeline_mode<synchronous>, transform_indices = @transform_2, window_bounds = array<i64: 9, 128, 128>}, {pipeline_mode = #tpu.pipeline_mode<synchronous>, transform_indices = @transform_3, window_bounds = array<i64: 4, 128>}, {pipeline_mode = #tpu.pipeline_mode<synchronous>, transform_indices = @transform_4, window_bounds = array<i64: 8, 128>}, {transform_indices = @transform_5, window_bounds = array<i64: 1, 256, 128>}]} {
    %c0 = arith.constant 0 : index
    %c0_0 = arith.constant 0 : index
    %0 = vector.load %arg5[%c0, %c0_0] : memref<8x128xf32, #tpu.memory_space<vmem>>, vector<1x128xf32>
    %c1 = arith.constant 1 : index
    %c0_1 = arith.constant 0 : index
    %1 = vector.load %arg5[%c1, %c0_1] : memref<8x128xf32, #tpu.memory_space<vmem>>, vector<1x128xf32>
    %c2 = arith.constant 2 : index
    %c0_2 = arith.constant 0 : index
    %2 = vector.load %arg5[%c2, %c0_2] : memref<8x128xf32, #tpu.memory_space<vmem>>, vector<1x128xf32>
    %c3 = arith.constant 3 : index
    %c0_3 = arith.constant 0 : index
    %3 = vector.load %arg5[%c3, %c0_3] : memref<8x128xf32, #tpu.memory_space<vmem>>, vector<1x128xf32>
    %c4 = arith.constant 4 : index
    %c0_4 = arith.constant 0 : index
    %4 = vector.load %arg5[%c4, %c0_4] : memref<8x128xf32, #tpu.memory_space<vmem>>, vector<1x128xf32>
    %c0_5 = arith.constant 0 : index
    %c0_6 = arith.constant 0 : index
    %c0_7 = arith.constant 0 : index
    %c0_8 = arith.constant 0 : index
    %5 = vector.load %arg1[%c0_5, %c0_6, %c0_7, %c0_8] : memref<1x18x18x4xbf16, #tpu.memory_space<vmem>>, vector<1x18x18x4xbf16>
    %6 = arith.extf %5 : vector<1x18x18x4xbf16> to vector<1x18x18x4xf32>
    %cst = arith.constant 0.000000e+00 : f32
    %7 = vector.broadcast %cst : f32 to vector<256x128xf32>
    %8 = vector.extract_strided_slice %6 {offsets = [0, 0, 0, 0], sizes = [1, 16, 16, 4], strides = [1, 1, 1, 1]} : vector<1x18x18x4xf32> to vector<1x16x16x4xf32>
    %9 = vector.shape_cast %8 : vector<1x16x16x4xf32> to vector<16x16x4xf32>
    %10 = vector.shape_cast %9 : vector<16x16x4xf32> to vector<256x4xf32>
    %11 = arith.truncf %10 : vector<256x4xf32> to vector<256x4xbf16>
    %c0_9 = arith.constant 0 : index
    %c0_10 = arith.constant 0 : index
    %c0_11 = arith.constant 0 : index
    %12 = vector.load %arg2[%c0_9, %c0_10, %c0_11] : memref<9x4x128xbf16, #tpu.memory_space<vmem>>, vector<1x4x128xbf16>
    %13 = vector.shape_cast %12 : vector<1x4x128xbf16> to vector<4x128xbf16>
    %cst_12 = arith.constant dense<0.000000e+00> : vector<256x128xf32>
    %14 = tpu.matmul %11, %13, %cst_12 {dimension_numbers = #tpu.dot_dimension_numbers<[1], [0], [0], [1], [0, 0, 1, 1], [], []>} : vector<256x4xbf16>, vector<4x128xbf16>, vector<256x128xf32> -> vector<256x128xf32>
    %15 = arith.addf %7, %14 : vector<256x128xf32>
    %16 = vector.extract_strided_slice %6 {offsets = [0, 0, 1, 0], sizes = [1, 16, 16, 4], strides = [1, 1, 1, 1]} : vector<1x18x18x4xf32> to vector<1x16x16x4xf32>
    %17 = vector.shape_cast %16 : vector<1x16x16x4xf32> to vector<16x16x4xf32>
    %18 = vector.shape_cast %17 : vector<16x16x4xf32> to vector<256x4xf32>
    %19 = arith.truncf %18 : vector<256x4xf32> to vector<256x4xbf16>
    %c1_13 = arith.constant 1 : index
    %c0_14 = arith.constant 0 : index
    %c0_15 = arith.constant 0 : index
    %20 = vector.load %arg2[%c1_13, %c0_14, %c0_15] : memref<9x4x128xbf16, #tpu.memory_space<vmem>>, vector<1x4x128xbf16>
    %21 = vector.shape_cast %20 : vector<1x4x128xbf16> to vector<4x128xbf16>
    %cst_16 = arith.constant dense<0.000000e+00> : vector<256x128xf32>
    %22 = tpu.matmul %19, %21, %cst_16 {dimension_numbers = #tpu.dot_dimension_numbers<[1], [0], [0], [1], [0, 0, 1, 1], [], []>} : vector<256x4xbf16>, vector<4x128xbf16>, vector<256x128xf32> -> vector<256x128xf32>
    %23 = arith.addf %15, %22 : vector<256x128xf32>
    %24 = vector.extract_strided_slice %6 {offsets = [0, 0, 2, 0], sizes = [1, 16, 16, 4], strides = [1, 1, 1, 1]} : vector<1x18x18x4xf32> to vector<1x16x16x4xf32>
    %25 = vector.shape_cast %24 : vector<1x16x16x4xf32> to vector<16x16x4xf32>
    %26 = vector.shape_cast %25 : vector<16x16x4xf32> to vector<256x4xf32>
    %27 = arith.truncf %26 : vector<256x4xf32> to vector<256x4xbf16>
    %c2_17 = arith.constant 2 : index
    %c0_18 = arith.constant 0 : index
    %c0_19 = arith.constant 0 : index
    %28 = vector.load %arg2[%c2_17, %c0_18, %c0_19] : memref<9x4x128xbf16, #tpu.memory_space<vmem>>, vector<1x4x128xbf16>
    %29 = vector.shape_cast %28 : vector<1x4x128xbf16> to vector<4x128xbf16>
    %cst_20 = arith.constant dense<0.000000e+00> : vector<256x128xf32>
    %30 = tpu.matmul %27, %29, %cst_20 {dimension_numbers = #tpu.dot_dimension_numbers<[1], [0], [0], [1], [0, 0, 1, 1], [], []>} : vector<256x4xbf16>, vector<4x128xbf16>, vector<256x128xf32> -> vector<256x128xf32>
    %31 = arith.addf %23, %30 : vector<256x128xf32>
    %32 = vector.extract_strided_slice %6 {offsets = [0, 1, 0, 0], sizes = [1, 16, 16, 4], strides = [1, 1, 1, 1]} : vector<1x18x18x4xf32> to vector<1x16x16x4xf32>
    %33 = vector.shape_cast %32 : vector<1x16x16x4xf32> to vector<16x16x4xf32>
    %34 = vector.shape_cast %33 : vector<16x16x4xf32> to vector<256x4xf32>
    %35 = arith.truncf %34 : vector<256x4xf32> to vector<256x4xbf16>
    %c3_21 = arith.constant 3 : index
    %c0_22 = arith.constant 0 : index
    %c0_23 = arith.constant 0 : index
    %36 = vector.load %arg2[%c3_21, %c0_22, %c0_23] : memref<9x4x128xbf16, #tpu.memory_space<vmem>>, vector<1x4x128xbf16>
    %37 = vector.shape_cast %36 : vector<1x4x128xbf16> to vector<4x128xbf16>
    %cst_24 = arith.constant dense<0.000000e+00> : vector<256x128xf32>
    %38 = tpu.matmul %35, %37, %cst_24 {dimension_numbers = #tpu.dot_dimension_numbers<[1], [0], [0], [1], [0, 0, 1, 1], [], []>} : vector<256x4xbf16>, vector<4x128xbf16>, vector<256x128xf32> -> vector<256x128xf32>
    %39 = arith.addf %31, %38 : vector<256x128xf32>
    %40 = vector.extract_strided_slice %6 {offsets = [0, 1, 1, 0], sizes = [1, 16, 16, 4], strides = [1, 1, 1, 1]} : vector<1x18x18x4xf32> to vector<1x16x16x4xf32>
    %41 = vector.shape_cast %40 : vector<1x16x16x4xf32> to vector<16x16x4xf32>
    %42 = vector.shape_cast %41 : vector<16x16x4xf32> to vector<256x4xf32>
    %43 = arith.truncf %42 : vector<256x4xf32> to vector<256x4xbf16>
    %c4_25 = arith.constant 4 : index
    %c0_26 = arith.constant 0 : index
    %c0_27 = arith.constant 0 : index
    %44 = vector.load %arg2[%c4_25, %c0_26, %c0_27] : memref<9x4x128xbf16, #tpu.memory_space<vmem>>, vector<1x4x128xbf16>
    %45 = vector.shape_cast %44 : vector<1x4x128xbf16> to vector<4x128xbf16>
    %cst_28 = arith.constant dense<0.000000e+00> : vector<256x128xf32>
    %46 = tpu.matmul %43, %45, %cst_28 {dimension_numbers = #tpu.dot_dimension_numbers<[1], [0], [0], [1], [0, 0, 1, 1], [], []>} : vector<256x4xbf16>, vector<4x128xbf16>, vector<256x128xf32> -> vector<256x128xf32>
    %47 = arith.addf %39, %46 : vector<256x128xf32>
    %48 = vector.extract_strided_slice %6 {offsets = [0, 1, 2, 0], sizes = [1, 16, 16, 4], strides = [1, 1, 1, 1]} : vector<1x18x18x4xf32> to vector<1x16x16x4xf32>
    %49 = vector.shape_cast %48 : vector<1x16x16x4xf32> to vector<16x16x4xf32>
    %50 = vector.shape_cast %49 : vector<16x16x4xf32> to vector<256x4xf32>
    %51 = arith.truncf %50 : vector<256x4xf32> to vector<256x4xbf16>
    %c5 = arith.constant 5 : index
    %c0_29 = arith.constant 0 : index
    %c0_30 = arith.constant 0 : index
    %52 = vector.load %arg2[%c5, %c0_29, %c0_30] : memref<9x4x128xbf16, #tpu.memory_space<vmem>>, vector<1x4x128xbf16>
    %53 = vector.shape_cast %52 : vector<1x4x128xbf16> to vector<4x128xbf16>
    %cst_31 = arith.constant dense<0.000000e+00> : vector<256x128xf32>
    %54 = tpu.matmul %51, %53, %cst_31 {dimension_numbers = #tpu.dot_dimension_numbers<[1], [0], [0], [1], [0, 0, 1, 1], [], []>} : vector<256x4xbf16>, vector<4x128xbf16>, vector<256x128xf32> -> vector<256x128xf32>
    %55 = arith.addf %47, %54 : vector<256x128xf32>
    %56 = vector.extract_strided_slice %6 {offsets = [0, 2, 0, 0], sizes = [1, 16, 16, 4], strides = [1, 1, 1, 1]} : vector<1x18x18x4xf32> to vector<1x16x16x4xf32>
    %57 = vector.shape_cast %56 : vector<1x16x16x4xf32> to vector<16x16x4xf32>
    %58 = vector.shape_cast %57 : vector<16x16x4xf32> to vector<256x4xf32>
    %59 = arith.truncf %58 : vector<256x4xf32> to vector<256x4xbf16>
    %c6 = arith.constant 6 : index
    %c0_32 = arith.constant 0 : index
    %c0_33 = arith.constant 0 : index
    %60 = vector.load %arg2[%c6, %c0_32, %c0_33] : memref<9x4x128xbf16, #tpu.memory_space<vmem>>, vector<1x4x128xbf16>
    %61 = vector.shape_cast %60 : vector<1x4x128xbf16> to vector<4x128xbf16>
    %cst_34 = arith.constant dense<0.000000e+00> : vector<256x128xf32>
    %62 = tpu.matmul %59, %61, %cst_34 {dimension_numbers = #tpu.dot_dimension_numbers<[1], [0], [0], [1], [0, 0, 1, 1], [], []>} : vector<256x4xbf16>, vector<4x128xbf16>, vector<256x128xf32> -> vector<256x128xf32>
    %63 = arith.addf %55, %62 : vector<256x128xf32>
    %64 = vector.extract_strided_slice %6 {offsets = [0, 2, 1, 0], sizes = [1, 16, 16, 4], strides = [1, 1, 1, 1]} : vector<1x18x18x4xf32> to vector<1x16x16x4xf32>
    %65 = vector.shape_cast %64 : vector<1x16x16x4xf32> to vector<16x16x4xf32>
    %66 = vector.shape_cast %65 : vector<16x16x4xf32> to vector<256x4xf32>
    %67 = arith.truncf %66 : vector<256x4xf32> to vector<256x4xbf16>
    %c7 = arith.constant 7 : index
    %c0_35 = arith.constant 0 : index
    %c0_36 = arith.constant 0 : index
    %68 = vector.load %arg2[%c7, %c0_35, %c0_36] : memref<9x4x128xbf16, #tpu.memory_space<vmem>>, vector<1x4x128xbf16>
    %69 = vector.shape_cast %68 : vector<1x4x128xbf16> to vector<4x128xbf16>
    %cst_37 = arith.constant dense<0.000000e+00> : vector<256x128xf32>
    %70 = tpu.matmul %67, %69, %cst_37 {dimension_numbers = #tpu.dot_dimension_numbers<[1], [0], [0], [1], [0, 0, 1, 1], [], []>} : vector<256x4xbf16>, vector<4x128xbf16>, vector<256x128xf32> -> vector<256x128xf32>
    %71 = arith.addf %63, %70 : vector<256x128xf32>
    %72 = vector.extract_strided_slice %6 {offsets = [0, 2, 2, 0], sizes = [1, 16, 16, 4], strides = [1, 1, 1, 1]} : vector<1x18x18x4xf32> to vector<1x16x16x4xf32>
    %73 = vector.shape_cast %72 : vector<1x16x16x4xf32> to vector<16x16x4xf32>
    %74 = vector.shape_cast %73 : vector<16x16x4xf32> to vector<256x4xf32>
    %75 = arith.truncf %74 : vector<256x4xf32> to vector<256x4xbf16>
    %c8 = arith.constant 8 : index
    %c0_38 = arith.constant 0 : index
    %c0_39 = arith.constant 0 : index
    %76 = vector.load %arg2[%c8, %c0_38, %c0_39] : memref<9x4x128xbf16, #tpu.memory_space<vmem>>, vector<1x4x128xbf16>
    %77 = vector.shape_cast %76 : vector<1x4x128xbf16> to vector<4x128xbf16>
    %cst_40 = arith.constant dense<0.000000e+00> : vector<256x128xf32>
    %78 = tpu.matmul %75, %77, %cst_40 {dimension_numbers = #tpu.dot_dimension_numbers<[1], [0], [0], [1], [0, 0, 1, 1], [], []>} : vector<256x4xbf16>, vector<4x128xbf16>, vector<256x128xf32> -> vector<256x128xf32>
    %79 = arith.addf %71, %78 : vector<256x128xf32>
    %80 = vector.broadcast %0 : vector<1x128xf32> to vector<256x128xf32>
    %81 = arith.mulf %79, %80 : vector<256x128xf32>
    %82 = vector.broadcast %1 : vector<1x128xf32> to vector<256x128xf32>
    %83 = arith.addf %81, %82 : vector<256x128xf32>
    %cst_41 = arith.constant 0.000000e+00 : f32
    %84 = vector.broadcast %cst_41 : f32 to vector<256x128xf32>
    %85 = arith.maximumf %83, %84 : vector<256x128xf32>
    %cst_42 = arith.constant 0.000000e+00 : f32
    %86 = vector.broadcast %cst_42 : f32 to vector<18x18x128xf32>
    %c0_43 = arith.constant 0 : index
    %c0_44 = arith.constant 0 : index
    %c0_45 = arith.constant 0 : index
    %87 = vector.load %arg7[%c0_43, %c0_44, %c0_45] : memref<18x18x128xf32, #tpu.memory_space<vmem>>, vector<18x18x128xf32>
    tpu.vector_store %arg7[%c0_43, %c0_44, %c0_45], %86 {strides = array<i32>} : memref<18x18x128xf32, #tpu.memory_space<vmem>>, vector<18x18x128xf32>,
    %88 = vector.shape_cast %85 : vector<256x128xf32> to vector<16x16x128xf32>
    %c1_46 = arith.constant 1 : index
    %c1_47 = arith.constant 1 : index
    %c0_48 = arith.constant 0 : index
    %89 = vector.load %arg7[%c1_46, %c1_47, %c0_48] : memref<18x18x128xf32, #tpu.memory_space<vmem>>, vector<16x16x128xf32>
    tpu.vector_store %arg7[%c1_46, %c1_47, %c0_48], %88 {strides = array<i32>} : memref<18x18x128xf32, #tpu.memory_space<vmem>>, vector<16x16x128xf32>,
    %cst_49 = arith.constant 0.000000e+00 : f32
    %90 = vector.broadcast %cst_49 : f32 to vector<256x128xf32>
    %c0_50 = arith.constant 0 : index
    %c0_51 = arith.constant 0 : index
    %c0_52 = arith.constant 0 : index
    %91 = vector.load %arg7[%c0_50, %c0_51, %c0_52] : memref<18x18x128xf32, #tpu.memory_space<vmem>>, vector<16x16x128xf32>
    %92 = vector.shape_cast %91 : vector<16x16x128xf32> to vector<256x128xf32>
    %93 = arith.truncf %92 : vector<256x128xf32> to vector<256x128xbf16>
    %c0_53 = arith.constant 0 : index
    %c0_54 = arith.constant 0 : index
    %c0_55 = arith.constant 0 : index
    %94 = vector.load %arg3[%c0_53, %c0_54, %c0_55] : memref<9x128x128xbf16, #tpu.memory_space<vmem>>, vector<1x128x128xbf16>
    %95 = vector.shape_cast %94 : vector<1x128x128xbf16> to vector<128x128xbf16>
    %cst_56 = arith.constant dense<0.000000e+00> : vector<256x128xf32>
    %96 = tpu.matmul %93, %95, %cst_56 {dimension_numbers = #tpu.dot_dimension_numbers<[1], [0], [0], [1], [0, 0, 1, 1], [], []>} : vector<256x128xbf16>, vector<128x128xbf16>, vector<256x128xf32> -> vector<256x128xf32>
    %97 = arith.addf %90, %96 : vector<256x128xf32>
    %c0_57 = arith.constant 0 : index
    %c1_58 = arith.constant 1 : index
    %c0_59 = arith.constant 0 : index
    %98 = vector.load %arg7[%c0_57, %c1_58, %c0_59] : memref<18x18x128xf32, #tpu.memory_space<vmem>>, vector<16x16x128xf32>
    %99 = vector.shape_cast %98 : vector<16x16x128xf32> to vector<256x128xf32>
    %100 = arith.truncf %99 : vector<256x128xf32> to vector<256x128xbf16>
    %c1_60 = arith.constant 1 : index
    %c0_61 = arith.constant 0 : index
    %c0_62 = arith.constant 0 : index
    %101 = vector.load %arg3[%c1_60, %c0_61, %c0_62] : memref<9x128x128xbf16, #tpu.memory_space<vmem>>, vector<1x128x128xbf16>
    %102 = vector.shape_cast %101 : vector<1x128x128xbf16> to vector<128x128xbf16>
    %cst_63 = arith.constant dense<0.000000e+00> : vector<256x128xf32>
    %103 = tpu.matmul %100, %102, %cst_63 {dimension_numbers = #tpu.dot_dimension_numbers<[1], [0], [0], [1], [0, 0, 1, 1], [], []>} : vector<256x128xbf16>, vector<128x128xbf16>, vector<256x128xf32> -> vector<256x128xf32>
    %104 = arith.addf %97, %103 : vector<256x128xf32>
    %c0_64 = arith.constant 0 : index
    %c2_65 = arith.constant 2 : index
    %c0_66 = arith.constant 0 : index
    %105 = vector.load %arg7[%c0_64, %c2_65, %c0_66] : memref<18x18x128xf32, #tpu.memory_space<vmem>>, vector<16x16x128xf32>
    %106 = vector.shape_cast %105 : vector<16x16x128xf32> to vector<256x128xf32>
    %107 = arith.truncf %106 : vector<256x128xf32> to vector<256x128xbf16>
    %c2_67 = arith.constant 2 : index
    %c0_68 = arith.constant 0 : index
    %c0_69 = arith.constant 0 : index
    %108 = vector.load %arg3[%c2_67, %c0_68, %c0_69] : memref<9x128x128xbf16, #tpu.memory_space<vmem>>, vector<1x128x128xbf16>
    %109 = vector.shape_cast %108 : vector<1x128x128xbf16> to vector<128x128xbf16>
    %cst_70 = arith.constant dense<0.000000e+00> : vector<256x128xf32>
    %110 = tpu.matmul %107, %109, %cst_70 {dimension_numbers = #tpu.dot_dimension_numbers<[1], [0], [0], [1], [0, 0, 1, 1], [], []>} : vector<256x128xbf16>, vector<128x128xbf16>, vector<256x128xf32> -> vector<256x128xf32>
    %111 = arith.addf %104, %110 : vector<256x128xf32>
    %c1_71 = arith.constant 1 : index
    %c0_72 = arith.constant 0 : index
    %c0_73 = arith.constant 0 : index
    %112 = vector.load %arg7[%c1_71, %c0_72, %c0_73] : memref<18x18x128xf32, #tpu.memory_space<vmem>>, vector<16x16x128xf32>
    %113 = vector.shape_cast %112 : vector<16x16x128xf32> to vector<256x128xf32>
    %114 = arith.truncf %113 : vector<256x128xf32> to vector<256x128xbf16>
    %c3_74 = arith.constant 3 : index
    %c0_75 = arith.constant 0 : index
    %c0_76 = arith.constant 0 : index
    %115 = vector.load %arg3[%c3_74, %c0_75, %c0_76] : memref<9x128x128xbf16, #tpu.memory_space<vmem>>, vector<1x128x128xbf16>
    %116 = vector.shape_cast %115 : vector<1x128x128xbf16> to vector<128x128xbf16>
    %cst_77 = arith.constant dense<0.000000e+00> : vector<256x128xf32>
    %117 = tpu.matmul %114, %116, %cst_77 {dimension_numbers = #tpu.dot_dimension_numbers<[1], [0], [0], [1], [0, 0, 1, 1], [], []>} : vector<256x128xbf16>, vector<128x128xbf16>, vector<256x128xf32> -> vector<256x128xf32>
    %118 = arith.addf %111, %117 : vector<256x128xf32>
    %c1_78 = arith.constant 1 : index
    %c1_79 = arith.constant 1 : index
    %c0_80 = arith.constant 0 : index
    %119 = vector.load %arg7[%c1_78, %c1_79, %c0_80] : memref<18x18x128xf32, #tpu.memory_space<vmem>>, vector<16x16x128xf32>
    %120 = vector.shape_cast %119 : vector<16x16x128xf32> to vector<256x128xf32>
    %121 = arith.truncf %120 : vector<256x128xf32> to vector<256x128xbf16>
    %c4_81 = arith.constant 4 : index
    %c0_82 = arith.constant 0 : index
    %c0_83 = arith.constant 0 : index
    %122 = vector.load %arg3[%c4_81, %c0_82, %c0_83] : memref<9x128x128xbf16, #tpu.memory_space<vmem>>, vector<1x128x128xbf16>
    %123 = vector.shape_cast %122 : vector<1x128x128xbf16> to vector<128x128xbf16>
    %cst_84 = arith.constant dense<0.000000e+00> : vector<256x128xf32>
    %124 = tpu.matmul %121, %123, %cst_84 {dimension_numbers = #tpu.dot_dimension_numbers<[1], [0], [0], [1], [0, 0, 1, 1], [], []>} : vector<256x128xbf16>, vector<128x128xbf16>, vector<256x128xf32> -> vector<256x128xf32>
    %125 = arith.addf %118, %124 : vector<256x128xf32>
    %c1_85 = arith.constant 1 : index
    %c2_86 = arith.constant 2 : index
    %c0_87 = arith.constant 0 : index
    %126 = vector.load %arg7[%c1_85, %c2_86, %c0_87] : memref<18x18x128xf32, #tpu.memory_space<vmem>>, vector<16x16x128xf32>
    %127 = vector.shape_cast %126 : vector<16x16x128xf32> to vector<256x128xf32>
    %128 = arith.truncf %127 : vector<256x128xf32> to vector<256x128xbf16>
    %c5_88 = arith.constant 5 : index
    %c0_89 = arith.constant 0 : index
    %c0_90 = arith.constant 0 : index
    %129 = vector.load %arg3[%c5_88, %c0_89, %c0_90] : memref<9x128x128xbf16, #tpu.memory_space<vmem>>, vector<1x128x128xbf16>
    %130 = vector.shape_cast %129 : vector<1x128x128xbf16> to vector<128x128xbf16>
    %cst_91 = arith.constant dense<0.000000e+00> : vector<256x128xf32>
    %131 = tpu.matmul %128, %130, %cst_91 {dimension_numbers = #tpu.dot_dimension_numbers<[1], [0], [0], [1], [0, 0, 1, 1], [], []>} : vector<256x128xbf16>, vector<128x128xbf16>, vector<256x128xf32> -> vector<256x128xf32>
    %132 = arith.addf %125, %131 : vector<256x128xf32>
    %c2_92 = arith.constant 2 : index
    %c0_93 = arith.constant 0 : index
    %c0_94 = arith.constant 0 : index
    %133 = vector.load %arg7[%c2_92, %c0_93, %c0_94] : memref<18x18x128xf32, #tpu.memory_space<vmem>>, vector<16x16x128xf32>
    %134 = vector.shape_cast %133 : vector<16x16x128xf32> to vector<256x128xf32>
    %135 = arith.truncf %134 : vector<256x128xf32> to vector<256x128xbf16>
    %c6_95 = arith.constant 6 : index
    %c0_96 = arith.constant 0 : index
    %c0_97 = arith.constant 0 : index
    %136 = vector.load %arg3[%c6_95, %c0_96, %c0_97] : memref<9x128x128xbf16, #tpu.memory_space<vmem>>, vector<1x128x128xbf16>
    %137 = vector.shape_cast %136 : vector<1x128x128xbf16> to vector<128x128xbf16>
    %cst_98 = arith.constant dense<0.000000e+00> : vector<256x128xf32>
    %138 = tpu.matmul %135, %137, %cst_98 {dimension_numbers = #tpu.dot_dimension_numbers<[1], [0], [0], [1], [0, 0, 1, 1], [], []>} : vector<256x128xbf16>, vector<128x128xbf16>, vector<256x128xf32> -> vector<256x128xf32>
    %139 = arith.addf %132, %138 : vector<256x128xf32>
    %c2_99 = arith.constant 2 : index
    %c1_100 = arith.constant 1 : index
    %c0_101 = arith.constant 0 : index
    %140 = vector.load %arg7[%c2_99, %c1_100, %c0_101] : memref<18x18x128xf32, #tpu.memory_space<vmem>>, vector<16x16x128xf32>
    %141 = vector.shape_cast %140 : vector<16x16x128xf32> to vector<256x128xf32>
    %142 = arith.truncf %141 : vector<256x128xf32> to vector<256x128xbf16>
    %c7_102 = arith.constant 7 : index
    %c0_103 = arith.constant 0 : index
    %c0_104 = arith.constant 0 : index
    %143 = vector.load %arg3[%c7_102, %c0_103, %c0_104] : memref<9x128x128xbf16, #tpu.memory_space<vmem>>, vector<1x128x128xbf16>
    %144 = vector.shape_cast %143 : vector<1x128x128xbf16> to vector<128x128xbf16>
    %cst_105 = arith.constant dense<0.000000e+00> : vector<256x128xf32>
    %145 = tpu.matmul %142, %144, %cst_105 {dimension_numbers = #tpu.dot_dimension_numbers<[1], [0], [0], [1], [0, 0, 1, 1], [], []>} : vector<256x128xbf16>, vector<128x128xbf16>, vector<256x128xf32> -> vector<256x128xf32>
    %146 = arith.addf %139, %145 : vector<256x128xf32>
    %c2_106 = arith.constant 2 : index
    %c2_107 = arith.constant 2 : index
    %c0_108 = arith.constant 0 : index
    %147 = vector.load %arg7[%c2_106, %c2_107, %c0_108] : memref<18x18x128xf32, #tpu.memory_space<vmem>>, vector<16x16x128xf32>
    %148 = vector.shape_cast %147 : vector<16x16x128xf32> to vector<256x128xf32>
    %149 = arith.truncf %148 : vector<256x128xf32> to vector<256x128xbf16>
    %c8_109 = arith.constant 8 : index
    %c0_110 = arith.constant 0 : index
    %c0_111 = arith.constant 0 : index
    %150 = vector.load %arg3[%c8_109, %c0_110, %c0_111] : memref<9x128x128xbf16, #tpu.memory_space<vmem>>, vector<1x128x128xbf16>
    %151 = vector.shape_cast %150 : vector<1x128x128xbf16> to vector<128x128xbf16>
    %cst_112 = arith.constant dense<0.000000e+00> : vector<256x128xf32>
    %152 = tpu.matmul %149, %151, %cst_112 {dimension_numbers = #tpu.dot_dimension_numbers<[1], [0], [0], [1], [0, 0, 1, 1], [], []>} : vector<256x128xbf16>, vector<128x128xbf16>, vector<256x128xf32> -> vector<256x128xf32>
    %153 = arith.addf %146, %152 : vector<256x128xf32>
    %154 = vector.broadcast %2 : vector<1x128xf32> to vector<256x128xf32>
    %155 = arith.mulf %153, %154 : vector<256x128xf32>
    %156 = vector.broadcast %3 : vector<1x128xf32> to vector<256x128xf32>
    %157 = arith.addf %155, %156 : vector<256x128xf32>
    %cst_113 = arith.constant 0.000000e+00 : f32
    %158 = vector.broadcast %cst_113 : f32 to vector<256x128xf32>
    %159 = arith.maximumf %157, %158 : vector<256x128xf32>
    %160 = vector.extract_strided_slice %6 {offsets = [0, 1, 1, 0], sizes = [1, 16, 16, 4], strides = [1, 1, 1, 1]} : vector<1x18x18x4xf32> to vector<1x16x16x4xf32>
    %161 = vector.shape_cast %160 : vector<1x16x16x4xf32> to vector<16x16x4xf32>
    %162 = vector.shape_cast %161 : vector<16x16x4xf32> to vector<256x4xf32>
    %163 = arith.truncf %162 : vector<256x4xf32> to vector<256x4xbf16>
    %c0_114 = arith.constant 0 : index
    %c0_115 = arith.constant 0 : index
    %164 = vector.load %arg4[%c0_114, %c0_115] : memref<4x128xbf16, #tpu.memory_space<vmem>>, vector<4x128xbf16>
    %cst_116 = arith.constant dense<0.000000e+00> : vector<256x128xf32>
    %165 = tpu.matmul %163, %164, %cst_116 {dimension_numbers = #tpu.dot_dimension_numbers<[1], [0], [0], [1], [0, 0, 1, 1], [], []>} : vector<256x4xbf16>, vector<4x128xbf16>, vector<256x128xf32> -> vector<256x128xf32>
    %166 = vector.broadcast %4 : vector<1x128xf32> to vector<256x128xf32>
    %167 = arith.addf %165, %166 : vector<256x128xf32>
    %cst_117 = arith.constant 0.000000e+00 : f32
    %168 = vector.broadcast %cst_117 : f32 to vector<256x128xf32>
    %169 = arith.maximumf %167, %168 : vector<256x128xf32>
    %170 = arith.addf %159, %169 : vector<256x128xf32>
    %cst_118 = arith.constant 0.000000e+00 : f32
    %171 = vector.broadcast %cst_118 : f32 to vector<256x128xf32>
    %172 = arith.maximumf %170, %171 : vector<256x128xf32>
    %c0_119 = arith.constant 0 : index
    %c0_120 = arith.constant 0 : index
    %c0_121 = arith.constant 0 : index
    %173 = vector.load %arg6[%c0_119, %c0_120, %c0_121] : memref<1x256x128xf32, #tpu.memory_space<vmem>>, vector<1x256x128xf32>
    %174 = vector.shape_cast %173 : vector<1x256x128xf32> to vector<256x128xf32>
    %175 = vector.shape_cast %172 : vector<256x128xf32> to vector<1x256x128xf32>
    tpu.vector_store %arg6[%c0_119, %c0_120, %c0_121], %175 {strides = array<i32>} : memref<1x256x128xf32, #tpu.memory_space<vmem>>, vector<1x256x128xf32>,
    return
  }
  func.func @transform_0(%arg0: i32) -> (i32, i32, i32, i32) {
    %c0_i32 = arith.constant 0 : i32
    %c0_i32_0 = arith.constant 0 : i32
    %c0_i32_1 = arith.constant 0 : i32
    %c0_i32_2 = arith.constant 0 : i32
    return %arg0, %c0_i32, %c0_i32_0, %c0_i32_1 : i32, i32, i32, i32
  }
  func.func @transform_1(%arg0: i32) -> (i32, i32, i32) {
    %c0_i32 = arith.constant 0 : i32
    %c0_i32_0 = arith.constant 0 : i32
    %c0_i32_1 = arith.constant 0 : i32
    %c0_i32_2 = arith.constant 0 : i32
    return %c0_i32, %c0_i32_0, %c0_i32_1 : i32, i32, i32
  }
  func.func @transform_2(%arg0: i32) -> (i32, i32, i32) {
    %c0_i32 = arith.constant 0 : i32
    %c0_i32_0 = arith.constant 0 : i32
    %c0_i32_1 = arith.constant 0 : i32
    %c0_i32_2 = arith.constant 0 : i32
    return %c0_i32, %c0_i32_0, %c0_i32_1 : i32, i32, i32
  }
  func.func @transform_3(%arg0: i32) -> (i32, i32) {
    %c0_i32 = arith.constant 0 : i32
    %c0_i32_0 = arith.constant 0 : i32
    %c0_i32_1 = arith.constant 0 : i32
    return %c0_i32, %c0_i32_0 : i32, i32
  }
  func.func @transform_4(%arg0: i32) -> (i32, i32) {
    %c0_i32 = arith.constant 0 : i32
    %c0_i32_0 = arith.constant 0 : i32
    %c0_i32_1 = arith.constant 0 : i32
    return %c0_i32, %c0_i32_0 : i32, i32
  }
  func.func @transform_5(%arg0: i32) -> (i32, i32, i32) {
    %c0_i32 = arith.constant 0 : i32
    %c0_i32_0 = arith.constant 0 : i32
    %c0_i32_1 = arith.constant 0 : i32
    return %arg0, %c0_i32, %c0_i32_0 : i32, i32, i32
  }
}

</mosaic_0001>

<llo_original>
// kernel: res_conv2d_forward.1
$region0: #{res_conv2d_forward.1}
  #allocation0 [shape = 'u32[]', space=smem, size = 0x4, offset = 0x4, fixed_abs, tag = 'smem constant byte address 0x4 - core index']
  #allocation1 [shape = 'u32[144,128]{1,0:T(1,128)}', space=vmem, size = 0x12000, scoped, tag = 'internal scratch']
  #allocation2 [shape = 'f32[18,18,128]{2,1,0:T(8,128)}', space=vmem, size = 0x36000, scoped, tag = 'scratch operand']
  %s0 = inlined_call_operand.vmem [shape: bf16[2,18,18,4], index: 0, kind: input, shape index: {}]
  %s1 = inlined_call_operand.vmem [shape: bf16[9,4,128], index: 1, kind: input, shape index: {}]
  %s2 = inlined_call_operand.vmem [shape: bf16[9,128,128], index: 2, kind: input, shape index: {}]
  %s3 = inlined_call_operand.vmem [shape: bf16[4,128], index: 3, kind: input, shape index: {}]
  %s4 = inlined_call_operand.vmem [shape: f32[8,128], index: 4, kind: input, shape index: {}]
  %s5 = inlined_call_operand.vmem [shape: f32[2,256,128], index: 5, kind: output, shape index: {}]
  %s6 = sld [smem:[#allocation0]]
  $region53: #{res_conv2d_forward.1} parent=0
    _
  %s8 = ssub.s32 1, %s6
  %s9 = scalar_select 0, %s8, %s6
  loop: start=0, step=1, limit=4
  $region2: #{res_conv2d_forward.1} parent=0 // loop_pre_header
    _
  $region3: #{res_conv2d_forward.1} parent=0 // loop_header
    %s11 = sphi 0, %s15
    %p12 = scmp.ge.s32.totalorder %s11, 4
    %s21 = sphi 0, %s23
    %s24 = sphi 0, %s21
    %s25 = sphi 0, %s24
    %s41 = sphi 0, %s25
    %s45 = sphi 0, %s45
    %s47 = sphi 0, %s45
    %s48 = sphi 0, %s47
    %s62 = sphi 0, %s48
    %s66 = sphi 0, %s66
    %s68 = sphi 0, %s66
    %s69 = sphi 0, %s68
    %s83 = sphi 0, %s69
    %s87 = sphi 0, %s87
    %s89 = sphi 0, %s87
    %s90 = sphi 0, %s89
    %s104 = sphi 0, %s90
    %s108 = sphi 0, %s108
    %s110 = sphi 0, %s108
    %s111 = sphi 0, %s110
    %s125 = sphi 0, %s111
    %s131 = sphi 0, %s133
    %s134 = sphi 0, %s131
    %s135 = sphi 0, %s134
    %s151 = sphi 0, %s135
  $region4: #{res_conv2d_forward.1} parent=0 // loop_header_branch
    %14 = sbr.rel (%p12) target = $region8
  $region5: #{res_conv2d_forward.1} parent=0 // loop_body
    %s16 = ssub.s32 %s11, 1
    %s17 = ssub.s32 %s11, 2
    %s18 = sadd.s32 %s11, 1
    %s19 = ssub.s32 %s11, %s18
    %p20 = scmp.eq.s32.totalorder %s19, 0
    %s22 = sadd.s32 %s21, 1
    %s23 = scalar_select %p20, %s21, %s22
    %p26 = pneg %p20
    %p27 = scmp.eq.s32.totalorder %s11, 1
    %p28 = por %p26, %p27
    %p29 = scmp.ne.s32.totalorder %s21, %s24
    %p30 = scmp.eq.s32.totalorder %s11, 0
    %p31 = por %p29, %p30
    %p32 = scmp.ne.s32.totalorder %s21, %s24
    %p33 = scmp.eq.s32.totalorder %s16, 1
    %p34 = por %p32, %p33
    %p35 = scmp.ne.s32.totalorder %s24, %s25
    %p36 = scmp.eq.s32.totalorder %s16, 0
    %p37 = por %p35, %p36
    %p38 = scmp.ne.s32.totalorder %s24, %s25
    %p39 = scmp.eq.s32.totalorder %s17, 1
    %p40 = por %p38, %p39
    %p42 = scmp.ne.s32.totalorder %s25, %s41
    %p43 = scmp.eq.s32.totalorder %s17, 0
    %p44 = por %p42, %p43
    %s46 = sadd.s32 %s45, 1
    %p49 = scmp.eq.s32.totalorder %s11, 1
    %p50 = scmp.ne.s32.totalorder %s45, %s47
    %p51 = scmp.eq.s32.totalorder %s11, 0
    %p52 = por %p50, %p51
    %p53 = scmp.ne.s32.totalorder %s45, %s47
    %p54 = scmp.eq.s32.totalorder %s16, 1
    %p55 = por %p53, %p54
    %p56 = scmp.ne.s32.totalorder %s47, %s48
    %p57 = scmp.eq.s32.totalorder %s16, 0
    %p58 = por %p56, %p57
    %p59 = scmp.ne.s32.totalorder %s47, %s48
    %p60 = scmp.eq.s32.totalorder %s17, 1
    %p61 = por %p59, %p60
    %p63 = scmp.ne.s32.totalorder %s48, %s62
    %p64 = scmp.eq.s32.totalorder %s17, 0
    %p65 = por %p63, %p64
    %s67 = sadd.s32 %s66, 1
    %p70 = scmp.eq.s32.totalorder %s11, 1
    %p71 = scmp.ne.s32.totalorder %s66, %s68
    %p72 = scmp.eq.s32.totalorder %s11, 0
    %p73 = por %p71, %p72
    %p74 = scmp.ne.s32.totalorder %s66, %s68
    %p75 = scmp.eq.s32.totalorder %s16, 1
    %p76 = por %p74, %p75
    %p77 = scmp.ne.s32.totalorder %s68, %s69
    %p78 = scmp.eq.s32.totalorder %s16, 0
    %p79 = por %p77, %p78
    %p80 = scmp.ne.s32.totalorder %s68, %s69
    %p81 = scmp.eq.s32.totalorder %s17, 1
    %p82 = por %p80, %p81
    %p84 = scmp.ne.s32.totalorder %s69, %s83
    %p85 = scmp.eq.s32.totalorder %s17, 0
    %p86 = por %p84, %p85
    %s88 = sadd.s32 %s87, 1
    %p91 = scmp.eq.s32.totalorder %s11, 1
    %p92 = scmp.ne.s32.totalorder %s87, %s89
    %p93 = scmp.eq.s32.totalorder %s11, 0
    %p94 = por %p92, %p93
    %p95 = scmp.ne.s32.totalorder %s87, %s89
    %p96 = scmp.eq.s32.totalorder %s16, 1
    %p97 = por %p95, %p96
    %p98 = scmp.ne.s32.totalorder %s89, %s90
    %p99 = scmp.eq.s32.totalorder %s16, 0
    %p100 = por %p98, %p99
    %p101 = scmp.ne.s32.totalorder %s89, %s90
    %p102 = scmp.eq.s32.totalorder %s17, 1
    %p103 = por %p101, %p102
    %p105 = scmp.ne.s32.totalorder %s90, %s104
    %p106 = scmp.eq.s32.totalorder %s17, 0
    %p107 = por %p105, %p106
    %s109 = sadd.s32 %s108, 1
    %p112 = scmp.eq.s32.totalorder %s11, 1
    %p113 = scmp.ne.s32.totalorder %s108, %s110
    %p114 = scmp.eq.s32.totalorder %s11, 0
    %p115 = por %p113, %p114
    %p116 = scmp.ne.s32.totalorder %s108, %s110
    %p117 = scmp.eq.s32.totalorder %s16, 1
    %p118 = por %p116, %p117
    %p119 = scmp.ne.s32.totalorder %s110, %s111
    %p120 = scmp.eq.s32.totalorder %s16, 0
    %p121 = por %p119, %p120
    %p122 = scmp.ne.s32.totalorder %s110, %s111
    %p123 = scmp.eq.s32.totalorder %s17, 1
    %p124 = por %p122, %p123
    %p126 = scmp.ne.s32.totalorder %s111, %s125
    %p127 = scmp.eq.s32.totalorder %s17, 0
    %p128 = por %p126, %p127
    %s129 = ssub.s32 %s11, %s18
    %p130 = scmp.eq.s32.totalorder %s129, 0
    %s132 = sadd.s32 %s131, 1
    %s133 = scalar_select %p130, %s131, %s132
    %p136 = pneg %p130
    %p137 = scmp.eq.s32.totalorder %s11, 1
    %p138 = por %p136, %p137
    %p139 = scmp.ne.s32.totalorder %s131, %s134
    %p140 = scmp.eq.s32.totalorder %s11, 0
    %p141 = por %p139, %p140
    %p142 = scmp.ne.s32.totalorder %s131, %s134
    %p143 = scmp.eq.s32.totalorder %s16, 1
    %p144 = por %p142, %p143
    %p145 = scmp.ne.s32.totalorder %s134, %s135
    %p146 = scmp.eq.s32.totalorder %s16, 0
    %p147 = por %p145, %p146
    %p148 = scmp.ne.s32.totalorder %s134, %s135
    %p149 = scmp.eq.s32.totalorder %s17, 1
    %p150 = por %p148, %p149
    %p152 = scmp.ne.s32.totalorder %s135, %s151
    %p153 = scmp.eq.s32.totalorder %s17, 0
    %p154 = por %p152, %p153
    %p155 = scmp.le.s32.totalorder 1, %s11
    %p156 = scmp.lt.s32.totalorder %s11, 3
    %p157 = pnand %p155, %p156
    %p158 = pneg %p157
    // Predicated region
    $region9: #{res_conv2d_forward.1} parent=5 // pred_check
      _
    $region10: #{res_conv2d_forward.1} parent=5 // pred_check_branch
      %160 = sbr.rel (%p157) target = $region12
    $region11: #{res_conv2d_forward.1} parent=5 // pred_region
      %s161 = ssub.s32 %s11, 1
      // Predicated region
      $region13: #{res_conv2d_forward.1} parent=11 // pred_check
        %p162 = pneg %p58
      $region14: #{res_conv2d_forward.1} parent=11 // pred_check_branch
        %164 = sbr.rel (%p162) target = $region16
      $region15: #{res_conv2d_forward.1} parent=11 // pred_region
        _
      $region16: #{res_conv2d_forward.1} parent=11 // pred_fallthru
        _
      // Predicated region
      $region17: #{res_conv2d_forward.1} parent=11 // pred_check
        %p165 = pneg %p79
      $region18: #{res_conv2d_forward.1} parent=11 // pred_check_branch
        %167 = sbr.rel (%p165) target = $region20
      $region19: #{res_conv2d_forward.1} parent=11 // pred_region
        _
      $region20: #{res_conv2d_forward.1} parent=11 // pred_fallthru
        _
      // Predicated region
      $region21: #{res_conv2d_forward.1} parent=11 // pred_check
        %p168 = pneg %p100
      $region22: #{res_conv2d_forward.1} parent=11 // pred_check_branch
        %170 = sbr.rel (%p168) target = $region24
      $region23: #{res_conv2d_forward.1} parent=11 // pred_region
        _
      $region24: #{res_conv2d_forward.1} parent=11 // pred_fallthru
        _
      // Predicated region
      $region25: #{res_conv2d_forward.1} parent=11 // pred_check
        %p171 = pneg %p121
      $region26: #{res_conv2d_forward.1} parent=11 // pred_check_branch
        %173 = sbr.rel (%p171) target = $region28
      $region27: #{res_conv2d_forward.1} parent=11 // pred_region
        _
      $region28: #{res_conv2d_forward.1} parent=11 // pred_fallthru
        _
    $region12: #{res_conv2d_forward.1} parent=5 // pred_fallthru
      _
    %p174 = scmp.lt.s32.totalorder %s11, 2
    // Predicated region
    $region29: #{res_conv2d_forward.1} parent=5 // pred_check
      %p175 = pneg %p174
    $region30: #{res_conv2d_forward.1} parent=5 // pred_check_branch
      %177 = sbr.rel (%p175) target = $region32
    $region31: #{res_conv2d_forward.1} parent=5 // pred_region
      // Predicated region
      $region33: #{res_conv2d_forward.1} parent=31 // pred_check
        %p178 = pneg %p31
      $region34: #{res_conv2d_forward.1} parent=31 // pred_check_branch
        %180 = sbr.rel (%p178) target = $region36
      $region35: #{res_conv2d_forward.1} parent=31 // pred_region
        %p181 = scmp.lt.s32.totalorder %s11, 1
        %s182 = scalar_select %p181, %s11, 1
        %s183 = smul.addr %s182, 54
        %s184 = smul.addr %s183, 4
        %s185 = scalar_lea.vmem %s0, %s184
      $region36: #{res_conv2d_forward.1} parent=31 // pred_fallthru
        _
    $region32: #{res_conv2d_forward.1} parent=5 // pred_fallthru
      _
    %p186 = scmp.le.s32.totalorder 1, %s11
    %p187 = scmp.lt.s32.totalorder %s11, 3
    %p188 = pnand %p186, %p187
    %p189 = pneg %p188
    // Predicated region
    $region37: #{res_conv2d_forward.1} parent=5 // pred_check
      _
    $region38: #{res_conv2d_forward.1} parent=5 // pred_check_branch
      %191 = sbr.rel (%p188) target = $region40
    $region39: #{res_conv2d_forward.1} parent=5 // pred_region
      %s192 = ssub.s32 %s11, 1
      %p193 = scmp.lt.s32.totalorder %s16, 1
      %s194 = scalar_select %p193, %s16, 1
      %s195 = smul.addr %s194, 54
      %s196 = smul.addr %s195, 4
      %s197 = scalar_lea.vmem %s0, %s196
      %p198 = pneg %p37
      %p199 = pneg %p34
      %p200 = pneg %p58
      %p201 = pneg %p55
      %p202 = pneg %p79
      %p203 = pneg %p76
      %p204 = pneg %p100
      %p205 = pneg %p97
      %p206 = pneg %p121
      %p207 = pneg %p118
      %p208 = pneg %p147
      %p209 = pneg %p144
      %p210 = scmp.lt.s32.totalorder %s16, 1
      %s211 = scalar_select %p210, %s16, 1
      %s212 = smul.addr %s211, 32
      %s213 = smul.addr %s212, 8
      %s214 = scalar_lea.vmem %s5, %s213
      %p215 = scmp.lt.s32.totalorder %s16, 1
      %s216 = scalar_select %p215, %s16, 1
      %s217 = smul.addr %s216, 54
      %s218 = smul.addr %s217, 4
      %s219 = scalar_lea.vmem %s0, %s218
      %p220 = scmp.lt.s32.totalorder %s16, 1
      %s221 = scalar_select %p220, %s16, 1
      %s222 = smul.addr %s221, 32
      %s223 = smul.addr %s222, 8
      %s224 = scalar_lea.vmem %s5, %s223
      %v226 = vld [vmem:[%s4] sm:$0x1]
      %v227 = vld [vmem:[%s4 + $0x1] sm:$0x1]
      %v228 = vld [vmem:[%s4 + $0x2] sm:$0x1]
      %v229 = vld [vmem:[%s4 + $0x3] sm:$0x1]
      %v230 = vld [vmem:[%s4 + $0x4] sm:$0x1]
      %v231 = vld [vmem:[%s219] sm:$0xf]
      %v232 = vld [vmem:[%s219 + $0x4] sm:$0xf]
      %v233 = vld [vmem:[%s219 + $0x8] sm:$0x1]
      %v234 = vld [vmem:[%s219 + $0xc] sm:$0xf]
      %v235 = vld [vmem:[%s219 + $0x10] sm:$0xf]
      %v236 = vld [vmem:[%s219 + $0x14] sm:$0x1]
      %v237 = vld [vmem:[%s219 + $0x18] sm:$0xf]
      %v238 = vld [vmem:[%s219 + $0x1c] sm:$0xf]
      %v239 = vld [vmem:[%s219 + $0x20] sm:$0x1]
      %v240 = vld [vmem:[%s219 + $0x24] sm:$0xf]
      %v241 = vld [vmem:[%s219 + $0x28] sm:$0xf]
      %v242 = vld [vmem:[%s219 + $0x2c] sm:$0x1]
      %v243 = vld [vmem:[%s219 + $0x30] sm:$0xf]
      %v244 = vld [vmem:[%s219 + $0x34] sm:$0xf]
      %v245 = vld [vmem:[%s219 + $0x38] sm:$0x1]
      %v246 = vld [vmem:[%s219 + $0x3c] sm:$0xf]
      %v247 = vld [vmem:[%s219 + $0x40] sm:$0xf]
      %v248 = vld [vmem:[%s219 + $0x44] sm:$0x1]
      %v249 = vld [vmem:[%s219 + $0x48] sm:$0xf]
      %v250 = vld [vmem:[%s219 + $0x4c] sm:$0xf]
      %v251 = vld [vmem:[%s219 + $0x50] sm:$0x1]
      %v252 = vld [vmem:[%s219 + $0x54] sm:$0xf]
      %v253 = vld [vmem:[%s219 + $0x58] sm:$0xf]
      %v254 = vld [vmem:[%s219 + $0x5c] sm:$0x1]
      %v255 = vld [vmem:[%s219 + $0x60] sm:$0xf]
      %v256 = vld [vmem:[%s219 + $0x64] sm:$0xf]
      %v257 = vld [vmem:[%s219 + $0x68] sm:$0x1]
      %v258 = vld [vmem:[%s219 + $0x6c] sm:$0xf]
      %v259 = vld [vmem:[%s219 + $0x70] sm:$0xf]
      %v260 = vld [vmem:[%s219 + $0x74] sm:$0x1]
      %v261 = vld [vmem:[%s219 + $0x78] sm:$0xf]
      %v262 = vld [vmem:[%s219 + $0x7c] sm:$0xf]
      %v263 = vld [vmem:[%s219 + $0x80] sm:$0x1]
      %v264 = vld [vmem:[%s219 + $0x84] sm:$0xf]
      %v265 = vld [vmem:[%s219 + $0x88] sm:$0xf]
      %v266 = vld [vmem:[%s219 + $0x8c] sm:$0x1]
      %v267 = vld [vmem:[%s219 + $0x90] sm:$0xf]
      %v268 = vld [vmem:[%s219 + $0x94] sm:$0xf]
      %v269 = vld [vmem:[%s219 + $0x98] sm:$0x1]
      %v270 = vld [vmem:[%s219 + $0x9c] sm:$0xf]
      %v271 = vld [vmem:[%s219 + $0xa0] sm:$0xf]
      %v272 = vld [vmem:[%s219 + $0xa4] sm:$0x1]
      %v273 = vld [vmem:[%s219 + $0xa8] sm:$0xf]
      %v274 = vld [vmem:[%s219 + $0xac] sm:$0xf]
      %v275 = vld [vmem:[%s219 + $0xb0] sm:$0x1]
      %v276 = vld [vmem:[%s219 + $0xb4] sm:$0xf]
      %v277 = vld [vmem:[%s219 + $0xb8] sm:$0xf]
      %v278 = vld [vmem:[%s219 + $0xbc] sm:$0x1]
      %v279 = vld [vmem:[%s219 + $0xc0] sm:$0xf]
      %v280 = vld [vmem:[%s219 + $0xc4] sm:$0xf]
      %v281 = vld [vmem:[%s219 + $0xc8] sm:$0x1]
      %v282 = vld [vmem:[%s219 + $0xcc] sm:$0xf]
      %v283 = vld [vmem:[%s219 + $0xd0] sm:$0xf]
      %v284 = vld [vmem:[%s219 + $0xd4] sm:$0x1]
      %v285 = vunpack.c.l.bf16 %v231
      %v286 = vunpack.c.l.bf16 %v232
      %v287 = vunpack.c.l.bf16 %v233
      %v288 = vunpack.c.l.bf16 %v234
      %v289 = vunpack.c.l.bf16 %v235
      %v290 = vunpack.c.l.bf16 %v236
      %v291 = vunpack.c.l.bf16 %v237
      %v292 = vunpack.c.l.bf16 %v238
      %v293 = vunpack.c.l.bf16 %v239
      %v294 = vunpack.c.l.bf16 %v240
      %v295 = vunpack.c.l.bf16 %v241
      %v296 = vunpack.c.l.bf16 %v242
      %v297 = vunpack.c.l.bf16 %v243
      %v298 = vunpack.c.l.bf16 %v244
      %v299 = vunpack.c.l.bf16 %v245
      %v300 = vunpack.c.l.bf16 %v246
      %v301 = vunpack.c.l.bf16 %v247
      %v302 = vunpack.c.l.bf16 %v248
      %v303 = vunpack.c.l.bf16 %v249
      %v304 = vunpack.c.l.bf16 %v250
      %v305 = vunpack.c.l.bf16 %v251
      %v306 = vunpack.c.l.bf16 %v252
      %v307 = vunpack.c.l.bf16 %v253
      %v308 = vunpack.c.l.bf16 %v254
      %v309 = vunpack.c.l.bf16 %v255
      %v310 = vunpack.c.l.bf16 %v256
      %v311 = vunpack.c.l.bf16 %v257
      %v312 = vunpack.c.l.bf16 %v258
      %v313 = vunpack.c.l.bf16 %v259
      %v314 = vunpack.c.l.bf16 %v260
      %v315 = vunpack.c.l.bf16 %v261
      %v316 = vunpack.c.l.bf16 %v262
      %v317 = vunpack.c.l.bf16 %v263
      %v318 = vunpack.c.l.bf16 %v264
      %v319 = vunpack.c.l.bf16 %v265
      %v320 = vunpack.c.l.bf16 %v266
      %v321 = vunpack.c.l.bf16 %v267
      %v322 = vunpack.c.l.bf16 %v268
      %v323 = vunpack.c.l.bf16 %v269
      %v324 = vunpack.c.l.bf16 %v270
      %v325 = vunpack.c.l.bf16 %v271
      %v326 = vunpack.c.l.bf16 %v272
      %v327 = vunpack.c.l.bf16 %v273
      %v328 = vunpack.c.l.bf16 %v274
      %v329 = vunpack.c.l.bf16 %v275
      %v330 = vunpack.c.l.bf16 %v276
      %v331 = vunpack.c.l.bf16 %v277
      %v332 = vunpack.c.l.bf16 %v278
      %v333 = vunpack.c.l.bf16 %v279
      %v334 = vunpack.c.l.bf16 %v280
      %v335 = vunpack.c.l.bf16 %v281
      %v336 = vunpack.c.l.bf16 %v282
      %v337 = vunpack.c.l.bf16 %v283
      %v338 = vunpack.c.l.bf16 %v284
      %v339 = vpack.c.bf16 %v286, %v285
      %v340 = vpack.c.bf16 %v289, %v288
      %v341 = vpack.c.bf16 %v292, %v291
      %v342 = vpack.c.bf16 %v295, %v294
      %v343 = vpack.c.bf16 %v298, %v297
      %v344 = vpack.c.bf16 %v301, %v300
      %v345 = vpack.c.bf16 %v304, %v303
      %v346 = vpack.c.bf16 %v307, %v306
      %v347 = vpack.c.bf16 %v310, %v309
      %v348 = vpack.c.bf16 %v313, %v312
      %v349 = vpack.c.bf16 %v316, %v315
      %v350 = vpack.c.bf16 %v319, %v318
      %v351 = vpack.c.bf16 %v322, %v321
      %v352 = vpack.c.bf16 %v325, %v324
      %v353 = vpack.c.bf16 %v328, %v327
      %v354 = vpack.c.bf16 %v331, %v330
      %v355 = vld [vmem:[%s1] sm:$0x3]
      %vm404 = vcmask 1046528
      %v405 = vrot.slane %v285, 1
      %v406 = vrot.slane %v286, 1
      %v407 = vsel %vm404, %v405, %v406
      %v408 = vrot.slane %v287, 1
      %v409 = vsel %vm404, %v406, %v408
      %v410 = vrot.slane %v288, 1
      %v411 = vrot.slane %v289, 1
      %v412 = vsel %vm404, %v410, %v411
      %v413 = vrot.slane %v290, 1
      %v414 = vsel %vm404, %v411, %v413
      %v415 = vrot.slane %v291, 1
      %v416 = vrot.slane %v292, 1
      %v417 = vsel %vm404, %v415, %v416
      %v418 = vrot.slane %v293, 1
      %v419 = vsel %vm404, %v416, %v418
      %v420 = vrot.slane %v294, 1
      %v421 = vrot.slane %v295, 1
      %v422 = vsel %vm404, %v420, %v421
      %v423 = vrot.slane %v296, 1
      %v424 = vsel %vm404, %v421, %v423
      %v425 = vrot.slane %v297, 1
      %v426 = vrot.slane %v298, 1
      %v427 = vsel %vm404, %v425, %v426
      %v428 = vrot.slane %v299, 1
      %v429 = vsel %vm404, %v426, %v428
      %v430 = vrot.slane %v300, 1
      %v431 = vrot.slane %v301, 1
      %v432 = vsel %vm404, %v430, %v431
      %v433 = vrot.slane %v302, 1
      %v434 = vsel %vm404, %v431, %v433
      %v435 = vrot.slane %v303, 1
      %v436 = vrot.slane %v304, 1
      %v437 = vsel %vm404, %v435, %v436
      %v438 = vrot.slane %v305, 1
      %v439 = vsel %vm404, %v436, %v438
      %v440 = vrot.slane %v306, 1
      %v441 = vrot.slane %v307, 1
      %v442 = vsel %vm404, %v440, %v441
      %v443 = vrot.slane %v308, 1
      %v444 = vsel %vm404, %v441, %v443
      %v445 = vrot.slane %v309, 1
      %v446 = vrot.slane %v310, 1
      %v447 = vsel %vm404, %v445, %v446
      %v448 = vrot.slane %v311, 1
      %v449 = vsel %vm404, %v446, %v448
      %v450 = vrot.slane %v312, 1
      %v451 = vrot.slane %v313, 1
      %v452 = vsel %vm404, %v450, %v451
      %v453 = vrot.slane %v314, 1
      %v454 = vsel %vm404, %v451, %v453
      %v455 = vrot.slane %v315, 1
      %v456 = vrot.slane %v316, 1
      %v457 = vsel %vm404, %v455, %v456
      %v458 = vrot.slane %v317, 1
      %v459 = vsel %vm404, %v456, %v458
      %v460 = vrot.slane %v318, 1
      %v461 = vrot.slane %v319, 1
      %v462 = vsel %vm404, %v460, %v461
      %v463 = vrot.slane %v320, 1
      %v464 = vsel %vm404, %v461, %v463
      %v465 = vrot.slane %v321, 1
      %v466 = vrot.slane %v322, 1
      %v467 = vsel %vm404, %v465, %v466
      %v468 = vrot.slane %v323, 1
      %v469 = vsel %vm404, %v466, %v468
      %v470 = vrot.slane %v324, 1
      %v471 = vrot.slane %v325, 1
      %v472 = vsel %vm404, %v470, %v471
      %v473 = vrot.slane %v326, 1
      %v474 = vsel %vm404, %v471, %v473
      %v475 = vrot.slane %v327, 1
      %v476 = vrot.slane %v328, 1
      %v477 = vsel %vm404, %v475, %v476
      %v478 = vrot.slane %v329, 1
      %v479 = vsel %vm404, %v476, %v478
      %v480 = vrot.slane %v330, 1
      %v481 = vrot.slane %v331, 1
      %v482 = vsel %vm404, %v480, %v481
      %v483 = vrot.slane %v332, 1
      %v484 = vsel %vm404, %v481, %v483
      %v517 = vpack.c.bf16 %v409, %v407
      %v518 = vpack.c.bf16 %v414, %v412
      %v519 = vpack.c.bf16 %v419, %v417
      %v520 = vpack.c.bf16 %v424, %v422
      %v521 = vpack.c.bf16 %v429, %v427
      %v522 = vpack.c.bf16 %v434, %v432
      %v523 = vpack.c.bf16 %v439, %v437
      %v524 = vpack.c.bf16 %v444, %v442
      %v525 = vpack.c.bf16 %v449, %v447
      %v526 = vpack.c.bf16 %v454, %v452
      %v527 = vpack.c.bf16 %v459, %v457
      %v528 = vpack.c.bf16 %v464, %v462
      %v529 = vpack.c.bf16 %v469, %v467
      %v530 = vpack.c.bf16 %v474, %v472
      %v531 = vpack.c.bf16 %v479, %v477
      %v532 = vpack.c.bf16 %v484, %v482
      %s533 = scalar_lea.vmem %s1, 2
      %v534 = vld [vmem:[%s533] sm:$0x3]
      %vm535 = vcmask 31744
      %v537 = vsel %vm535, %v517, 0
      %v540 = vsel %vm535, %v518, 0
      %v543 = vsel %vm535, %v519, 0
      %v546 = vsel %vm535, %v520, 0
      %v549 = vsel %vm535, %v521, 0
      %v552 = vsel %vm535, %v522, 0
      %v555 = vsel %vm535, %v523, 0
      %v558 = vsel %vm535, %v524, 0
      %v561 = vsel %vm535, %v525, 0
      %v564 = vsel %vm535, %v526, 0
      %v567 = vsel %vm535, %v527, 0
      %v570 = vsel %vm535, %v528, 0
      %v573 = vsel %vm535, %v529, 0
      %v576 = vsel %vm535, %v530, 0
      %v579 = vsel %vm535, %v531, 0
      %v582 = vsel %vm535, %v532, 0
      %vm584 = vcmask 1041408
      %v586 = vsel %vm584, %v534, 0
      %588 = vmatprep.subr.bf16.mxu0 0
      %589 = vmatpush1.bf16.msra.mxu0 %v586
      %590 = vmatprep.subr.bf16.mxu0 0
      %591 = vmatpush1.bf16.msra.mxu0 0
      %592 = vmatprep.subr.bf16.mxu0 0
      %593 = vmatpush1.bf16.msra.mxu0 0
      %594 = vmatprep.subr.bf16.mxu0 0
      %595 = vmatpush1.bf16.msra.mxu0 0
      %596 = vmatprep.subr.bf16.mxu0 0
      %597 = vmatpush1.bf16.msra.mxu0 0
      %598 = vmatprep.subr.bf16.mxu0 0
      %599 = vmatpush1.bf16.msra.mxu0 0
      %600 = vmatprep.subr.bf16.mxu0 0
      %601 = vmatpush1.bf16.msra.mxu0 0
      %602 = vmatprep.subr.bf16.mxu0 0
      %603 = vmatpush1.bf16.msra.mxu0 0
      %604 = vmatprep.subr.bf16.mxu0 0
      %605 = vmatpush1.bf16.msra.mxu0 0
      %606 = vmatprep.subr.bf16.mxu0 0
      %607 = vmatpush1.bf16.msra.mxu0 0
      %608 = vmatprep.subr.bf16.mxu0 0
      %609 = vmatpush1.bf16.msra.mxu0 0
      %610 = vmatprep.subr.bf16.mxu0 0
      %611 = vmatpush1.bf16.msra.mxu0 0
      %612 = vmatprep.subr.bf16.mxu0 0
      %613 = vmatpush1.bf16.msra.mxu0 0
      %614 = vmatprep.subr.bf16.mxu0 0
      %615 = vmatpush1.bf16.msra.mxu0 0
      %616 = vmatprep.subr.bf16.mxu0 0
      %617 = vmatpush1.bf16.msra.mxu0 0
      %618 = vmatprep.subr.bf16.mxu0 0
      %619 = vmatpush1.bf16.msra.mxu0 0
      %620 = vmatprep.mubr.bf16.mxu0 0
      %621 = vmatmul.mubr.bf16.gmra.mrb[0].mxu0 %v537
      %v622 = vpop.f32.mrb[0].mxu0
      %v623 = vadd.f32 0.0, %v622
      %v624 = vpop.f32.mrb[0].mxu0
      %v625 = vpop.f32.mrb[0].mxu0
      %v626 = vadd.f32 0.0, %v625
      %v627 = vpop.f32.mrb[0].mxu0
      %628 = vmatprep.mubr.bf16.mxu0 0
      %629 = vmatmul.mubr.bf16.gmra.mrb[0].mxu0 %v540
      %v630 = vpop.f32.mrb[0].mxu0
      %v631 = vadd.f32 0.0, %v630
      %v632 = vpop.f32.mrb[0].mxu0
      %v633 = vpop.f32.mrb[0].mxu0
      %v634 = vadd.f32 0.0, %v633
      %v635 = vpop.f32.mrb[0].mxu0
      %636 = vmatprep.mubr.bf16.mxu0 0
      %637 = vmatmul.mubr.bf16.gmra.mrb[0].mxu0 %v543
      %v638 = vpop.f32.mrb[0].mxu0
      %v639 = vadd.f32 0.0, %v638
      %v640 = vpop.f32.mrb[0].mxu0
      %v641 = vpop.f32.mrb[0].mxu0
      %v642 = vadd.f32 0.0, %v641
      %v643 = vpop.f32.mrb[0].mxu0
      %644 = vmatprep.mubr.bf16.mxu0 0
      %645 = vmatmul.mubr.bf16.gmra.mrb[0].mxu0 %v546
      %v646 = vpop.f32.mrb[0].mxu0
      %v647 = vadd.f32 0.0, %v646
      %v648 = vpop.f32.mrb[0].mxu0
      %v649 = vpop.f32.mrb[0].mxu0
      %v650 = vadd.f32 0.0, %v649
      %v651 = vpop.f32.mrb[0].mxu0
      %652 = vmatprep.mubr.bf16.mxu0 0
      %653 = vmatmul.mubr.bf16.gmra.mrb[0].mxu0 %v549
      %v654 = vpop.f32.mrb[0].mxu0
      %v655 = vadd.f32 0.0, %v654
      %v656 = vpop.f32.mrb[0].mxu0
      %v657 = vpop.f32.mrb[0].mxu0
      %v658 = vadd.f32 0.0, %v657
      %v659 = vpop.f32.mrb[0].mxu0
      %660 = vmatprep.mubr.bf16.mxu0 0
      %661 = vmatmul.mubr.bf16.gmra.mrb[0].mxu0 %v552
      %v662 = vpop.f32.mrb[0].mxu0
      %v663 = vadd.f32 0.0, %v662
      %v664 = vpop.f32.mrb[0].mxu0
      %v665 = vpop.f32.mrb[0].mxu0
      %v666 = vadd.f32 0.0, %v665
      %v667 = vpop.f32.mrb[0].mxu0
      %668 = vmatprep.mubr.bf16.mxu0 0
      %669 = vmatmul.mubr.bf16.gmra.mrb[0].mxu0 %v555
      %v670 = vpop.f32.mrb[0].mxu0
      %v671 = vadd.f32 0.0, %v670
      %v672 = vpop.f32.mrb[0].mxu0
      %v673 = vpop.f32.mrb[0].mxu0
      %v674 = vadd.f32 0.0, %v673
      %v675 = vpop.f32.mrb[0].mxu0
      %676 = vmatprep.mubr.bf16.mxu0 0
      %677 = vmatmul.mubr.bf16.gmra.mrb[0].mxu0 %v558
      %v678 = vpop.f32.mrb[0].mxu0
      %v679 = vadd.f32 0.0, %v678
      %v680 = vpop.f32.mrb[0].mxu0
      %v681 = vpop.f32.mrb[0].mxu0
      %v682 = vadd.f32 0.0, %v681
      %v683 = vpop.f32.mrb[0].mxu0
      %684 = vmatprep.mubr.bf16.mxu0 0
      %685 = vmatmul.mubr.bf16.gmra.mrb[0].mxu0 %v561
      %v686 = vpop.f32.mrb[0].mxu0
      %v687 = vadd.f32 0.0, %v686
      %v688 = vpop.f32.mrb[0].mxu0
      %v689 = vpop.f32.mrb[0].mxu0
      %v690 = vadd.f32 0.0, %v689
      %v691 = vpop.f32.mrb[0].mxu0
      %692 = vmatprep.mubr.bf16.mxu0 0
      %693 = vmatmul.mubr.bf16.gmra.mrb[0].mxu0 %v564
      %v694 = vpop.f32.mrb[0].mxu0
      %v695 = vadd.f32 0.0, %v694
      %v696 = vpop.f32.mrb[0].mxu0
      %v697 = vpop.f32.mrb[0].mxu0
      %v698 = vadd.f32 0.0, %v697
      %v699 = vpop.f32.mrb[0].mxu0
      %700 = vmatprep.mubr.bf16.mxu0 0
      %701 = vmatmul.mubr.bf16.gmra.mrb[0].mxu0 %v567
      %v702 = vpop.f32.mrb[0].mxu0
      %v703 = vadd.f32 0.0, %v702
      %v704 = vpop.f32.mrb[0].mxu0
      %v705 = vpop.f32.mrb[0].mxu0
      %v706 = vadd.f32 0.0, %v705
      %v707 = vpop.f32.mrb[0].mxu0
      %708 = vmatprep.mubr.bf16.mxu0 0
      %709 = vmatmul.mubr.bf16.gmra.mrb[0].mxu0 %v570
      %v710 = vpop.f32.mrb[0].mxu0
      %v711 = vadd.f32 0.0, %v710
      %v712 = vpop.f32.mrb[0].mxu0
      %v713 = vpop.f32.mrb[0].mxu0
      %v714 = vadd.f32 0.0, %v713
      %v715 = vpop.f32.mrb[0].mxu0
      %716 = vmatprep.mubr.bf16.mxu0 0
      %717 = vmatmul.mubr.bf16.gmra.mrb[0].mxu0 %v573
      %v718 = vpop.f32.mrb[0].mxu0
      %v719 = vadd.f32 0.0, %v718
      %v720 = vpop.f32.mrb[0].mxu0
      %v721 = vpop.f32.mrb[0].mxu0
      %v722 = vadd.f32 0.0, %v721
      %v723 = vpop.f32.mrb[0].mxu0
      %724 = vmatprep.mubr.bf16.mxu0 0
      %725 = vmatmul.mubr.bf16.gmra.mrb[0].mxu0 %v576
      %v726 = vpop.f32.mrb[0].mxu0
      %v727 = vadd.f32 0.0, %v726
      %v728 = vpop.f32.mrb[0].mxu0
      %v729 = vpop.f32.mrb[0].mxu0
      %v730 = vadd.f32 0.0, %v729
      %v731 = vpop.f32.mrb[0].mxu0
      %732 = vmatprep.mubr.bf16.mxu0 0
      %733 = vmatmul.mubr.bf16.gmra.mrb[0].mxu0 %v579
      %v734 = vpop.f32.mrb[0].mxu0
      %v735 = vadd.f32 0.0, %v734
      %v736 = vpop.f32.mrb[0].mxu0
      %v737 = vpop.f32.mrb[0].mxu0
      %v738 = vadd.f32 0.0, %v737
      %v739 = vpop.f32.mrb[0].mxu0
      %740 = vmatprep.mubr.bf16.mxu0 0
      %741 = vmatmul.mubr.bf16.gmra.mrb[0].mxu0 %v582
      %v742 = vpop.f32.mrb[0].mxu0
      %v743 = vadd.f32 0.0, %v742
      %v744 = vpop.f32.mrb[0].mxu0
      %v745 = vpop.f32.mrb[0].mxu0
      %v746 = vadd.f32 0.0, %v745
      %v747 = vpop.f32.mrb[0].mxu0
      %748 = vdwg.mxu0
      %v750 = vsel %vm535, %v339, 0
      %v753 = vsel %vm535, %v340, 0
      %v756 = vsel %vm535, %v341, 0
      %v759 = vsel %vm535, %v342, 0
      %v762 = vsel %vm535, %v343, 0
      %v765 = vsel %vm535, %v344, 0
      %v768 = vsel %vm535, %v345, 0
      %v771 = vsel %vm535, %v346, 0
      %v774 = vsel %vm535, %v347, 0
      %v777 = vsel %vm535, %v348, 0
      %v780 = vsel %vm535, %v349, 0
      %v783 = vsel %vm535, %v350, 0
      %v786 = vsel %vm535, %v351, 0
      %v789 = vsel %vm535, %v352, 0
      %v792 = vsel %vm535, %v353, 0
      %v795 = vsel %vm535, %v354, 0
      %v798 = vsel %vm584, %v355, 0
      %800 = vmatprep.subr.bf16.mxu0 0
      %801 = vmatpush1.bf16.msra.mxu0 %v798
      %802 = vmatprep.subr.bf16.mxu0 0
      %803 = vmatpush1.bf16.msra.mxu0 0
      %804 = vmatprep.subr.bf16.mxu0 0
      %805 = vmatpush1.bf16.msra.mxu0 0
      %806 = vmatprep.subr.bf16.mxu0 0
      %807 = vmatpush1.bf16.msra.mxu0 0
      %808 = vmatprep.subr.bf16.mxu0 0
      %809 = vmatpush1.bf16.msra.mxu0 0
      %810 = vmatprep.subr.bf16.mxu0 0
      %811 = vmatpush1.bf16.msra.mxu0 0
      %812 = vmatprep.subr.bf16.mxu0 0
      %813 = vmatpush1.bf16.msra.mxu0 0
      %814 = vmatprep.subr.bf16.mxu0 0
      %815 = vmatpush1.bf16.msra.mxu0 0
      %816 = vmatprep.subr.bf16.mxu0 0
      %817 = vmatpush1.bf16.msra.mxu0 0
      %818 = vmatprep.subr.bf16.mxu0 0
      %819 = vmatpush1.bf16.msra.mxu0 0
      %820 = vmatprep.subr.bf16.mxu0 0
      %821 = vmatpush1.bf16.msra.mxu0 0
      %822 = vmatprep.subr.bf16.mxu0 0
      %823 = vmatpush1.bf16.msra.mxu0 0
      %824 = vmatprep.subr.bf16.mxu0 0
      %825 = vmatpush1.bf16.msra.mxu0 0
      %826 = vmatprep.subr.bf16.mxu0 0
      %827 = vmatpush1.bf16.msra.mxu0 0
      %828 = vmatprep.subr.bf16.mxu0 0
      %829 = vmatpush1.bf16.msra.mxu0 0
      %830 = vmatprep.subr.bf16.mxu0 0
      %831 = vmatpush1.bf16.msra.mxu0 0
      %832 = vmatprep.mubr.bf16.mxu0 0
      %833 = vmatmul.mubr.bf16.gmra.mrb[0].mxu0 %v750
      %v834 = vpop.f32.mrb[0].mxu0
      %v835 = vadd.f32 %v623, %v834
      %v836 = vpop.f32.mrb[0].mxu0
      %v837 = vpop.f32.mrb[0].mxu0
      %v838 = vadd.f32 %v626, %v837
      %v839 = vpop.f32.mrb[0].mxu0
      %840 = vmatprep.mubr.bf16.mxu0 0
      %841 = vmatmul.mubr.bf16.gmra.mrb[0].mxu0 %v753
      %v842 = vpop.f32.mrb[0].mxu0
      %v843 = vadd.f32 %v631, %v842
      %v844 = vpop.f32.mrb[0].mxu0
      %v845 = vpop.f32.mrb[0].mxu0
      %v846 = vadd.f32 %v634, %v845
      %v847 = vpop.f32.mrb[0].mxu0
      %848 = vmatprep.mubr.bf16.mxu0 0
      %849 = vmatmul.mubr.bf16.gmra.mrb[0].mxu0 %v756
      %v850 = vpop.f32.mrb[0].mxu0
      %v851 = vadd.f32 %v639, %v850
      %v852 = vpop.f32.mrb[0].mxu0
      %v853 = vpop.f32.mrb[0].mxu0
      %v854 = vadd.f32 %v642, %v853
      %v855 = vpop.f32.mrb[0].mxu0
      %856 = vmatprep.mubr.bf16.mxu0 0
      %857 = vmatmul.mubr.bf16.gmra.mrb[0].mxu0 %v759
      %v858 = vpop.f32.mrb[0].mxu0
      %v859 = vadd.f32 %v647, %v858
      %v860 = vpop.f32.mrb[0].mxu0
      %v861 = vpop.f32.mrb[0].mxu0
      %v862 = vadd.f32 %v650, %v861
      %v863 = vpop.f32.mrb[0].mxu0
      %864 = vmatprep.mubr.bf16.mxu0 0
      %865 = vmatmul.mubr.bf16.gmra.mrb[0].mxu0 %v762
      %v866 = vpop.f32.mrb[0].mxu0
      %v867 = vadd.f32 %v655, %v866
      %v868 = vpop.f32.mrb[0].mxu0
      %v869 = vpop.f32.mrb[0].mxu0
      %v870 = vadd.f32 %v658, %v869
      %v871 = vpop.f32.mrb[0].mxu0
      %872 = vmatprep.mubr.bf16.mxu0 0
      %873 = vmatmul.mubr.bf16.gmra.mrb[0].mxu0 %v765
      %v874 = vpop.f32.mrb[0].mxu0
      %v875 = vadd.f32 %v663, %v874
      %v876 = vpop.f32.mrb[0].mxu0
      %v877 = vpop.f32.mrb[0].mxu0
      %v878 = vadd.f32 %v666, %v877
      %v879 = vpop.f32.mrb[0].mxu0
      %880 = vmatprep.mubr.bf16.mxu0 0
      %881 = vmatmul.mubr.bf16.gmra.mrb[0].mxu0 %v768
      %v882 = vpop.f32.mrb[0].mxu0
      %v883 = vadd.f32 %v671, %v882
      %v884 = vpop.f32.mrb[0].mxu0
      %v885 = vpop.f32.mrb[0].mxu0
      %v886 = vadd.f32 %v674, %v885
      %v887 = vpop.f32.mrb[0].mxu0
      %888 = vmatprep.mubr.bf16.mxu0 0
      %889 = vmatmul.mubr.bf16.gmra.mrb[0].mxu0 %v771
      %v890 = vpop.f32.mrb[0].mxu0
      %v891 = vadd.f32 %v679, %v890
      %v892 = vpop.f32.mrb[0].mxu0
      %v893 = vpop.f32.mrb[0].mxu0
      %v894 = vadd.f32 %v682, %v893
      %v895 = vpop.f32.mrb[0].mxu0
      %896 = vmatprep.mubr.bf16.mxu0 0
      %897 = vmatmul.mubr.bf16.gmra.mrb[0].mxu0 %v774
      %v898 = vpop.f32.mrb[0].mxu0
      %v899 = vadd.f32 %v687, %v898
      %v900 = vpop.f32.mrb[0].mxu0
      %v901 = vpop.f32.mrb[0].mxu0
      %v902 = vadd.f32 %v690, %v901
      %v903 = vpop.f32.mrb[0].mxu0
      %904 = vmatprep.mubr.bf16.mxu0 0
      %905 = vmatmul.mubr.bf16.gmra.mrb[0].mxu0 %v777
      %v906 = vpop.f32.mrb[0].mxu0
      %v907 = vadd.f32 %v695, %v906
      %v908 = vpop.f32.mrb[0].mxu0
      %v909 = vpop.f32.mrb[0].mxu0
      %v910 = vadd.f32 %v698, %v909
      %v911 = vpop.f32.mrb[0].mxu0
      %912 = vmatprep.mubr.bf16.mxu0 0
      %913 = vmatmul.mubr.bf16.gmra.mrb[0].mxu0 %v780
      %v914 = vpop.f32.mrb[0].mxu0
      %v915 = vadd.f32 %v703, %v914
      %v916 = vpop.f32.mrb[0].mxu0
      %v917 = vpop.f32.mrb[0].mxu0
      %v918 = vadd.f32 %v706, %v917
      %v919 = vpop.f32.mrb[0].mxu0
      %920 = vmatprep.mubr.bf16.mxu0 0
      %921 = vmatmul.mubr.bf16.gmra.mrb[0].mxu0 %v783
      %v922 = vpop.f32.mrb[0].mxu0
      %v923 = vadd.f32 %v711, %v922
      %v924 = vpop.f32.mrb[0].mxu0
      %v925 = vpop.f32.mrb[0].mxu0
      %v926 = vadd.f32 %v714, %v925
      %v927 = vpop.f32.mrb[0].mxu0
      %928 = vmatprep.mubr.bf16.mxu0 0
      %929 = vmatmul.mubr.bf16.gmra.mrb[0].mxu0 %v786
      %v930 = vpop.f32.mrb[0].mxu0
      %v931 = vadd.f32 %v719, %v930
      %v932 = vpop.f32.mrb[0].mxu0
      %v933 = vpop.f32.mrb[0].mxu0
      %v934 = vadd.f32 %v722, %v933
      %v935 = vpop.f32.mrb[0].mxu0
      %936 = vmatprep.mubr.bf16.mxu0 0
      %937 = vmatmul.mubr.bf16.gmra.mrb[0].mxu0 %v789
      %v938 = vpop.f32.mrb[0].mxu0
      %v939 = vadd.f32 %v727, %v938
      %v940 = vpop.f32.mrb[0].mxu0
      %v941 = vpop.f32.mrb[0].mxu0
      %v942 = vadd.f32 %v730, %v941
      %v943 = vpop.f32.mrb[0].mxu0
      %944 = vmatprep.mubr.bf16.mxu0 0
      %945 = vmatmul.mubr.bf16.gmra.mrb[0].mxu0 %v792
      %v946 = vpop.f32.mrb[0].mxu0
      %v947 = vadd.f32 %v735, %v946
      %v948 = vpop.f32.mrb[0].mxu0
      %v949 = vpop.f32.mrb[0].mxu0
      %v950 = vadd.f32 %v738, %v949
      %v951 = vpop.f32.mrb[0].mxu0
      %952 = vmatprep.mubr.bf16.mxu0 0
      %953 = vmatmul.mubr.bf16.gmra.mrb[0].mxu0 %v795
      %v954 = vpop.f32.mrb[0].mxu0
      %v955 = vadd.f32 %v743, %v954
      %v956 = vpop.f32.mrb[0].mxu0
      %v957 = vpop.f32.mrb[0].mxu0
      %v958 = vadd.f32 %v746, %v957
      %v959 = vpop.f32.mrb[0].mxu0
      %960 = vdwg.mxu0
      %vm961 = vcmask 1045504
      %v962 = vrot.slane %v285, 2
      %v963 = vrot.slane %v286, 2
      %v964 = vsel %vm961, %v962, %v963
      %v965 = vrot.slane %v287, 2
      %v966 = vsel %vm961, %v963, %v965
      %v967 = vrot.slane %v288, 2
      %v968 = vrot.slane %v289, 2
      %v969 = vsel %vm961, %v967, %v968
      %v970 = vrot.slane %v290, 2
      %v971 = vsel %vm961, %v968, %v970
      %v972 = vrot.slane %v291, 2
      %v973 = vrot.slane %v292, 2
      %v974 = vsel %vm961, %v972, %v973
      %v975 = vrot.slane %v293, 2
      %v976 = vsel %vm961, %v973, %v975
      %v977 = vrot.slane %v294, 2
      %v978 = vrot.slane %v295, 2
      %v979 = vsel %vm961, %v977, %v978
      %v980 = vrot.slane %v296, 2
      %v981 = vsel %vm961, %v978, %v980
      %v982 = vrot.slane %v297, 2
      %v983 = vrot.slane %v298, 2
      %v984 = vsel %vm961, %v982, %v983
      %v985 = vrot.slane %v299, 2
      %v986 = vsel %vm961, %v983, %v985
      %v987 = vrot.slane %v300, 2
      %v988 = vrot.slane %v301, 2
      %v989 = vsel %vm961, %v987, %v988
      %v990 = vrot.slane %v302, 2
      %v991 = vsel %vm961, %v988, %v990
      %v992 = vrot.slane %v303, 2
      %v993 = vrot.slane %v304, 2
      %v994 = vsel %vm961, %v992, %v993
      %v995 = vrot.slane %v305, 2
      %v996 = vsel %vm961, %v993, %v995
      %v997 = vrot.slane %v306, 2
      %v998 = vrot.slane %v307, 2
      %v999 = vsel %vm961, %v997, %v998
      %v1000 = vrot.slane %v308, 2
      %v1001 = vsel %vm961, %v998, %v1000
      %v1002 = vrot.slane %v309, 2
      %v1003 = vrot.slane %v310, 2
      %v1004 = vsel %vm961, %v1002, %v1003
      %v1005 = vrot.slane %v311, 2
      %v1006 = vsel %vm961, %v1003, %v1005
      %v1007 = vrot.slane %v312, 2
      %v1008 = vrot.slane %v313, 2
      %v1009 = vsel %vm961, %v1007, %v1008
      %v1010 = vrot.slane %v314, 2
      %v1011 = vsel %vm961, %v1008, %v1010
      %v1012 = vrot.slane %v315, 2
      %v1013 = vrot.slane %v316, 2
      %v1014 = vsel %vm961, %v1012, %v1013
      %v1015 = vrot.slane %v317, 2
      %v1016 = vsel %vm961, %v1013, %v1015
      %v1017 = vrot.slane %v318, 2
      %v1018 = vrot.slane %v319, 2
      %v1019 = vsel %vm961, %v1017, %v1018
      %v1020 = vrot.slane %v320, 2
      %v1021 = vsel %vm961, %v1018, %v1020
      %v1022 = vrot.slane %v321, 2
      %v1023 = vrot.slane %v322, 2
      %v1024 = vsel %vm961, %v1022, %v1023
      %v1025 = vrot.slane %v323, 2
      %v1026 = vsel %vm961, %v1023, %v1025
      %v1027 = vrot.slane %v324, 2
      %v1028 = vrot.slane %v325, 2
      %v1029 = vsel %vm961, %v1027, %v1028
      %v1030 = vrot.slane %v326, 2
      %v1031 = vsel %vm961, %v1028, %v1030
      %v1032 = vrot.slane %v327, 2
      %v1033 = vrot.slane %v328, 2
      %v1034 = vsel %vm961, %v1032, %v1033
      %v1035 = vrot.slane %v329, 2
      %v1036 = vsel %vm961, %v1033, %v1035
      %v1037 = vrot.slane %v330, 2
      %v1038 = vrot.slane %v331, 2
      %v1039 = vsel %vm961, %v1037, %v1038
      %v1040 = vrot.slane %v332, 2
      %v1041 = vsel %vm961, %v1038, %v1040
      %v1074 = vpack.c.bf16 %v966, %v964
      %v1075 = vpack.c.bf16 %v971, %v969
      %v1076 = vpack.c.bf16 %v976, %v974
      %v1077 = vpack.c.bf16 %v981, %v979
      %v1078 = vpack.c.bf16 %v986, %v984
      %v1079 = vpack.c.bf16 %v991, %v989
      %v1080 = vpack.c.bf16 %v996, %v994
      %v1081 = vpack.c.bf16 %v1001, %v999
      %v1082 = vpack.c.bf16 %v1006, %v1004
      %v1083 = vpack.c.bf16 %v1011, %v1009
      %v1084 = vpack.c.bf16 %v1016, %v1014
      %v1085 = vpack.c.bf16 %v1021, %v1019
      %v1086 = vpack.c.bf16 %v1026, %v1024
      %v1087 = vpack.c.bf16 %v1031, %v1029
      %v1088 = vpack.c.bf16 %v1036, %v1034
      %v1089 = vpack.c.bf16 %v1041, %v1039
      %s1090 = scalar_lea.vmem %s1, 4
      %v1091 = vld [vmem:[%s1090] sm:$0x3]
      %v1093 = vsel %vm535, %v1074, 0
      %v1096 = vsel %vm535, %v1075, 0
      %v1099 = vsel %vm535, %v1076, 0
      %v1102 = vsel %vm535, %v1077, 0
      %v1105 = vsel %vm535, %v1078, 0
      %v1108 = vsel %vm535, %v1079, 0
      %v1111 = vsel %vm535, %v1080, 0
      %v1114 = vsel %vm535, %v1081, 0
      %v1117 = vsel %vm535, %v1082, 0
      %v1120 = vsel %vm535, %v1083, 0
      %v1123 = vsel %vm535, %v1084, 0
      %v1126 = vsel %vm535, %v1085, 0
      %v1129 = vsel %vm535, %v1086, 0
      %v1132 = vsel %vm535, %v1087, 0
      %v1135 = vsel %vm535, %v1088, 0
      %v1138 = vsel %vm535, %v1089, 0
      %v1141 = vsel %vm584, %v1091, 0
      %1143 = vmatprep.subr.bf16.mxu0 0
      %1144 = vmatpush1.bf16.msra.mxu0 %v1141
      %1145 = vmatprep.subr.bf16.mxu0 0
      %1146 = vmatpush1.bf16.msra.mxu0 0
      %1147 = vmatprep.subr.bf16.mxu0 0
      %1148 = vmatpush1.bf16.msra.mxu0 0
      %1149 = vmatprep.subr.bf16.mxu0 0
      %1150 = vmatpush1.bf16.msra.mxu0 0
      %1151 = vmatprep.subr.bf16.mxu0 0
      %1152 = vmatpush1.bf16.msra.mxu0 0
      %1153 = vmatprep.subr.bf16.mxu0 0
      %1154 = vmatpush1.bf16.msra.mxu0 0
      %1155 = vmatprep.subr.bf16.mxu0 0
      %1156 = vmatpush1.bf16.msra.mxu0 0
      %1157 = vmatprep.subr.bf16.mxu0 0
      %1158 = vmatpush1.bf16.msra.mxu0 0
      %1159 = vmatprep.subr.bf16.mxu0 0
      %1160 = vmatpush1.bf16.msra.mxu0 0
      %1161 = vmatprep.subr.bf16.mxu0 0
      %1162 = vmatpush1.bf16.msra.mxu0 0
      %1163 = vmatprep.subr.bf16.mxu0 0
      %1164 = vmatpush1.bf16.msra.mxu0 0
      %1165 = vmatprep.subr.bf16.mxu0 0
      %1166 = vmatpush1.bf16.msra.mxu0 0
      %1167 = vmatprep.subr.bf16.mxu0 0
      %1168 = vmatpush1.bf16.msra.mxu0 0
      %1169 = vmatprep.subr.bf16.mxu0 0
      %1170 = vmatpush1.bf16.msra.mxu0 0
      %1171 = vmatprep.subr.bf16.mxu0 0
      %1172 = vmatpush1.bf16.msra.mxu0 0
      %1173 = vmatprep.subr.bf16.mxu0 0
      %1174 = vmatpush1.bf16.msra.mxu0 0
      %1175 = vmatprep.mubr.bf16.mxu0 0
      %1176 = vmatmul.mubr.bf16.gmra.mrb[0].mxu0 %v1093
      %v1177 = vpop.f32.mrb[0].mxu0
      %v1178 = vadd.f32 0.0, %v1177
      %v1179 = vpop.f32.mrb[0].mxu0
      %v1180 = vpop.f32.mrb[0].mxu0
      %v1181 = vadd.f32 0.0, %v1180
      %v1182 = vpop.f32.mrb[0].mxu0
      %1183 = vmatprep.mubr.bf16.mxu0 0
      %1184 = vmatmul.mubr.bf16.gmra.mrb[0].mxu0 %v1096
      %v1185 = vpop.f32.mrb[0].mxu0
      %v1186 = vadd.f32 0.0, %v1185
      %v1187 = vpop.f32.mrb[0].mxu0
      %v1188 = vpop.f32.mrb[0].mxu0
      %v1189 = vadd.f32 0.0, %v1188
      %v1190 = vpop.f32.mrb[0].mxu0
      %1191 = vmatprep.mubr.bf16.mxu0 0
      %1192 = vmatmul.mubr.bf16.gmra.mrb[0].mxu0 %v1099
      %v1193 = vpop.f32.mrb[0].mxu0
      %v1194 = vadd.f32 0.0, %v1193
      %v1195 = vpop.f32.mrb[0].mxu0
      %v1196 = vpop.f32.mrb[0].mxu0
      %v1197 = vadd.f32 0.0, %v1196
      %v1198 = vpop.f32.mrb[0].mxu0
      %1199 = vmatprep.mubr.bf16.mxu0 0
      %1200 = vmatmul.mubr.bf16.gmra.mrb[0].mxu0 %v1102
      %v1201 = vpop.f32.mrb[0].mxu0
      %v1202 = vadd.f32 0.0, %v1201
      %v1203 = vpop.f32.mrb[0].mxu0
      %v1204 = vpop.f32.mrb[0].mxu0
      %v1205 = vadd.f32 0.0, %v1204
      %v1206 = vpop.f32.mrb[0].mxu0
      %1207 = vmatprep.mubr.bf16.mxu0 0
      %1208 = vmatmul.mubr.bf16.gmra.mrb[0].mxu0 %v1105
      %v1209 = vpop.f32.mrb[0].mxu0
      %v1210 = vadd.f32 0.0, %v1209
      %v1211 = vpop.f32.mrb[0].mxu0
      %v1212 = vpop.f32.mrb[0].mxu0
      %v1213 = vadd.f32 0.0, %v1212
      %v1214 = vpop.f32.mrb[0].mxu0
      %1215 = vmatprep.mubr.bf16.mxu0 0
      %1216 = vmatmul.mubr.bf16.gmra.mrb[0].mxu0 %v1108
      %v1217 = vpop.f32.mrb[0].mxu0
      %v1218 = vadd.f32 0.0, %v1217
      %v1219 = vpop.f32.mrb[0].mxu0
      %v1220 = vpop.f32.mrb[0].mxu0
      %v1221 = vadd.f32 0.0, %v1220
      %v1222 = vpop.f32.mrb[0].mxu0
      %1223 = vmatprep.mubr.bf16.mxu0 0
      %1224 = vmatmul.mubr.bf16.gmra.mrb[0].mxu0 %v1111
      %v1225 = vpop.f32.mrb[0].mxu0
      %v1226 = vadd.f32 0.0, %v1225
      %v1227 = vpop.f32.mrb[0].mxu0
      %v1228 = vpop.f32.mrb[0].mxu0
      %v1229 = vadd.f32 0.0, %v1228
      %v1230 = vpop.f32.mrb[0].mxu0
      %1231 = vmatprep.mubr.bf16.mxu0 0
      %1232 = vmatmul.mubr.bf16.gmra.mrb[0].mxu0 %v1114
      %v1233 = vpop.f32.mrb[0].mxu0
      %v1234 = vadd.f32 0.0, %v1233
      %v1235 = vpop.f32.mrb[0].mxu0
      %v1236 = vpop.f32.mrb[0].mxu0
      %v1237 = vadd.f32 0.0, %v1236
      %v1238 = vpop.f32.mrb[0].mxu0
      %1239 = vmatprep.mubr.bf16.mxu0 0
      %1240 = vmatmul.mubr.bf16.gmra.mrb[0].mxu0 %v1117
      %v1241 = vpop.f32.mrb[0].mxu0
      %v1242 = vadd.f32 0.0, %v1241
      %v1243 = vpop.f32.mrb[0].mxu0
      %v1244 = vpop.f32.mrb[0].mxu0
      %v1245 = vadd.f32 0.0, %v1244
      %v1246 = vpop.f32.mrb[0].mxu0
      %1247 = vmatprep.mubr.bf16.mxu0 0
      %1248 = vmatmul.mubr.bf16.gmra.mrb[0].mxu0 %v1120
      %v1249 = vpop.f32.mrb[0].mxu0
      %v1250 = vadd.f32 0.0, %v1249
      %v1251 = vpop.f32.mrb[0].mxu0
      %v1252 = vpop.f32.mrb[0].mxu0
      %v1253 = vadd.f32 0.0, %v1252
      %v1254 = vpop.f32.mrb[0].mxu0
      %1255 = vmatprep.mubr.bf16.mxu0 0
      %1256 = vmatmul.mubr.bf16.gmra.mrb[0].mxu0 %v1123
      %v1257 = vpop.f32.mrb[0].mxu0
      %v1258 = vadd.f32 0.0, %v1257
      %v1259 = vpop.f32.mrb[0].mxu0
      %v1260 = vpop.f32.mrb[0].mxu0
      %v1261 = vadd.f32 0.0, %v1260
      %v1262 = vpop.f32.mrb[0].mxu0
      %1263 = vmatprep.mubr.bf16.mxu0 0
      %1264 = vmatmul.mubr.bf16.gmra.mrb[0].mxu0 %v1126
      %v1265 = vpop.f32.mrb[0].mxu0
      %v1266 = vadd.f32 0.0, %v1265
      %v1267 = vpop.f32.mrb[0].mxu0
      %v1268 = vpop.f32.mrb[0].mxu0
      %v1269 = vadd.f32 0.0, %v1268
      %v1270 = vpop.f32.mrb[0].mxu0
      %1271 = vmatprep.mubr.bf16.mxu0 0
      %1272 = vmatmul.mubr.bf16.gmra.mrb[0].mxu0 %v1129
      %v1273 = vpop.f32.mrb[0].mxu0
      %v1274 = vadd.f32 0.0, %v1273
      %v1275 = vpop.f32.mrb[0].mxu0
      %v1276 = vpop.f32.mrb[0].mxu0
      %v1277 = vadd.f32 0.0, %v1276
      %v1278 = vpop.f32.mrb[0].mxu0
      %1279 = vmatprep.mubr.bf16.mxu0 0
      %1280 = vmatmul.mubr.bf16.gmra.mrb[0].mxu0 %v1132
      %v1281 = vpop.f32.mrb[0].mxu0
      %v1282 = vadd.f32 0.0, %v1281
      %v1283 = vpop.f32.mrb[0].mxu0
      %v1284 = vpop.f32.mrb[0].mxu0
      %v1285 = vadd.f32 0.0, %v1284
      %v1286 = vpop.f32.mrb[0].mxu0
      %1287 = vmatprep.mubr.bf16.mxu0 0
      %1288 = vmatmul.mubr.bf16.gmra.mrb[0].mxu0 %v1135
      %v1289 = vpop.f32.mrb[0].mxu0
      %v1290 = vadd.f32 0.0, %v1289
      %v1291 = vpop.f32.mrb[0].mxu0
      %v1292 = vpop.f32.mrb[0].mxu0
      %v1293 = vadd.f32 0.0, %v1292
      %v1294 = vpop.f32.mrb[0].mxu0
      %1295 = vmatprep.mubr.bf16.mxu0 0
      %1296 = vmatmul.mubr.bf16.gmra.mrb[0].mxu0 %v1138
      %v1297 = vpop.f32.mrb[0].mxu0
      %v1298 = vadd.f32 0.0, %v1297
      %v1299 = vpop.f32.mrb[0].mxu0
      %v1300 = vpop.f32.mrb[0].mxu0
      %v1301 = vadd.f32 0.0, %v1300
      %v1302 = vpop.f32.mrb[0].mxu0
      %1303 = vdwg.mxu0
      %v1304 = vadd.f32 %v835, %v1178
      %v1305 = vadd.f32 %v838, %v1181
      %v1306 = vadd.f32 %v843, %v1186
      %v1307 = vadd.f32 %v846, %v1189
      %v1308 = vadd.f32 %v851, %v1194
      %v1309 = vadd.f32 %v854, %v1197
      %v1310 = vadd.f32 %v859, %v1202
      %v1311 = vadd.f32 %v862, %v1205
      %v1312 = vadd.f32 %v867, %v1210
      %v1313 = vadd.f32 %v870, %v1213
      %v1314 = vadd.f32 %v875, %v1218
      %v1315 = vadd.f32 %v878, %v1221
      %v1316 = vadd.f32 %v883, %v1226
      %v1317 = vadd.f32 %v886, %v1229
      %v1318 = vadd.f32 %v891, %v1234
      %v1319 = vadd.f32 %v894, %v1237
      %v1320 = vadd.f32 %v899, %v1242
      %v1321 = vadd.f32 %v902, %v1245
      %v1322 = vadd.f32 %v907, %v1250
      %v1323 = vadd.f32 %v910, %v1253
      %v1324 = vadd.f32 %v915, %v1258
      %v1325 = vadd.f32 %v918, %v1261
      %v1326 = vadd.f32 %v923, %v1266
      %v1327 = vadd.f32 %v926, %v1269
      %v1328 = vadd.f32 %v931, %v1274
      %v1329 = vadd.f32 %v934, %v1277
      %v1330 = vadd.f32 %v939, %v1282
      %v1331 = vadd.f32 %v942, %v1285
      %v1332 = vadd.f32 %v947, %v1290
      %v1333 = vadd.f32 %v950, %v1293
      %v1334 = vadd.f32 %v955, %v1298
      %v1335 = vadd.f32 %v958, %v1301
      %v1336 = vpack.c.bf16 %v334, %v333
      %s1337 = scalar_lea.vmem %s1, 6
      %v1338 = vld [vmem:[%s1337] sm:$0x3]
      %v1340 = vsel %vm535, %v1336, 0
      %v1343 = vsel %vm584, %v1338, 0
      %1345 = vmatprep.subr.bf16.mxu0 0
      %1346 = vmatpush1.bf16.msra.mxu0 %v1343
      %1347 = vmatprep.subr.bf16.mxu0 0
      %1348 = vmatpush1.bf16.msra.mxu0 0
      %1349 = vmatprep.subr.bf16.mxu0 0
      %1350 = vmatpush1.bf16.msra.mxu0 0
      %1351 = vmatprep.subr.bf16.mxu0 0
      %1352 = vmatpush1.bf16.msra.mxu0 0
      %1353 = vmatprep.subr.bf16.mxu0 0
      %1354 = vmatpush1.bf16.msra.mxu0 0
      %1355 = vmatprep.subr.bf16.mxu0 0
      %1356 = vmatpush1.bf16.msra.mxu0 0
      %1357 = vmatprep.subr.bf16.mxu0 0
      %1358 = vmatpush1.bf16.msra.mxu0 0
      %1359 = vmatprep.subr.bf16.mxu0 0
      %1360 = vmatpush1.bf16.msra.mxu0 0
      %1361 = vmatprep.subr.bf16.mxu0 0
      %1362 = vmatpush1.bf16.msra.mxu0 0
      %1363 = vmatprep.subr.bf16.mxu0 0
      %1364 = vmatpush1.bf16.msra.mxu0 0
      %1365 = vmatprep.subr.bf16.mxu0 0
      %1366 = vmatpush1.bf16.msra.mxu0 0
      %1367 = vmatprep.subr.bf16.mxu0 0
      %1368 = vmatpush1.bf16.msra.mxu0 0
      %1369 = vmatprep.subr.bf16.mxu0 0
      %1370 = vmatpush1.bf16.msra.mxu0 0
      %1371 = vmatprep.subr.bf16.mxu0 0
      %1372 = vmatpush1.bf16.msra.mxu0 0
      %1373 = vmatprep.subr.bf16.mxu0 0
      %1374 = vmatpush1.bf16.msra.mxu0 0
      %1375 = vmatprep.subr.bf16.mxu0 0
      %1376 = vmatpush1.bf16.msra.mxu0 0
      %1377 = vmatprep.mubr.bf16.mxu0 0
      %1378 = vmatmul.mubr.bf16.gmra.mrb[0].mxu0 %v753
      %v1379 = vpop.f32.mrb[0].mxu0
      %v1380 = vadd.f32 0.0, %v1379
      %v1381 = vpop.f32.mrb[0].mxu0
      %v1382 = vpop.f32.mrb[0].mxu0
      %v1383 = vadd.f32 0.0, %v1382
      %v1384 = vpop.f32.mrb[0].mxu0
      %1385 = vmatprep.mubr.bf16.mxu0 0
      %1386 = vmatmul.mubr.bf16.gmra.mrb[0].mxu0 %v756
      %v1387 = vpop.f32.mrb[0].mxu0
      %v1388 = vadd.f32 0.0, %v1387
      %v1389 = vpop.f32.mrb[0].mxu0
      %v1390 = vpop.f32.mrb[0].mxu0
      %v1391 = vadd.f32 0.0, %v1390
      %v1392 = vpop.f32.mrb[0].mxu0
      %1393 = vmatprep.mubr.bf16.mxu0 0
      %1394 = vmatmul.mubr.bf16.gmra.mrb[0].mxu0 %v759
      %v1395 = vpop.f32.mrb[0].mxu0
      %v1396 = vadd.f32 0.0, %v1395
      %v1397 = vpop.f32.mrb[0].mxu0
      %v1398 = vpop.f32.mrb[0].mxu0
      %v1399 = vadd.f32 0.0, %v1398
      %v1400 = vpop.f32.mrb[0].mxu0
      %1401 = vmatprep.mubr.bf16.mxu0 0
      %1402 = vmatmul.mubr.bf16.gmra.mrb[0].mxu0 %v762
      %v1403 = vpop.f32.mrb[0].mxu0
      %v1404 = vadd.f32 0.0, %v1403
      %v1405 = vpop.f32.mrb[0].mxu0
      %v1406 = vpop.f32.mrb[0].mxu0
      %v1407 = vadd.f32 0.0, %v1406
      %v1408 = vpop.f32.mrb[0].mxu0
      %1409 = vmatprep.mubr.bf16.mxu0 0
      %1410 = vmatmul.mubr.bf16.gmra.mrb[0].mxu0 %v765
      %v1411 = vpop.f32.mrb[0].mxu0
      %v1412 = vadd.f32 0.0, %v1411
      %v1413 = vpop.f32.mrb[0].mxu0
      %v1414 = vpop.f32.mrb[0].mxu0
      %v1415 = vadd.f32 0.0, %v1414
      %v1416 = vpop.f32.mrb[0].mxu0
      %1417 = vmatprep.mubr.bf16.mxu0 0
      %1418 = vmatmul.mubr.bf16.gmra.mrb[0].mxu0 %v768
      %v1419 = vpop.f32.mrb[0].mxu0
      %v1420 = vadd.f32 0.0, %v1419
      %v1421 = vpop.f32.mrb[0].mxu0
      %v1422 = vpop.f32.mrb[0].mxu0
      %v1423 = vadd.f32 0.0, %v1422
      %v1424 = vpop.f32.mrb[0].mxu0
      %1425 = vmatprep.mubr.bf16.mxu0 0
      %1426 = vmatmul.mubr.bf16.gmra.mrb[0].mxu0 %v771
      %v1427 = vpop.f32.mrb[0].mxu0
      %v1428 = vadd.f32 0.0, %v1427
      %v1429 = vpop.f32.mrb[0].mxu0
      %v1430 = vpop.f32.mrb[0].mxu0
      %v1431 = vadd.f32 0.0, %v1430
      %v1432 = vpop.f32.mrb[0].mxu0
      %1433 = vmatprep.mubr.bf16.mxu0 0
      %1434 = vmatmul.mubr.bf16.gmra.mrb[0].mxu0 %v774
      %v1435 = vpop.f32.mrb[0].mxu0
      %v1436 = vadd.f32 0.0, %v1435
      %v1437 = vpop.f32.mrb[0].mxu0
      %v1438 = vpop.f32.mrb[0].mxu0
      %v1439 = vadd.f32 0.0, %v1438
      %v1440 = vpop.f32.mrb[0].mxu0
      %1441 = vmatprep.mubr.bf16.mxu0 0
      %1442 = vmatmul.mubr.bf16.gmra.mrb[0].mxu0 %v777
      %v1443 = vpop.f32.mrb[0].mxu0
      %v1444 = vadd.f32 0.0, %v1443
      %v1445 = vpop.f32.mrb[0].mxu0
      %v1446 = vpop.f32.mrb[0].mxu0
      %v1447 = vadd.f32 0.0, %v1446
      %v1448 = vpop.f32.mrb[0].mxu0
      %1449 = vmatprep.mubr.bf16.mxu0 0
      %1450 = vmatmul.mubr.bf16.gmra.mrb[0].mxu0 %v780
      %v1451 = vpop.f32.mrb[0].mxu0
      %v1452 = vadd.f32 0.0, %v1451
      %v1453 = vpop.f32.mrb[0].mxu0
      %v1454 = vpop.f32.mrb[0].mxu0
      %v1455 = vadd.f32 0.0, %v1454
      %v1456 = vpop.f32.mrb[0].mxu0
      %1457 = vmatprep.mubr.bf16.mxu0 0
      %1458 = vmatmul.mubr.bf16.gmra.mrb[0].mxu0 %v783
      %v1459 = vpop.f32.mrb[0].mxu0
      %v1460 = vadd.f32 0.0, %v1459
      %v1461 = vpop.f32.mrb[0].mxu0
      %v1462 = vpop.f32.mrb[0].mxu0
      %v1463 = vadd.f32 0.0, %v1462
      %v1464 = vpop.f32.mrb[0].mxu0
      %1465 = vmatprep.mubr.bf16.mxu0 0
      %1466 = vmatmul.mubr.bf16.gmra.mrb[0].mxu0 %v786
      %v1467 = vpop.f32.mrb[0].mxu0
      %v1468 = vadd.f32 0.0, %v1467
      %v1469 = vpop.f32.mrb[0].mxu0
      %v1470 = vpop.f32.mrb[0].mxu0
      %v1471 = vadd.f32 0.0, %v1470
      %v1472 = vpop.f32.mrb[0].mxu0
      %1473 = vmatprep.mubr.bf16.mxu0 0
      %1474 = vmatmul.mubr.bf16.gmra.mrb[0].mxu0 %v789
      %v1475 = vpop.f32.mrb[0].mxu0
      %v1476 = vadd.f32 0.0, %v1475
      %v1477 = vpop.f32.mrb[0].mxu0
      %v1478 = vpop.f32.mrb[0].mxu0
      %v1479 = vadd.f32 0.0, %v1478
      %v1480 = vpop.f32.mrb[0].mxu0
      %1481 = vmatprep.mubr.bf16.mxu0 0
      %1482 = vmatmul.mubr.bf16.gmra.mrb[0].mxu0 %v792
      %v1483 = vpop.f32.mrb[0].mxu0
      %v1484 = vadd.f32 0.0, %v1483
      %v1485 = vpop.f32.mrb[0].mxu0
      %v1486 = vpop.f32.mrb[0].mxu0
      %v1487 = vadd.f32 0.0, %v1486
      %v1488 = vpop.f32.mrb[0].mxu0
      %1489 = vmatprep.mubr.bf16.mxu0 0
      %1490 = vmatmul.mubr.bf16.gmra.mrb[0].mxu0 %v795
      %v1491 = vpop.f32.mrb[0].mxu0
      %v1492 = vadd.f32 0.0, %v1491
      %v1493 = vpop.f32.mrb[0].mxu0
      %v1494 = vpop.f32.mrb[0].mxu0
      %v1495 = vadd.f32 0.0, %v1494
      %v1496 = vpop.f32.mrb[0].mxu0
      %1497 = vmatprep.mubr.bf16.mxu0 0
      %1498 = vmatmul.mubr.bf16.gmra.mrb[0].mxu0 %v1340
      %v1499 = vpop.f32.mrb[0].mxu0
      %v1500 = vadd.f32 0.0, %v1499
      %v1501 = vpop.f32.mrb[0].mxu0
      %v1502 = vpop.f32.mrb[0].mxu0
      %v1503 = vadd.f32 0.0, %v1502
      %v1504 = vpop.f32.mrb[0].mxu0
      %1505 = vdwg.mxu0
      %v1506 = vadd.f32 %v1304, %v1380
      %v1507 = vadd.f32 %v1305, %v1383
      %v1508 = vadd.f32 %v1306, %v1388
      %v1509 = vadd.f32 %v1307, %v1391
      %v1510 = vadd.f32 %v1308, %v1396
      %v1511 = vadd.f32 %v1309, %v1399
      %v1512 = vadd.f32 %v1310, %v1404
      %v1513 = vadd.f32 %v1311, %v1407
      %v1514 = vadd.f32 %v1312, %v1412
      %v1515 = vadd.f32 %v1313, %v1415
      %v1516 = vadd.f32 %v1314, %v1420
      %v1517 = vadd.f32 %v1315, %v1423
      %v1518 = vadd.f32 %v1316, %v1428
      %v1519 = vadd.f32 %v1317, %v1431
      %v1520 = vadd.f32 %v1318, %v1436
      %v1521 = vadd.f32 %v1319, %v1439
      %v1522 = vadd.f32 %v1320, %v1444
      %v1523 = vadd.f32 %v1321, %v1447
      %v1524 = vadd.f32 %v1322, %v1452
      %v1525 = vadd.f32 %v1323, %v1455
      %v1526 = vadd.f32 %v1324, %v1460
      %v1527 = vadd.f32 %v1325, %v1463
      %v1528 = vadd.f32 %v1326, %v1468
      %v1529 = vadd.f32 %v1327, %v1471
      %v1530 = vadd.f32 %v1328, %v1476
      %v1531 = vadd.f32 %v1329, %v1479
      %v1532 = vadd.f32 %v1330, %v1484
      %v1533 = vadd.f32 %v1331, %v1487
      %v1534 = vadd.f32 %v1332, %v1492
      %v1535 = vadd.f32 %v1333, %v1495
      %v1536 = vadd.f32 %v1334, %v1500
      %v1537 = vadd.f32 %v1335, %v1503
      %v1541 = vrot.slane %v333, 1
      %v1542 = vrot.slane %v334, 1
      %v1543 = vsel %vm404, %v1541, %v1542
      %v1544 = vrot.slane %v335, 1
      %v1545 = vsel %vm404, %v1542, %v1544
      %v1548 = vpack.c.bf16 %v1545, %v1543
      %s1549 = scalar_lea.vmem %s1, 8
      %v1550 = vld [vmem:[%s1549] sm:$0x3]
      %v1552 = vsel %vm535, %v1548, 0
      %v1555 = vsel %vm584, %v1550, 0
      %1557 = vmatprep.subr.bf16.mxu0 0
      %1558 = vmatpush1.bf16.msra.mxu0 %v1555
      %1559 = vmatprep.subr.bf16.mxu0 0
      %1560 = vmatpush1.bf16.msra.mxu0 0
      %1561 = vmatprep.subr.bf16.mxu0 0
      %1562 = vmatpush1.bf16.msra.mxu0 0
      %1563 = vmatprep.subr.bf16.mxu0 0
      %1564 = vmatpush1.bf16.msra.mxu0 0
      %1565 = vmatprep.subr.bf16.mxu0 0
      %1566 = vmatpush1.bf16.msra.mxu0 0
      %1567 = vmatprep.subr.bf16.mxu0 0
      %1568 = vmatpush1.bf16.msra.mxu0 0
      %1569 = vmatprep.subr.bf16.mxu0 0
      %1570 = vmatpush1.bf16.msra.mxu0 0
      %1571 = vmatprep.subr.bf16.mxu0 0
      %1572 = vmatpush1.bf16.msra.mxu0 0
      %1573 = vmatprep.subr.bf16.mxu0 0
      %1574 = vmatpush1.bf16.msra.mxu0 0
      %1575 = vmatprep.subr.bf16.mxu0 0
      %1576 = vmatpush1.bf16.msra.mxu0 0
      %1577 = vmatprep.subr.bf16.mxu0 0
      %1578 = vmatpush1.bf16.msra.mxu0 0
      %1579 = vmatprep.subr.bf16.mxu0 0
      %1580 = vmatpush1.bf16.msra.mxu0 0
      %1581 = vmatprep.subr.bf16.mxu0 0
      %1582 = vmatpush1.bf16.msra.mxu0 0
      %1583 = vmatprep.subr.bf16.mxu0 0
      %1584 = vmatpush1.bf16.msra.mxu0 0
      %1585 = vmatprep.subr.bf16.mxu0 0
      %1586 = vmatpush1.bf16.msra.mxu0 0
      %1587 = vmatprep.subr.bf16.mxu0 0
      %1588 = vmatpush1.bf16.msra.mxu0 0
      %1589 = vmatprep.mubr.bf16.mxu0 0
      %1590 = vmatmul.mubr.bf16.gmra.mrb[0].mxu0 %v540
      %v1591 = vpop.f32.mrb[0].mxu0
      %v1592 = vadd.f32 0.0, %v1591
      %v1593 = vpop.f32.mrb[0].mxu0
      %v1594 = vpop.f32.mrb[0].mxu0
      %v1595 = vadd.f32 0.0, %v1594
      %v1596 = vpop.f32.mrb[0].mxu0
      %1597 = vmatprep.mubr.bf16.mxu0 0
      %1598 = vmatmul.mubr.bf16.gmra.mrb[0].mxu0 %v543
      %v1599 = vpop.f32.mrb[0].mxu0
      %v1600 = vadd.f32 0.0, %v1599
      %v1601 = vpop.f32.mrb[0].mxu0
      %v1602 = vpop.f32.mrb[0].mxu0
      %v1603 = vadd.f32 0.0, %v1602
      %v1604 = vpop.f32.mrb[0].mxu0
      %1605 = vmatprep.mubr.bf16.mxu0 0
      %1606 = vmatmul.mubr.bf16.gmra.mrb[0].mxu0 %v546
      %v1607 = vpop.f32.mrb[0].mxu0
      %v1608 = vadd.f32 0.0, %v1607
      %v1609 = vpop.f32.mrb[0].mxu0
      %v1610 = vpop.f32.mrb[0].mxu0
      %v1611 = vadd.f32 0.0, %v1610
      %v1612 = vpop.f32.mrb[0].mxu0
      %1613 = vmatprep.mubr.bf16.mxu0 0
      %1614 = vmatmul.mubr.bf16.gmra.mrb[0].mxu0 %v549
      %v1615 = vpop.f32.mrb[0].mxu0
      %v1616 = vadd.f32 0.0, %v1615
      %v1617 = vpop.f32.mrb[0].mxu0
      %v1618 = vpop.f32.mrb[0].mxu0
      %v1619 = vadd.f32 0.0, %v1618
      %v1620 = vpop.f32.mrb[0].mxu0
      %1621 = vmatprep.mubr.bf16.mxu0 0
      %1622 = vmatmul.mubr.bf16.gmra.mrb[0].mxu0 %v552
      %v1623 = vpop.f32.mrb[0].mxu0
      %v1624 = vadd.f32 0.0, %v1623
      %v1625 = vpop.f32.mrb[0].mxu0
      %v1626 = vpop.f32.mrb[0].mxu0
      %v1627 = vadd.f32 0.0, %v1626
      %v1628 = vpop.f32.mrb[0].mxu0
      %1629 = vmatprep.mubr.bf16.mxu0 0
      %1630 = vmatmul.mubr.bf16.gmra.mrb[0].mxu0 %v555
      %v1631 = vpop.f32.mrb[0].mxu0
      %v1632 = vadd.f32 0.0, %v1631
      %v1633 = vpop.f32.mrb[0].mxu0
      %v1634 = vpop.f32.mrb[0].mxu0
      %v1635 = vadd.f32 0.0, %v1634
      %v1636 = vpop.f32.mrb[0].mxu0
      %1637 = vmatprep.mubr.bf16.mxu0 0
      %1638 = vmatmul.mubr.bf16.gmra.mrb[0].mxu0 %v558
      %v1639 = vpop.f32.mrb[0].mxu0
      %v1640 = vadd.f32 0.0, %v1639
      %v1641 = vpop.f32.mrb[0].mxu0
      %v1642 = vpop.f32.mrb[0].mxu0
      %v1643 = vadd.f32 0.0, %v1642
      %v1644 = vpop.f32.mrb[0].mxu0
      %1645 = vmatprep.mubr.bf16.mxu0 0
      %1646 = vmatmul.mubr.bf16.gmra.mrb[0].mxu0 %v561
      %v1647 = vpop.f32.mrb[0].mxu0
      %v1648 = vadd.f32 0.0, %v1647
      %v1649 = vpop.f32.mrb[0].mxu0
      %v1650 = vpop.f32.mrb[0].mxu0
      %v1651 = vadd.f32 0.0, %v1650
      %v1652 = vpop.f32.mrb[0].mxu0
      %1653 = vmatprep.mubr.bf16.mxu0 0
      %1654 = vmatmul.mubr.bf16.gmra.mrb[0].mxu0 %v564
      %v1655 = vpop.f32.mrb[0].mxu0
      %v1656 = vadd.f32 0.0, %v1655
      %v1657 = vpop.f32.mrb[0].mxu0
      %v1658 = vpop.f32.mrb[0].mxu0
      %v1659 = vadd.f32 0.0, %v1658
      %v1660 = vpop.f32.mrb[0].mxu0
      %1661 = vmatprep.mubr.bf16.mxu0 0
      %1662 = vmatmul.mubr.bf16.gmra.mrb[0].mxu0 %v567
      %v1663 = vpop.f32.mrb[0].mxu0
      %v1664 = vadd.f32 0.0, %v1663
      %v1665 = vpop.f32.mrb[0].mxu0
      %v1666 = vpop.f32.mrb[0].mxu0
      %v1667 = vadd.f32 0.0, %v1666
      %v1668 = vpop.f32.mrb[0].mxu0
      %1669 = vmatprep.mubr.bf16.mxu0 0
      %1670 = vmatmul.mubr.bf16.gmra.mrb[0].mxu0 %v570
      %v1671 = vpop.f32.mrb[0].mxu0
      %v1672 = vadd.f32 0.0, %v1671
      %v1673 = vpop.f32.mrb[0].mxu0
      %v1674 = vpop.f32.mrb[0].mxu0
      %v1675 = vadd.f32 0.0, %v1674
      %v1676 = vpop.f32.mrb[0].mxu0
      %1677 = vmatprep.mubr.bf16.mxu0 0
      %1678 = vmatmul.mubr.bf16.gmra.mrb[0].mxu0 %v573
      %v1679 = vpop.f32.mrb[0].mxu0
      %v1680 = vadd.f32 0.0, %v1679
      %v1681 = vpop.f32.mrb[0].mxu0
      %v1682 = vpop.f32.mrb[0].mxu0
      %v1683 = vadd.f32 0.0, %v1682
      %v1684 = vpop.f32.mrb[0].mxu0
      %1685 = vmatprep.mubr.bf16.mxu0 0
      %1686 = vmatmul.mubr.bf16.gmra.mrb[0].mxu0 %v576
      %v1687 = vpop.f32.mrb[0].mxu0
      %v1688 = vadd.f32 0.0, %v1687
      %v1689 = vpop.f32.mrb[0].mxu0
      %v1690 = vpop.f32.mrb[0].mxu0
      %v1691 = vadd.f32 0.0, %v1690
      %v1692 = vpop.f32.mrb[0].mxu0
      %1693 = vmatprep.mubr.bf16.mxu0 0
      %1694 = vmatmul.mubr.bf16.gmra.mrb[0].mxu0 %v579
      %v1695 = vpop.f32.mrb[0].mxu0
      %v1696 = vadd.f32 0.0, %v1695
      %v1697 = vpop.f32.mrb[0].mxu0
      %v1698 = vpop.f32.mrb[0].mxu0
      %v1699 = vadd.f32 0.0, %v1698
      %v1700 = vpop.f32.mrb[0].mxu0
      %1701 = vmatprep.mubr.bf16.mxu0 0
      %1702 = vmatmul.mubr.bf16.gmra.mrb[0].mxu0 %v582
      %v1703 = vpop.f32.mrb[0].mxu0
      %v1704 = vadd.f32 0.0, %v1703
      %v1705 = vpop.f32.mrb[0].mxu0
      %v1706 = vpop.f32.mrb[0].mxu0
      %v1707 = vadd.f32 0.0, %v1706
      %v1708 = vpop.f32.mrb[0].mxu0
      %1709 = vmatprep.mubr.bf16.mxu0 0
      %1710 = vmatmul.mubr.bf16.gmra.mrb[0].mxu0 %v1552
      %v1711 = vpop.f32.mrb[0].mxu0
      %v1712 = vadd.f32 0.0, %v1711
      %v1713 = vpop.f32.mrb[0].mxu0
      %v1714 = vpop.f32.mrb[0].mxu0
      %v1715 = vadd.f32 0.0, %v1714
      %v1716 = vpop.f32.mrb[0].mxu0
      %1717 = vdwg.mxu0
      %v1718 = vadd.f32 %v1506, %v1592
      %v1719 = vadd.f32 %v1507, %v1595
      %v1720 = vadd.f32 %v1508, %v1600
      %v1721 = vadd.f32 %v1509, %v1603
      %v1722 = vadd.f32 %v1510, %v1608
      %v1723 = vadd.f32 %v1511, %v1611
      %v1724 = vadd.f32 %v1512, %v1616
      %v1725 = vadd.f32 %v1513, %v1619
      %v1726 = vadd.f32 %v1514, %v1624
      %v1727 = vadd.f32 %v1515, %v1627
      %v1728 = vadd.f32 %v1516, %v1632
      %v1729 = vadd.f32 %v1517, %v1635
      %v1730 = vadd.f32 %v1518, %v1640
      %v1731 = vadd.f32 %v1519, %v1643
      %v1732 = vadd.f32 %v1520, %v1648
      %v1733 = vadd.f32 %v1521, %v1651
      %v1734 = vadd.f32 %v1522, %v1656
      %v1735 = vadd.f32 %v1523, %v1659
      %v1736 = vadd.f32 %v1524, %v1664
      %v1737 = vadd.f32 %v1525, %v1667
      %v1738 = vadd.f32 %v1526, %v1672
      %v1739 = vadd.f32 %v1527, %v1675
      %v1740 = vadd.f32 %v1528, %v1680
      %v1741 = vadd.f32 %v1529, %v1683
      %v1742 = vadd.f32 %v1530, %v1688
      %v1743 = vadd.f32 %v1531, %v1691
      %v1744 = vadd.f32 %v1532, %v1696
      %v1745 = vadd.f32 %v1533, %v1699
      %v1746 = vadd.f32 %v1534, %v1704
      %v1747 = vadd.f32 %v1535, %v1707
      %v1748 = vadd.f32 %v1536, %v1712
      %v1749 = vadd.f32 %v1537, %v1715
      %v1750 = vrot.slane %v333, 2
      %v1751 = vrot.slane %v334, 2
      %v1752 = vsel %vm961, %v1750, %v1751
      %v1753 = vrot.slane %v335, 2
      %v1754 = vsel %vm961, %v1751, %v1753
      %v1757 = vpack.c.bf16 %v1754, %v1752
      %s1758 = scalar_lea.vmem %s1, 10
      %v1759 = vld [vmem:[%s1758] sm:$0x3]
      %v1761 = vsel %vm535, %v1757, 0
      %v1764 = vsel %vm584, %v1759, 0
      %1766 = vmatprep.subr.bf16.mxu0 0
      %1767 = vmatpush1.bf16.msra.mxu0 %v1764
      %1768 = vmatprep.subr.bf16.mxu0 0
      %1769 = vmatpush1.bf16.msra.mxu0 0
      %1770 = vmatprep.subr.bf16.mxu0 0
      %1771 = vmatpush1.bf16.msra.mxu0 0
      %1772 = vmatprep.subr.bf16.mxu0 0
      %1773 = vmatpush1.bf16.msra.mxu0 0
      %1774 = vmatprep.subr.bf16.mxu0 0
      %1775 = vmatpush1.bf16.msra.mxu0 0
      %1776 = vmatprep.subr.bf16.mxu0 0
      %1777 = vmatpush1.bf16.msra.mxu0 0
      %1778 = vmatprep.subr.bf16.mxu0 0
      %1779 = vmatpush1.bf16.msra.mxu0 0
      %1780 = vmatprep.subr.bf16.mxu0 0
      %1781 = vmatpush1.bf16.msra.mxu0 0
      %1782 = vmatprep.subr.bf16.mxu0 0
      %1783 = vmatpush1.bf16.msra.mxu0 0
      %1784 = vmatprep.subr.bf16.mxu0 0
      %1785 = vmatpush1.bf16.msra.mxu0 0
      %1786 = vmatprep.subr.bf16.mxu0 0
      %1787 = vmatpush1.bf16.msra.mxu0 0
      %1788 = vmatprep.subr.bf16.mxu0 0
      %1789 = vmatpush1.bf16.msra.mxu0 0
      %1790 = vmatprep.subr.bf16.mxu0 0
      %1791 = vmatpush1.bf16.msra.mxu0 0
      %1792 = vmatprep.subr.bf16.mxu0 0
      %1793 = vmatpush1.bf16.msra.mxu0 0
      %1794 = vmatprep.subr.bf16.mxu0 0
      %1795 = vmatpush1.bf16.msra.mxu0 0
      %1796 = vmatprep.subr.bf16.mxu0 0
      %1797 = vmatpush1.bf16.msra.mxu0 0
      %1798 = vmatprep.mubr.bf16.mxu0 0
      %1799 = vmatmul.mubr.bf16.gmra.mrb[0].mxu0 %v1096
      %v1800 = vpop.f32.mrb[0].mxu0
      %v1801 = vadd.f32 0.0, %v1800
      %v1802 = vpop.f32.mrb[0].mxu0
      %v1803 = vpop.f32.mrb[0].mxu0
      %v1804 = vadd.f32 0.0, %v1803
      %v1805 = vpop.f32.mrb[0].mxu0
      %1806 = vmatprep.mubr.bf16.mxu0 0
      %1807 = vmatmul.mubr.bf16.gmra.mrb[0].mxu0 %v1099
      %v1808 = vpop.f32.mrb[0].mxu0
      %v1809 = vadd.f32 0.0, %v1808
      %v1810 = vpop.f32.mrb[0].mxu0
      %v1811 = vpop.f32.mrb[0].mxu0
      %v1812 = vadd.f32 0.0, %v1811
      %v1813 = vpop.f32.mrb[0].mxu0
      %1814 = vmatprep.mubr.bf16.mxu0 0
      %1815 = vmatmul.mubr.bf16.gmra.mrb[0].mxu0 %v1102
      %v1816 = vpop.f32.mrb[0].mxu0
      %v1817 = vadd.f32 0.0, %v1816
      %v1818 = vpop.f32.mrb[0].mxu0
      %v1819 = vpop.f32.mrb[0].mxu0
      %v1820 = vadd.f32 0.0, %v1819
      %v1821 = vpop.f32.mrb[0].mxu0
      %1822 = vmatprep.mubr.bf16.mxu0 0
      %1823 = vmatmul.mubr.bf16.gmra.mrb[0].mxu0 %v1105
      %v1824 = vpop.f32.mrb[0].mxu0
      %v1825 = vadd.f32 0.0, %v1824
      %v1826 = vpop.f32.mrb[0].mxu0
      %v1827 = vpop.f32.mrb[0].mxu0
      %v1828 = vadd.f32 0.0, %v1827
      %v1829 = vpop.f32.mrb[0].mxu0
      %1830 = vmatprep.mubr.bf16.mxu0 0
      %1831 = vmatmul.mubr.bf16.gmra.mrb[0].mxu0 %v1108
      %v1832 = vpop.f32.mrb[0].mxu0
      %v1833 = vadd.f32 0.0, %v1832
      %v1834 = vpop.f32.mrb[0].mxu0
      %v1835 = vpop.f32.mrb[0].mxu0
      %v1836 = vadd.f32 0.0, %v1835
      %v1837 = vpop.f32.mrb[0].mxu0
      %1838 = vmatprep.mubr.bf16.mxu0 0
      %1839 = vmatmul.mubr.bf16.gmra.mrb[0].mxu0 %v1111
      %v1840 = vpop.f32.mrb[0].mxu0
      %v1841 = vadd.f32 0.0, %v1840
      %v1842 = vpop.f32.mrb[0].mxu0
      %v1843 = vpop.f32.mrb[0].mxu0
      %v1844 = vadd.f32 0.0, %v1843
      %v1845 = vpop.f32.mrb[0].mxu0
      %1846 = vmatprep.mubr.bf16.mxu0 0
      %1847 = vmatmul.mubr.bf16.gmra.mrb[0].mxu0 %v1114
      %v1848 = vpop.f32.mrb[0].mxu0
      %v1849 = vadd.f32 0.0, %v1848
      %v1850 = vpop.f32.mrb[0].mxu0
      %v1851 = vpop.f32.mrb[0].mxu0
      %v1852 = vadd.f32 0.0, %v1851
      %v1853 = vpop.f32.mrb[0].mxu0
      %1854 = vmatprep.mubr.bf16.mxu0 0
      %1855 = vmatmul.mubr.bf16.gmra.mrb[0].mxu0 %v1117
      %v1856 = vpop.f32.mrb[0].mxu0
      %v1857 = vadd.f32 0.0, %v1856
      %v1858 = vpop.f32.mrb[0].mxu0
      %v1859 = vpop.f32.mrb[0].mxu0
      %v1860 = vadd.f32 0.0, %v1859
      %v1861 = vpop.f32.mrb[0].mxu0
      %1862 = vmatprep.mubr.bf16.mxu0 0
      %1863 = vmatmul.mubr.bf16.gmra.mrb[0].mxu0 %v1120
      %v1864 = vpop.f32.mrb[0].mxu0
      %v1865 = vadd.f32 0.0, %v1864
      %v1866 = vpop.f32.mrb[0].mxu0
      %v1867 = vpop.f32.mrb[0].mxu0
      %v1868 = vadd.f32 0.0, %v1867
      %v1869 = vpop.f32.mrb[0].mxu0
      %1870 = vmatprep.mubr.bf16.mxu0 0
      %1871 = vmatmul.mubr.bf16.gmra.mrb[0].mxu0 %v1123
      %v1872 = vpop.f32.mrb[0].mxu0
      %v1873 = vadd.f32 0.0, %v1872
      %v1874 = vpop.f32.mrb[0].mxu0
      %v1875 = vpop.f32.mrb[0].mxu0
      %v1876 = vadd.f32 0.0, %v1875
      %v1877 = vpop.f32.mrb[0].mxu0
      %1878 = vmatprep.mubr.bf16.mxu0 0
      %1879 = vmatmul.mubr.bf16.gmra.mrb[0].mxu0 %v1126
      %v1880 = vpop.f32.mrb[0].mxu0
      %v1881 = vadd.f32 0.0, %v1880
      %v1882 = vpop.f32.mrb[0].mxu0
      %v1883 = vpop.f32.mrb[0].mxu0
      %v1884 = vadd.f32 0.0, %v1883
      %v1885 = vpop.f32.mrb[0].mxu0
      %1886 = vmatprep.mubr.bf16.mxu0 0
      %1887 = vmatmul.mubr.bf16.gmra.mrb[0].mxu0 %v1129
      %v1888 = vpop.f32.mrb[0].mxu0
      %v1889 = vadd.f32 0.0, %v1888
      %v1890 = vpop.f32.mrb[0].mxu0
      %v1891 = vpop.f32.mrb[0].mxu0
      %v1892 = vadd.f32 0.0, %v1891
      %v1893 = vpop.f32.mrb[0].mxu0
      %1894 = vmatprep.mubr.bf16.mxu0 0
      %1895 = vmatmul.mubr.bf16.gmra.mrb[0].mxu0 %v1132
      %v1896 = vpop.f32.mrb[0].mxu0
      %v1897 = vadd.f32 0.0, %v1896
      %v1898 = vpop.f32.mrb[0].mxu0
      %v1899 = vpop.f32.mrb[0].mxu0
      %v1900 = vadd.f32 0.0, %v1899
      %v1901 = vpop.f32.mrb[0].mxu0
      %1902 = vmatprep.mubr.bf16.mxu0 0
      %1903 = vmatmul.mubr.bf16.gmra.mrb[0].mxu0 %v1135
      %v1904 = vpop.f32.mrb[0].mxu0
      %v1905 = vadd.f32 0.0, %v1904
      %v1906 = vpop.f32.mrb[0].mxu0
      %v1907 = vpop.f32.mrb[0].mxu0
      %v1908 = vadd.f32 0.0, %v1907
      %v1909 = vpop.f32.mrb[0].mxu0
      %1910 = vmatprep.mubr.bf16.mxu0 0
      %1911 = vmatmul.mubr.bf16.gmra.mrb[0].mxu0 %v1138
      %v1912 = vpop.f32.mrb[0].mxu0
      %v1913 = vadd.f32 0.0, %v1912
      %v1914 = vpop.f32.mrb[0].mxu0
      %v1915 = vpop.f32.mrb[0].mxu0
      %v1916 = vadd.f32 0.0, %v1915
      %v1917 = vpop.f32.mrb[0].mxu0
      %1918 = vmatprep.mubr.bf16.mxu0 0
      %1919 = vmatmul.mubr.bf16.gmra.mrb[0].mxu0 %v1761
      %v1920 = vpop.f32.mrb[0].mxu0
      %v1921 = vadd.f32 0.0, %v1920
      %v1922 = vpop.f32.mrb[0].mxu0
      %v1923 = vpop.f32.mrb[0].mxu0
      %v1924 = vadd.f32 0.0, %v1923
      %v1925 = vpop.f32.mrb[0].mxu0
      %1926 = vdwg.mxu0
      %v1927 = vadd.f32 %v1718, %v1801
      %v1928 = vadd.f32 %v1719, %v1804
      %v1929 = vadd.f32 %v1720, %v1809
      %v1930 = vadd.f32 %v1721, %v1812
      %v1931 = vadd.f32 %v1722, %v1817
      %v1932 = vadd.f32 %v1723, %v1820
      %v1933 = vadd.f32 %v1724, %v1825
      %v1934 = vadd.f32 %v1725, %v1828
      %v1935 = vadd.f32 %v1726, %v1833
      %v1936 = vadd.f32 %v1727, %v1836
      %v1937 = vadd.f32 %v1728, %v1841
      %v1938 = vadd.f32 %v1729, %v1844
      %v1939 = vadd.f32 %v1730, %v1849
      %v1940 = vadd.f32 %v1731, %v1852
      %v1941 = vadd.f32 %v1732, %v1857
      %v1942 = vadd.f32 %v1733, %v1860
      %v1943 = vadd.f32 %v1734, %v1865
      %v1944 = vadd.f32 %v1735, %v1868
      %v1945 = vadd.f32 %v1736, %v1873
      %v1946 = vadd.f32 %v1737, %v1876
      %v1947 = vadd.f32 %v1738, %v1881
      %v1948 = vadd.f32 %v1739, %v1884
      %v1949 = vadd.f32 %v1740, %v1889
      %v1950 = vadd.f32 %v1741, %v1892
      %v1951 = vadd.f32 %v1742, %v1897
      %v1952 = vadd.f32 %v1743, %v1900
      %v1953 = vadd.f32 %v1744, %v1905
      %v1954 = vadd.f32 %v1745, %v1908
      %v1955 = vadd.f32 %v1746, %v1913
      %v1956 = vadd.f32 %v1747, %v1916
      %v1957 = vadd.f32 %v1748, %v1921
      %v1958 = vadd.f32 %v1749, %v1924
      %v1959 = vpack.c.bf16 %v337, %v336
      %s1960 = scalar_lea.vmem %s1, 12
      %v1961 = vld [vmem:[%s1960] sm:$0x3]
      %v1963 = vsel %vm535, %v1959, 0
      %v1966 = vsel %vm584, %v1961, 0
      %1968 = vmatprep.subr.bf16.mxu0 0
      %1969 = vmatpush1.bf16.msra.mxu0 %v1966
      %1970 = vmatprep.subr.bf16.mxu0 0
      %1971 = vmatpush1.bf16.msra.mxu0 0
      %1972 = vmatprep.subr.bf16.mxu0 0
      %1973 = vmatpush1.bf16.msra.mxu0 0
      %1974 = vmatprep.subr.bf16.mxu0 0
      %1975 = vmatpush1.bf16.msra.mxu0 0
      %1976 = vmatprep.subr.bf16.mxu0 0
      %1977 = vmatpush1.bf16.msra.mxu0 0
      %1978 = vmatprep.subr.bf16.mxu0 0
      %1979 = vmatpush1.bf16.msra.mxu0 0
      %1980 = vmatprep.subr.bf16.mxu0 0
      %1981 = vmatpush1.bf16.msra.mxu0 0
      %1982 = vmatprep.subr.bf16.mxu0 0
      %1983 = vmatpush1.bf16.msra.mxu0 0
      %1984 = vmatprep.subr.bf16.mxu0 0
      %1985 = vmatpush1.bf16.msra.mxu0 0
      %1986 = vmatprep.subr.bf16.mxu0 0
      %1987 = vmatpush1.bf16.msra.mxu0 0
      %1988 = vmatprep.subr.bf16.mxu0 0
      %1989 = vmatpush1.bf16.msra.mxu0 0
      %1990 = vmatprep.subr.bf16.mxu0 0
      %1991 = vmatpush1.bf16.msra.mxu0 0
      %1992 = vmatprep.subr.bf16.mxu0 0
      %1993 = vmatpush1.bf16.msra.mxu0 0
      %1994 = vmatprep.subr.bf16.mxu0 0
      %1995 = vmatpush1.bf16.msra.mxu0 0
      %1996 = vmatprep.subr.bf16.mxu0 0
      %1997 = vmatpush1.bf16.msra.mxu0 0
      %1998 = vmatprep.subr.bf16.mxu0 0
      %1999 = vmatpush1.bf16.msra.mxu0 0
      %2000 = vmatprep.mubr.bf16.mxu0 0
      %2001 = vmatmul.mubr.bf16.gmra.mrb[0].mxu0 %v756
      %v2002 = vpop.f32.mrb[0].mxu0
      %v2003 = vadd.f32 0.0, %v2002
      %v2004 = vpop.f32.mrb[0].mxu0
      %v2005 = vpop.f32.mrb[0].mxu0
      %v2006 = vadd.f32 0.0, %v2005
      %v2007 = vpop.f32.mrb[0].mxu0
      %2008 = vmatprep.mubr.bf16.mxu0 0
      %2009 = vmatmul.mubr.bf16.gmra.mrb[0].mxu0 %v759
      %v2010 = vpop.f32.mrb[0].mxu0
      %v2011 = vadd.f32 0.0, %v2010
      %v2012 = vpop.f32.mrb[0].mxu0
      %v2013 = vpop.f32.mrb[0].mxu0
      %v2014 = vadd.f32 0.0, %v2013
      %v2015 = vpop.f32.mrb[0].mxu0
      %2016 = vmatprep.mubr.bf16.mxu0 0
      %2017 = vmatmul.mubr.bf16.gmra.mrb[0].mxu0 %v762
      %v2018 = vpop.f32.mrb[0].mxu0
      %v2019 = vadd.f32 0.0, %v2018
      %v2020 = vpop.f32.mrb[0].mxu0
      %v2021 = vpop.f32.mrb[0].mxu0
      %v2022 = vadd.f32 0.0, %v2021
      %v2023 = vpop.f32.mrb[0].mxu0
      %2024 = vmatprep.mubr.bf16.mxu0 0
      %2025 = vmatmul.mubr.bf16.gmra.mrb[0].mxu0 %v765
      %v2026 = vpop.f32.mrb[0].mxu0
      %v2027 = vadd.f32 0.0, %v2026
      %v2028 = vpop.f32.mrb[0].mxu0
      %v2029 = vpop.f32.mrb[0].mxu0
      %v2030 = vadd.f32 0.0, %v2029
      %v2031 = vpop.f32.mrb[0].mxu0
      %2032 = vmatprep.mubr.bf16.mxu0 0
      %2033 = vmatmul.mubr.bf16.gmra.mrb[0].mxu0 %v768
      %v2034 = vpop.f32.mrb[0].mxu0
      %v2035 = vadd.f32 0.0, %v2034
      %v2036 = vpop.f32.mrb[0].mxu0
      %v2037 = vpop.f32.mrb[0].mxu0
      %v2038 = vadd.f32 0.0, %v2037
      %v2039 = vpop.f32.mrb[0].mxu0
      %2040 = vmatprep.mubr.bf16.mxu0 0
      %2041 = vmatmul.mubr.bf16.gmra.mrb[0].mxu0 %v771
      %v2042 = vpop.f32.mrb[0].mxu0
      %v2043 = vadd.f32 0.0, %v2042
      %v2044 = vpop.f32.mrb[0].mxu0
      %v2045 = vpop.f32.mrb[0].mxu0
      %v2046 = vadd.f32 0.0, %v2045
      %v2047 = vpop.f32.mrb[0].mxu0
      %2048 = vmatprep.mubr.bf16.mxu0 0
      %2049 = vmatmul.mubr.bf16.gmra.mrb[0].mxu0 %v774
      %v2050 = vpop.f32.mrb[0].mxu0
      %v2051 = vadd.f32 0.0, %v2050
      %v2052 = vpop.f32.mrb[0].mxu0
      %v2053 = vpop.f32.mrb[0].mxu0
      %v2054 = vadd.f32 0.0, %v2053
      %v2055 = vpop.f32.mrb[0].mxu0
      %2056 = vmatprep.mubr.bf16.mxu0 0
      %2057 = vmatmul.mubr.bf16.gmra.mrb[0].mxu0 %v777
      %v2058 = vpop.f32.mrb[0].mxu0
      %v2059 = vadd.f32 0.0, %v2058
      %v2060 = vpop.f32.mrb[0].mxu0
      %v2061 = vpop.f32.mrb[0].mxu0
      %v2062 = vadd.f32 0.0, %v2061
      %v2063 = vpop.f32.mrb[0].mxu0
      %2064 = vmatprep.mubr.bf16.mxu0 0
      %2065 = vmatmul.mubr.bf16.gmra.mrb[0].mxu0 %v780
      %v2066 = vpop.f32.mrb[0].mxu0
      %v2067 = vadd.f32 0.0, %v2066
      %v2068 = vpop.f32.mrb[0].mxu0
      %v2069 = vpop.f32.mrb[0].mxu0
      %v2070 = vadd.f32 0.0, %v2069
      %v2071 = vpop.f32.mrb[0].mxu0
      %2072 = vmatprep.mubr.bf16.mxu0 0
      %2073 = vmatmul.mubr.bf16.gmra.mrb[0].mxu0 %v783
      %v2074 = vpop.f32.mrb[0].mxu0
      %v2075 = vadd.f32 0.0, %v2074
      %v2076 = vpop.f32.mrb[0].mxu0
      %v2077 = vpop.f32.mrb[0].mxu0
      %v2078 = vadd.f32 0.0, %v2077
      %v2079 = vpop.f32.mrb[0].mxu0
      %2080 = vmatprep.mubr.bf16.mxu0 0
      %2081 = vmatmul.mubr.bf16.gmra.mrb[0].mxu0 %v786
      %v2082 = vpop.f32.mrb[0].mxu0
      %v2083 = vadd.f32 0.0, %v2082
      %v2084 = vpop.f32.mrb[0].mxu0
      %v2085 = vpop.f32.mrb[0].mxu0
      %v2086 = vadd.f32 0.0, %v2085
      %v2087 = vpop.f32.mrb[0].mxu0
      %2088 = vmatprep.mubr.bf16.mxu0 0
      %2089 = vmatmul.mubr.bf16.gmra.mrb[0].mxu0 %v789
      %v2090 = vpop.f32.mrb[0].mxu0
      %v2091 = vadd.f32 0.0, %v2090
      %v2092 = vpop.f32.mrb[0].mxu0
      %v2093 = vpop.f32.mrb[0].mxu0
      %v2094 = vadd.f32 0.0, %v2093
      %v2095 = vpop.f32.mrb[0].mxu0
      %2096 = vmatprep.mubr.bf16.mxu0 0
      %2097 = vmatmul.mubr.bf16.gmra.mrb[0].mxu0 %v792
      %v2098 = vpop.f32.mrb[0].mxu0
      %v2099 = vadd.f32 0.0, %v2098
      %v2100 = vpop.f32.mrb[0].mxu0
      %v2101 = vpop.f32.mrb[0].mxu0
      %v2102 = vadd.f32 0.0, %v2101
      %v2103 = vpop.f32.mrb[0].mxu0
      %2104 = vmatprep.mubr.bf16.mxu0 0
      %2105 = vmatmul.mubr.bf16.gmra.mrb[0].mxu0 %v795
      %v2106 = vpop.f32.mrb[0].mxu0
      %v2107 = vadd.f32 0.0, %v2106
      %v2108 = vpop.f32.mrb[0].mxu0
      %v2109 = vpop.f32.mrb[0].mxu0
      %v2110 = vadd.f32 0.0, %v2109
      %v2111 = vpop.f32.mrb[0].mxu0
      %2112 = vmatprep.mubr.bf16.mxu0 0
      %2113 = vmatmul.mubr.bf16.gmra.mrb[0].mxu0 %v1340
      %v2114 = vpop.f32.mrb[0].mxu0
      %v2115 = vadd.f32 0.0, %v2114
      %v2116 = vpop.f32.mrb[0].mxu0
      %v2117 = vpop.f32.mrb[0].mxu0
      %v2118 = vadd.f32 0.0, %v2117
      %v2119 = vpop.f32.mrb[0].mxu0
      %2120 = vmatprep.mubr.bf16.mxu0 0
      %2121 = vmatmul.mubr.bf16.gmra.mrb[0].mxu0 %v1963
      %v2122 = vpop.f32.mrb[0].mxu0
      %v2123 = vadd.f32 0.0, %v2122
      %v2124 = vpop.f32.mrb[0].mxu0
      %v2125 = vpop.f32.mrb[0].mxu0
      %v2126 = vadd.f32 0.0, %v2125
      %v2127 = vpop.f32.mrb[0].mxu0
      %2128 = vdwg.mxu0
      %v2129 = vadd.f32 %v1927, %v2003
      %v2130 = vadd.f32 %v1928, %v2006
      %v2131 = vadd.f32 %v1929, %v2011
      %v2132 = vadd.f32 %v1930, %v2014
      %v2133 = vadd.f32 %v1931, %v2019
      %v2134 = vadd.f32 %v1932, %v2022
      %v2135 = vadd.f32 %v1933, %v2027
      %v2136 = vadd.f32 %v1934, %v2030
      %v2137 = vadd.f32 %v1935, %v2035
      %v2138 = vadd.f32 %v1936, %v2038
      %v2139 = vadd.f32 %v1937, %v2043
      %v2140 = vadd.f32 %v1938, %v2046
      %v2141 = vadd.f32 %v1939, %v2051
      %v2142 = vadd.f32 %v1940, %v2054
      %v2143 = vadd.f32 %v1941, %v2059
      %v2144 = vadd.f32 %v1942, %v2062
      %v2145 = vadd.f32 %v1943, %v2067
      %v2146 = vadd.f32 %v1944, %v2070
      %v2147 = vadd.f32 %v1945, %v2075
      %v2148 = vadd.f32 %v1946, %v2078
      %v2149 = vadd.f32 %v1947, %v2083
      %v2150 = vadd.f32 %v1948, %v2086
      %v2151 = vadd.f32 %v1949, %v2091
      %v2152 = vadd.f32 %v1950, %v2094
      %v2153 = vadd.f32 %v1951, %v2099
      %v2154 = vadd.f32 %v1952, %v2102
      %v2155 = vadd.f32 %v1953, %v2107
      %v2156 = vadd.f32 %v1954, %v2110
      %v2157 = vadd.f32 %v1955, %v2115
      %v2158 = vadd.f32 %v1956, %v2118
      %v2159 = vadd.f32 %v1957, %v2123
      %v2160 = vadd.f32 %v1958, %v2126
      %v2164 = vrot.slane %v336, 1
      %v2165 = vrot.slane %v337, 1
      %v2166 = vsel %vm404, %v2164, %v2165
      %v2167 = vrot.slane %v338, 1
      %v2168 = vsel %vm404, %v2165, %v2167
      %v2171 = vpack.c.bf16 %v2168, %v2166
      %s2172 = scalar_lea.vmem %s1, 14
      %v2173 = vld [vmem:[%s2172] sm:$0x3]
      %v2175 = vsel %vm535, %v2171, 0
      %v2178 = vsel %vm584, %v2173, 0
      %2180 = vmatprep.subr.bf16.mxu0 0
      %2181 = vmatpush1.bf16.msra.mxu0 %v2178
      %2182 = vmatprep.subr.bf16.mxu0 0
      %2183 = vmatpush1.bf16.msra.mxu0 0
      %2184 = vmatprep.subr.bf16.mxu0 0
      %2185 = vmatpush1.bf16.msra.mxu0 0
      %2186 = vmatprep.subr.bf16.mxu0 0
      %2187 = vmatpush1.bf16.msra.mxu0 0
      %2188 = vmatprep.subr.bf16.mxu0 0
      %2189 = vmatpush1.bf16.msra.mxu0 0
      %2190 = vmatprep.subr.bf16.mxu0 0
      %2191 = vmatpush1.bf16.msra.mxu0 0
      %2192 = vmatprep.subr.bf16.mxu0 0
      %2193 = vmatpush1.bf16.msra.mxu0 0
      %2194 = vmatprep.subr.bf16.mxu0 0
      %2195 = vmatpush1.bf16.msra.mxu0 0
      %2196 = vmatprep.subr.bf16.mxu0 0
      %2197 = vmatpush1.bf16.msra.mxu0 0
      %2198 = vmatprep.subr.bf16.mxu0 0
      %2199 = vmatpush1.bf16.msra.mxu0 0
      %2200 = vmatprep.subr.bf16.mxu0 0
      %2201 = vmatpush1.bf16.msra.mxu0 0
      %2202 = vmatprep.subr.bf16.mxu0 0
      %2203 = vmatpush1.bf16.msra.mxu0 0
      %2204 = vmatprep.subr.bf16.mxu0 0
      %2205 = vmatpush1.bf16.msra.mxu0 0
      %2206 = vmatprep.subr.bf16.mxu0 0
      %2207 = vmatpush1.bf16.msra.mxu0 0
      %2208 = vmatprep.subr.bf16.mxu0 0
      %2209 = vmatpush1.bf16.msra.mxu0 0
      %2210 = vmatprep.subr.bf16.mxu0 0
      %2211 = vmatpush1.bf16.msra.mxu0 0
      %2212 = vmatprep.mubr.bf16.mxu0 0
      %2213 = vmatmul.mubr.bf16.gmra.mrb[0].mxu0 %v543
      %v2214 = vpop.f32.mrb[0].mxu0
      %v2215 = vadd.f32 0.0, %v2214
      %v2216 = vpop.f32.mrb[0].mxu0
      %v2217 = vpop.f32.mrb[0].mxu0
      %v2218 = vadd.f32 0.0, %v2217
      %v2219 = vpop.f32.mrb[0].mxu0
      %2220 = vmatprep.mubr.bf16.mxu0 0
      %2221 = vmatmul.mubr.bf16.gmra.mrb[0].mxu0 %v546
      %v2222 = vpop.f32.mrb[0].mxu0
      %v2223 = vadd.f32 0.0, %v2222
      %v2224 = vpop.f32.mrb[0].mxu0
      %v2225 = vpop.f32.mrb[0].mxu0
      %v2226 = vadd.f32 0.0, %v2225
      %v2227 = vpop.f32.mrb[0].mxu0
      %2228 = vmatprep.mubr.bf16.mxu0 0
      %2229 = vmatmul.mubr.bf16.gmra.mrb[0].mxu0 %v549
      %v2230 = vpop.f32.mrb[0].mxu0
      %v2231 = vadd.f32 0.0, %v2230
      %v2232 = vpop.f32.mrb[0].mxu0
      %v2233 = vpop.f32.mrb[0].mxu0
      %v2234 = vadd.f32 0.0, %v2233
      %v2235 = vpop.f32.mrb[0].mxu0
      %2236 = vmatprep.mubr.bf16.mxu0 0
      %2237 = vmatmul.mubr.bf16.gmra.mrb[0].mxu0 %v552
      %v2238 = vpop.f32.mrb[0].mxu0
      %v2239 = vadd.f32 0.0, %v2238
      %v2240 = vpop.f32.mrb[0].mxu0
      %v2241 = vpop.f32.mrb[0].mxu0
      %v2242 = vadd.f32 0.0, %v2241
      %v2243 = vpop.f32.mrb[0].mxu0
      %2244 = vmatprep.mubr.bf16.mxu0 0
      %2245 = vmatmul.mubr.bf16.gmra.mrb[0].mxu0 %v555
      %v2246 = vpop.f32.mrb[0].mxu0
      %v2247 = vadd.f32 0.0, %v2246
      %v2248 = vpop.f32.mrb[0].mxu0
      %v2249 = vpop.f32.mrb[0].mxu0
      %v2250 = vadd.f32 0.0, %v2249
      %v2251 = vpop.f32.mrb[0].mxu0
      %2252 = vmatprep.mubr.bf16.mxu0 0
      %2253 = vmatmul.mubr.bf16.gmra.mrb[0].mxu0 %v558
      %v2254 = vpop.f32.mrb[0].mxu0
      %v2255 = vadd.f32 0.0, %v2254
      %v2256 = vpop.f32.mrb[0].mxu0
      %v2257 = vpop.f32.mrb[0].mxu0
      %v2258 = vadd.f32 0.0, %v2257
      %v2259 = vpop.f32.mrb[0].mxu0
      %2260 = vmatprep.mubr.bf16.mxu0 0
      %2261 = vmatmul.mubr.bf16.gmra.mrb[0].mxu0 %v561
      %v2262 = vpop.f32.mrb[0].mxu0
      %v2263 = vadd.f32 0.0, %v2262
      %v2264 = vpop.f32.mrb[0].mxu0
      %v2265 = vpop.f32.mrb[0].mxu0
      %v2266 = vadd.f32 0.0, %v2265
      %v2267 = vpop.f32.mrb[0].mxu0
      %2268 = vmatprep.mubr.bf16.mxu0 0
      %2269 = vmatmul.mubr.bf16.gmra.mrb[0].mxu0 %v564
      %v2270 = vpop.f32.mrb[0].mxu0
      %v2271 = vadd.f32 0.0, %v2270
      %v2272 = vpop.f32.mrb[0].mxu0
      %v2273 = vpop.f32.mrb[0].mxu0
      %v2274 = vadd.f32 0.0, %v2273
      %v2275 = vpop.f32.mrb[0].mxu0
      %2276 = vmatprep.mubr.bf16.mxu0 0
      %2277 = vmatmul.mubr.bf16.gmra.mrb[0].mxu0 %v567
      %v2278 = vpop.f32.mrb[0].mxu0
      %v2279 = vadd.f32 0.0, %v2278
      %v2280 = vpop.f32.mrb[0].mxu0
      %v2281 = vpop.f32.mrb[0].mxu0
      %v2282 = vadd.f32 0.0, %v2281
      %v2283 = vpop.f32.mrb[0].mxu0
      %2284 = vmatprep.mubr.bf16.mxu0 0
      %2285 = vmatmul.mubr.bf16.gmra.mrb[0].mxu0 %v570
      %v2286 = vpop.f32.mrb[0].mxu0
      %v2287 = vadd.f32 0.0, %v2286
      %v2288 = vpop.f32.mrb[0].mxu0
      %v2289 = vpop.f32.mrb[0].mxu0
      %v2290 = vadd.f32 0.0, %v2289
      %v2291 = vpop.f32.mrb[0].mxu0
      %2292 = vmatprep.mubr.bf16.mxu0 0
      %2293 = vmatmul.mubr.bf16.gmra.mrb[0].mxu0 %v573
      %v2294 = vpop.f32.mrb[0].mxu0
      %v2295 = vadd.f32 0.0, %v2294
      %v2296 = vpop.f32.mrb[0].mxu0
      %v2297 = vpop.f32.mrb[0].mxu0
      %v2298 = vadd.f32 0.0, %v2297
      %v2299 = vpop.f32.mrb[0].mxu0
      %2300 = vmatprep.mubr.bf16.mxu0 0
      %2301 = vmatmul.mubr.bf16.gmra.mrb[0].mxu0 %v576
      %v2302 = vpop.f32.mrb[0].mxu0
      %v2303 = vadd.f32 0.0, %v2302
      %v2304 = vpop.f32.mrb[0].mxu0
      %v2305 = vpop.f32.mrb[0].mxu0
      %v2306 = vadd.f32 0.0, %v2305
      %v2307 = vpop.f32.mrb[0].mxu0
      %2308 = vmatprep.mubr.bf16.mxu0 0
      %2309 = vmatmul.mubr.bf16.gmra.mrb[0].mxu0 %v579
      %v2310 = vpop.f32.mrb[0].mxu0
      %v2311 = vadd.f32 0.0, %v2310
      %v2312 = vpop.f32.mrb[0].mxu0
      %v2313 = vpop.f32.mrb[0].mxu0
      %v2314 = vadd.f32 0.0, %v2313
      %v2315 = vpop.f32.mrb[0].mxu0
      %2316 = vmatprep.mubr.bf16.mxu0 0
      %2317 = vmatmul.mubr.bf16.gmra.mrb[0].mxu0 %v582
      %v2318 = vpop.f32.mrb[0].mxu0
      %v2319 = vadd.f32 0.0, %v2318
      %v2320 = vpop.f32.mrb[0].mxu0
      %v2321 = vpop.f32.mrb[0].mxu0
      %v2322 = vadd.f32 0.0, %v2321
      %v2323 = vpop.f32.mrb[0].mxu0
      %2324 = vmatprep.mubr.bf16.mxu0 0
      %2325 = vmatmul.mubr.bf16.gmra.mrb[0].mxu0 %v1552
      %v2326 = vpop.f32.mrb[0].mxu0
      %v2327 = vadd.f32 0.0, %v2326
      %v2328 = vpop.f32.mrb[0].mxu0
      %v2329 = vpop.f32.mrb[0].mxu0
      %v2330 = vadd.f32 0.0, %v2329
      %v2331 = vpop.f32.mrb[0].mxu0
      %2332 = vmatprep.mubr.bf16.mxu0 0
      %2333 = vmatmul.mubr.bf16.gmra.mrb[0].mxu0 %v2175
      %v2334 = vpop.f32.mrb[0].mxu0
      %v2335 = vadd.f32 0.0, %v2334
      %v2336 = vpop.f32.mrb[0].mxu0
      %v2337 = vpop.f32.mrb[0].mxu0
      %v2338 = vadd.f32 0.0, %v2337
      %v2339 = vpop.f32.mrb[0].mxu0
      %2340 = vdwg.mxu0
      %v2341 = vadd.f32 %v2129, %v2215
      %v2342 = vadd.f32 %v2130, %v2218
      %v2343 = vadd.f32 %v2131, %v2223
      %v2344 = vadd.f32 %v2132, %v2226
      %v2345 = vadd.f32 %v2133, %v2231
      %v2346 = vadd.f32 %v2134, %v2234
      %v2347 = vadd.f32 %v2135, %v2239
      %v2348 = vadd.f32 %v2136, %v2242
      %v2349 = vadd.f32 %v2137, %v2247
      %v2350 = vadd.f32 %v2138, %v2250
      %v2351 = vadd.f32 %v2139, %v2255
      %v2352 = vadd.f32 %v2140, %v2258
      %v2353 = vadd.f32 %v2141, %v2263
      %v2354 = vadd.f32 %v2142, %v2266
      %v2355 = vadd.f32 %v2143, %v2271
      %v2356 = vadd.f32 %v2144, %v2274
      %v2357 = vadd.f32 %v2145, %v2279
      %v2358 = vadd.f32 %v2146, %v2282
      %v2359 = vadd.f32 %v2147, %v2287
      %v2360 = vadd.f32 %v2148, %v2290
      %v2361 = vadd.f32 %v2149, %v2295
      %v2362 = vadd.f32 %v2150, %v2298
      %v2363 = vadd.f32 %v2151, %v2303
      %v2364 = vadd.f32 %v2152, %v2306
      %v2365 = vadd.f32 %v2153, %v2311
      %v2366 = vadd.f32 %v2154, %v2314
      %v2367 = vadd.f32 %v2155, %v2319
      %v2368 = vadd.f32 %v2156, %v2322
      %v2369 = vadd.f32 %v2157, %v2327
      %v2370 = vadd.f32 %v2158, %v2330
      %v2371 = vadd.f32 %v2159, %v2335
      %v2372 = vadd.f32 %v2160, %v2338
      %v2373 = vrot.slane %v336, 2
      %v2374 = vrot.slane %v337, 2
      %v2375 = vsel %vm961, %v2373, %v2374
      %v2376 = vrot.slane %v338, 2
      %v2377 = vsel %vm961, %v2374, %v2376
      %v2380 = vpack.c.bf16 %v2377, %v2375
      %s2381 = scalar_lea.vmem %s1, 16
      %v2382 = vld [vmem:[%s2381] sm:$0x3]
      %v2384 = vsel %vm535, %v2380, 0
      %v2387 = vsel %vm584, %v2382, 0
      %2389 = vmatprep.subr.bf16.mxu0 0
      %2390 = vmatpush1.bf16.msra.mxu0 %v2387
      %2391 = vmatprep.subr.bf16.mxu0 0
      %2392 = vmatpush1.bf16.msra.mxu0 0
      %2393 = vmatprep.subr.bf16.mxu0 0
      %2394 = vmatpush1.bf16.msra.mxu0 0
      %2395 = vmatprep.subr.bf16.mxu0 0
      %2396 = vmatpush1.bf16.msra.mxu0 0
      %2397 = vmatprep.subr.bf16.mxu0 0
      %2398 = vmatpush1.bf16.msra.mxu0 0
      %2399 = vmatprep.subr.bf16.mxu0 0
      %2400 = vmatpush1.bf16.msra.mxu0 0
      %2401 = vmatprep.subr.bf16.mxu0 0
      %2402 = vmatpush1.bf16.msra.mxu0 0
      %2403 = vmatprep.subr.bf16.mxu0 0
      %2404 = vmatpush1.bf16.msra.mxu0 0
      %2405 = vmatprep.subr.bf16.mxu0 0
      %2406 = vmatpush1.bf16.msra.mxu0 0
      %2407 = vmatprep.subr.bf16.mxu0 0
      %2408 = vmatpush1.bf16.msra.mxu0 0
      %2409 = vmatprep.subr.bf16.mxu0 0
      %2410 = vmatpush1.bf16.msra.mxu0 0
      %2411 = vmatprep.subr.bf16.mxu0 0
      %2412 = vmatpush1.bf16.msra.mxu0 0
      %2413 = vmatprep.subr.bf16.mxu0 0
      %2414 = vmatpush1.bf16.msra.mxu0 0
      %2415 = vmatprep.subr.bf16.mxu0 0
      %2416 = vmatpush1.bf16.msra.mxu0 0
      %2417 = vmatprep.subr.bf16.mxu0 0
      %2418 = vmatpush1.bf16.msra.mxu0 0
      %2419 = vmatprep.subr.bf16.mxu0 0
      %2420 = vmatpush1.bf16.msra.mxu0 0
      %2421 = vmatprep.mubr.bf16.mxu0 0
      %2422 = vmatmul.mubr.bf16.gmra.mrb[0].mxu0 %v1099
      %v2423 = vpop.f32.mrb[0].mxu0
      %v2424 = vadd.f32 0.0, %v2423
      %v2425 = vpop.f32.mrb[0].mxu0
      %v2426 = vpop.f32.mrb[0].mxu0
      %v2427 = vadd.f32 0.0, %v2426
      %v2428 = vpop.f32.mrb[0].mxu0
      %2429 = vmatprep.mubr.bf16.mxu0 0
      %2430 = vmatmul.mubr.bf16.gmra.mrb[0].mxu0 %v1102
      %v2431 = vpop.f32.mrb[0].mxu0
      %v2432 = vadd.f32 0.0, %v2431
      %v2433 = vpop.f32.mrb[0].mxu0
      %v2434 = vpop.f32.mrb[0].mxu0
      %v2435 = vadd.f32 0.0, %v2434
      %v2436 = vpop.f32.mrb[0].mxu0
      %2437 = vmatprep.mubr.bf16.mxu0 0
      %2438 = vmatmul.mubr.bf16.gmra.mrb[0].mxu0 %v1105
      %v2439 = vpop.f32.mrb[0].mxu0
      %v2440 = vadd.f32 0.0, %v2439
      %v2441 = vpop.f32.mrb[0].mxu0
      %v2442 = vpop.f32.mrb[0].mxu0
      %v2443 = vadd.f32 0.0, %v2442
      %v2444 = vpop.f32.mrb[0].mxu0
      %2445 = vmatprep.mubr.bf16.mxu0 0
      %2446 = vmatmul.mubr.bf16.gmra.mrb[0].mxu0 %v1108
      %v2447 = vpop.f32.mrb[0].mxu0
      %v2448 = vadd.f32 0.0, %v2447
      %v2449 = vpop.f32.mrb[0].mxu0
      %v2450 = vpop.f32.mrb[0].mxu0
      %v2451 = vadd.f32 0.0, %v2450
      %v2452 = vpop.f32.mrb[0].mxu0
      %2453 = vmatprep.mubr.bf16.mxu0 0
      %2454 = vmatmul.mubr.bf16.gmra.mrb[0].mxu0 %v1111
      %v2455 = vpop.f32.mrb[0].mxu0
      %v2456 = vadd.f32 0.0, %v2455
      %v2457 = vpop.f32.mrb[0].mxu0
      %v2458 = vpop.f32.mrb[0].mxu0
      %v2459 = vadd.f32 0.0, %v2458
      %v2460 = vpop.f32.mrb[0].mxu0
      %2461 = vmatprep.mubr.bf16.mxu0 0
      %2462 = vmatmul.mubr.bf16.gmra.mrb[0].mxu0 %v1114
      %v2463 = vpop.f32.mrb[0].mxu0
      %v2464 = vadd.f32 0.0, %v2463
      %v2465 = vpop.f32.mrb[0].mxu0
      %v2466 = vpop.f32.mrb[0].mxu0
      %v2467 = vadd.f32 0.0, %v2466
      %v2468 = vpop.f32.mrb[0].mxu0
      %2469 = vmatprep.mubr.bf16.mxu0 0
      %2470 = vmatmul.mubr.bf16.gmra.mrb[0].mxu0 %v1117
      %v2471 = vpop.f32.mrb[0].mxu0
      %v2472 = vadd.f32 0.0, %v2471
      %v2473 = vpop.f32.mrb[0].mxu0
      %v2474 = vpop.f32.mrb[0].mxu0
      %v2475 = vadd.f32 0.0, %v2474
      %v2476 = vpop.f32.mrb[0].mxu0
      %2477 = vmatprep.mubr.bf16.mxu0 0
      %2478 = vmatmul.mubr.bf16.gmra.mrb[0].mxu0 %v1120
      %v2479 = vpop.f32.mrb[0].mxu0
      %v2480 = vadd.f32 0.0, %v2479
      %v2481 = vpop.f32.mrb[0].mxu0
      %v2482 = vpop.f32.mrb[0].mxu0
      %v2483 = vadd.f32 0.0, %v2482
      %v2484 = vpop.f32.mrb[0].mxu0
      %2485 = vmatprep.mubr.bf16.mxu0 0
      %2486 = vmatmul.mubr.bf16.gmra.mrb[0].mxu0 %v1123
      %v2487 = vpop.f32.mrb[0].mxu0
      %v2488 = vadd.f32 0.0, %v2487
      %v2489 = vpop.f32.mrb[0].mxu0
      %v2490 = vpop.f32.mrb[0].mxu0
      %v2491 = vadd.f32 0.0, %v2490
      %v2492 = vpop.f32.mrb[0].mxu0
      %2493 = vmatprep.mubr.bf16.mxu0 0
      %2494 = vmatmul.mubr.bf16.gmra.mrb[0].mxu0 %v1126
      %v2495 = vpop.f32.mrb[0].mxu0
      %v2496 = vadd.f32 0.0, %v2495
      %v2497 = vpop.f32.mrb[0].mxu0
      %v2498 = vpop.f32.mrb[0].mxu0
      %v2499 = vadd.f32 0.0, %v2498
      %v2500 = vpop.f32.mrb[0].mxu0
      %2501 = vmatprep.mubr.bf16.mxu0 0
      %2502 = vmatmul.mubr.bf16.gmra.mrb[0].mxu0 %v1129
      %v2503 = vpop.f32.mrb[0].mxu0
      %v2504 = vadd.f32 0.0, %v2503
      %v2505 = vpop.f32.mrb[0].mxu0
      %v2506 = vpop.f32.mrb[0].mxu0
      %v2507 = vadd.f32 0.0, %v2506
      %v2508 = vpop.f32.mrb[0].mxu0
      %2509 = vmatprep.mubr.bf16.mxu0 0
      %2510 = vmatmul.mubr.bf16.gmra.mrb[0].mxu0 %v1132
      %v2511 = vpop.f32.mrb[0].mxu0
      %v2512 = vadd.f32 0.0, %v2511
      %v2513 = vpop.f32.mrb[0].mxu0
      %v2514 = vpop.f32.mrb[0].mxu0
      %v2515 = vadd.f32 0.0, %v2514
      %v2516 = vpop.f32.mrb[0].mxu0
      %2517 = vmatprep.mubr.bf16.mxu0 0
      %2518 = vmatmul.mubr.bf16.gmra.mrb[0].mxu0 %v1135
      %v2519 = vpop.f32.mrb[0].mxu0
      %v2520 = vadd.f32 0.0, %v2519
      %v2521 = vpop.f32.mrb[0].mxu0
      %v2522 = vpop.f32.mrb[0].mxu0
      %v2523 = vadd.f32 0.0, %v2522
      %v2524 = vpop.f32.mrb[0].mxu0
      %2525 = vmatprep.mubr.bf16.mxu0 0
      %2526 = vmatmul.mubr.bf16.gmra.mrb[0].mxu0 %v1138
      %v2527 = vpop.f32.mrb[0].mxu0
      %v2528 = vadd.f32 0.0, %v2527
      %v2529 = vpop.f32.mrb[0].mxu0
      %v2530 = vpop.f32.mrb[0].mxu0
      %v2531 = vadd.f32 0.0, %v2530
      %v2532 = vpop.f32.mrb[0].mxu0
      %2533 = vmatprep.mubr.bf16.mxu0 0
      %2534 = vmatmul.mubr.bf16.gmra.mrb[0].mxu0 %v1761
      %v2535 = vpop.f32.mrb[0].mxu0
      %v2536 = vadd.f32 0.0, %v2535
      %v2537 = vpop.f32.mrb[0].mxu0
      %v2538 = vpop.f32.mrb[0].mxu0
      %v2539 = vadd.f32 0.0, %v2538
      %v2540 = vpop.f32.mrb[0].mxu0
      %2541 = vmatprep.mubr.bf16.mxu0 0
      %2542 = vmatmul.mubr.bf16.gmra.mrb[0].mxu0 %v2384
      %v2543 = vpop.f32.mrb[0].mxu0
      %v2544 = vadd.f32 0.0, %v2543
      %v2545 = vpop.f32.mrb[0].mxu0
      %v2546 = vpop.f32.mrb[0].mxu0
      %v2547 = vadd.f32 0.0, %v2546
      %v2548 = vpop.f32.mrb[0].mxu0
      %2549 = vdwg.mxu0
      %v2550 = vadd.f32 %v2341, %v2424
      %v2551 = vadd.f32 %v2342, %v2427
      %v2552 = vadd.f32 %v2343, %v2432
      %v2553 = vadd.f32 %v2344, %v2435
      %v2554 = vadd.f32 %v2345, %v2440
      %v2555 = vadd.f32 %v2346, %v2443
      %v2556 = vadd.f32 %v2347, %v2448
      %v2557 = vadd.f32 %v2348, %v2451
      %v2558 = vadd.f32 %v2349, %v2456
      %v2559 = vadd.f32 %v2350, %v2459
      %v2560 = vadd.f32 %v2351, %v2464
      %v2561 = vadd.f32 %v2352, %v2467
      %v2562 = vadd.f32 %v2353, %v2472
      %v2563 = vadd.f32 %v2354, %v2475
      %v2564 = vadd.f32 %v2355, %v2480
      %v2565 = vadd.f32 %v2356, %v2483
      %v2566 = vadd.f32 %v2357, %v2488
      %v2567 = vadd.f32 %v2358, %v2491
      %v2568 = vadd.f32 %v2359, %v2496
      %v2569 = vadd.f32 %v2360, %v2499
      %v2570 = vadd.f32 %v2361, %v2504
      %v2571 = vadd.f32 %v2362, %v2507
      %v2572 = vadd.f32 %v2363, %v2512
      %v2573 = vadd.f32 %v2364, %v2515
      %v2574 = vadd.f32 %v2365, %v2520
      %v2575 = vadd.f32 %v2366, %v2523
      %v2576 = vadd.f32 %v2367, %v2528
      %v2577 = vadd.f32 %v2368, %v2531
      %v2578 = vadd.f32 %v2369, %v2536
      %v2579 = vadd.f32 %v2370, %v2539
      %v2580 = vadd.f32 %v2371, %v2544
      %v2581 = vadd.f32 %v2372, %v2547
      %v2582 = vlaneseq
      %v2583 = vshrl.u32 %v2582, 7
      %v2584 = vsub.s32 0, %v2583
      %v2585 = vrot.slane %v226, %v2584
      %v2586 = vmul.f32 %v2550, %v2585
      %v2587 = vmul.f32 %v2551, %v2585
      %v2588 = vmul.f32 %v2552, %v2585
      %v2589 = vmul.f32 %v2553, %v2585
      %v2590 = vmul.f32 %v2554, %v2585
      %v2591 = vmul.f32 %v2555, %v2585
      %v2592 = vmul.f32 %v2556, %v2585
      %v2593 = vmul.f32 %v2557, %v2585
      %v2594 = vmul.f32 %v2558, %v2585
      %v2595 = vmul.f32 %v2559, %v2585
      %v2596 = vmul.f32 %v2560, %v2585
      %v2597 = vmul.f32 %v2561, %v2585
      %v2598 = vmul.f32 %v2562, %v2585
      %v2599 = vmul.f32 %v2563, %v2585
      %v2600 = vmul.f32 %v2564, %v2585
      %v2601 = vmul.f32 %v2565, %v2585
      %v2602 = vmul.f32 %v2566, %v2585
      %v2603 = vmul.f32 %v2567, %v2585
      %v2604 = vmul.f32 %v2568, %v2585
      %v2605 = vmul.f32 %v2569, %v2585
      %v2606 = vmul.f32 %v2570, %v2585
      %v2607 = vmul.f32 %v2571, %v2585
      %v2608 = vmul.f32 %v2572, %v2585
      %v2609 = vmul.f32 %v2573, %v2585
      %v2610 = vmul.f32 %v2574, %v2585
      %v2611 = vmul.f32 %v2575, %v2585
      %v2612 = vmul.f32 %v2576, %v2585
      %v2613 = vmul.f32 %v2577, %v2585
      %v2614 = vmul.f32 %v2578, %v2585
      %v2615 = vmul.f32 %v2579, %v2585
      %v2616 = vmul.f32 %v2580, %v2585
      %v2617 = vmul.f32 %v2581, %v2585
      %v2618 = vlaneseq
      %v2619 = vshrl.u32 %v2618, 7
      %v2620 = vsub.s32 0, %v2619
      %v2621 = vrot.slane %v227, %v2620
      %v2622 = vadd.f32 %v2586, %v2621
      %v2623 = vadd.f32 %v2587, %v2621
      %v2624 = vadd.f32 %v2588, %v2621
      %v2625 = vadd.f32 %v2589, %v2621
      %v2626 = vadd.f32 %v2590, %v2621
      %v2627 = vadd.f32 %v2591, %v2621
      %v2628 = vadd.f32 %v2592, %v2621
      %v2629 = vadd.f32 %v2593, %v2621
      %v2630 = vadd.f32 %v2594, %v2621
      %v2631 = vadd.f32 %v2595, %v2621
      %v2632 = vadd.f32 %v2596, %v2621
      %v2633 = vadd.f32 %v2597, %v2621
      %v2634 = vadd.f32 %v2598, %v2621
      %v2635 = vadd.f32 %v2599, %v2621
      %v2636 = vadd.f32 %v2600, %v2621
      %v2637 = vadd.f32 %v2601, %v2621
      %v2638 = vadd.f32 %v2602, %v2621
      %v2639 = vadd.f32 %v2603, %v2621
      %v2640 = vadd.f32 %v2604, %v2621
      %v2641 = vadd.f32 %v2605, %v2621
      %v2642 = vadd.f32 %v2606, %v2621
      %v2643 = vadd.f32 %v2607, %v2621
      %v2644 = vadd.f32 %v2608, %v2621
      %v2645 = vadd.f32 %v2609, %v2621
      %v2646 = vadd.f32 %v2610, %v2621
      %v2647 = vadd.f32 %v2611, %v2621
      %v2648 = vadd.f32 %v2612, %v2621
      %v2649 = vadd.f32 %v2613, %v2621
      %v2650 = vadd.f32 %v2614, %v2621
      %v2651 = vadd.f32 %v2615, %v2621
      %v2652 = vadd.f32 %v2616, %v2621
      %v2653 = vadd.f32 %v2617, %v2621
      %v2654 = vmax.f32 %v2622, 0.0
      %v2655 = vmax.f32 %v2623, 0.0
      %v2656 = vmax.f32 %v2624, 0.0
      %v2657 = vmax.f32 %v2625, 0.0
      %v2658 = vmax.f32 %v2626, 0.0
      %v2659 = vmax.f32 %v2627, 0.0
      %v2660 = vmax.f32 %v2628, 0.0
      %v2661 = vmax.f32 %v2629, 0.0
      %v2662 = vmax.f32 %v2630, 0.0
      %v2663 = vmax.f32 %v2631, 0.0
      %v2664 = vmax.f32 %v2632, 0.0
      %v2665 = vmax.f32 %v2633, 0.0
      %v2666 = vmax.f32 %v2634, 0.0
      %v2667 = vmax.f32 %v2635, 0.0
      %v2668 = vmax.f32 %v2636, 0.0
      %v2669 = vmax.f32 %v2637, 0.0
      %v2670 = vmax.f32 %v2638, 0.0
      %v2671 = vmax.f32 %v2639, 0.0
      %v2672 = vmax.f32 %v2640, 0.0
      %v2673 = vmax.f32 %v2641, 0.0
      %v2674 = vmax.f32 %v2642, 0.0
      %v2675 = vmax.f32 %v2643, 0.0
      %v2676 = vmax.f32 %v2644, 0.0
      %v2677 = vmax.f32 %v2645, 0.0
      %v2678 = vmax.f32 %v2646, 0.0
      %v2679 = vmax.f32 %v2647, 0.0
      %v2680 = vmax.f32 %v2648, 0.0
      %v2681 = vmax.f32 %v2649, 0.0
      %v2682 = vmax.f32 %v2650, 0.0
      %v2683 = vmax.f32 %v2651, 0.0
      %v2684 = vmax.f32 %v2652, 0.0
      %v2685 = vmax.f32 %v2653, 0.0
      %2686 = vst [vmem:[#allocation2] sm:$0xff] 0.0
      %2687 = vst [vmem:[#allocation2 + $0x8] sm:$0xff] 0.0
      %2688 = vst [vmem:[#allocation2 + $0x10] sm:$0x3] 0.0
      %2689 = vst [vmem:[#allocation2 + $0x18] sm:$0xff] 0.0
      %2690 = vst [vmem:[#allocation2 + $0x20] sm:$0xff] 0.0
      %2691 = vst [vmem:[#allocation2 + $0x28] sm:$0x3] 0.0
      %2692 = vst [vmem:[#allocation2 + $0x30] sm:$0xff] 0.0
      %2693 = vst [vmem:[#allocation2 + $0x38] sm:$0xff] 0.0
      %2694 = vst [vmem:[#allocation2 + $0x40] sm:$0x3] 0.0
      %2695 = vst [vmem:[#allocation2 + $0x48] sm:$0xff] 0.0
      %2696 = vst [vmem:[#allocation2 + $0x50] sm:$0xff] 0.0
      %2697 = vst [vmem:[#allocation2 + $0x58] sm:$0x3] 0.0
      %2698 = vst [vmem:[#allocation2 + $0x60] sm:$0xff] 0.0
      %2699 = vst [vmem:[#allocation2 + $0x68] sm:$0xff] 0.0
      %2700 = vst [vmem:[#allocation2 + $0x70] sm:$0x3] 0.0
      %2701 = vst [vmem:[#allocation2 + $0x78] sm:$0xff] 0.0
      %2702 = vst [vmem:[#allocation2 + $0x80] sm:$0xff] 0.0
      %2703 = vst [vmem:[#allocation2 + $0x88] sm:$0x3] 0.0
      %2704 = vst [vmem:[#allocation2 + $0x90] sm:$0xff] 0.0
      %2705 = vst [vmem:[#allocation2 + $0x98] sm:$0xff] 0.0
      %2706 = vst [vmem:[#allocation2 + $0xa0] sm:$0x3] 0.0
      %2707 = vst [vmem:[#allocation2 + $0xa8] sm:$0xff] 0.0
      %2708 = vst [vmem:[#allocation2 + $0xb0] sm:$0xff] 0.0
      %2709 = vst [vmem:[#allocation2 + $0xb8] sm:$0x3] 0.0
      %2710 = vst [vmem:[#allocation2 + $0xc0] sm:$0xff] 0.0
      %2711 = vst [vmem:[#allocation2 + $0xc8] sm:$0xff] 0.0
      %2712 = vst [vmem:[#allocation2 + $0xd0] sm:$0x3] 0.0
      %2713 = vst [vmem:[#allocation2 + $0xd8] sm:$0xff] 0.0
      %2714 = vst [vmem:[#allocation2 + $0xe0] sm:$0xff] 0.0
      %2715 = vst [vmem:[#allocation2 + $0xe8] sm:$0x3] 0.0
      %2716 = vst [vmem:[#allocation2 + $0xf0] sm:$0xff] 0.0
      %2717 = vst [vmem:[#allocation2 + $0xf8] sm:$0xff] 0.0
      %2718 = vst [vmem:[#allocation2 + $0x100] sm:$0x3] 0.0
      %2719 = vst [vmem:[#allocation2 + $0x108] sm:$0xff] 0.0
      %2720 = vst [vmem:[#allocation2 + $0x110] sm:$0xff] 0.0
      %2721 = vst [vmem:[#allocation2 + $0x118] sm:$0x3] 0.0
      %2722 = vst [vmem:[#allocation2 + $0x120] sm:$0xff] 0.0
      %2723 = vst [vmem:[#allocation2 + $0x128] sm:$0xff] 0.0
      %2724 = vst [vmem:[#allocation2 + $0x130] sm:$0x3] 0.0
      %2725 = vst [vmem:[#allocation2 + $0x138] sm:$0xff] 0.0
      %2726 = vst [vmem:[#allocation2 + $0x140] sm:$0xff] 0.0
      %2727 = vst [vmem:[#allocation2 + $0x148] sm:$0x3] 0.0
      %2728 = vst [vmem:[#allocation2 + $0x150] sm:$0xff] 0.0
      %2729 = vst [vmem:[#allocation2 + $0x158] sm:$0xff] 0.0
      %2730 = vst [vmem:[#allocation2 + $0x160] sm:$0x3] 0.0
      %2731 = vst [vmem:[#allocation2 + $0x168] sm:$0xff] 0.0
      %2732 = vst [vmem:[#allocation2 + $0x170] sm:$0xff] 0.0
      %2733 = vst [vmem:[#allocation2 + $0x178] sm:$0x3] 0.0
      %2734 = vst [vmem:[#allocation2 + $0x180] sm:$0xff] 0.0
      %2735 = vst [vmem:[#allocation2 + $0x188] sm:$0xff] 0.0
      %2736 = vst [vmem:[#allocation2 + $0x190] sm:$0x3] 0.0
      %2737 = vst [vmem:[#allocation2 + $0x198] sm:$0xff] 0.0
      %2738 = vst [vmem:[#allocation2 + $0x1a0] sm:$0xff] 0.0
      %2739 = vst [vmem:[#allocation2 + $0x1a8] sm:$0x3] 0.0
      %s2740 = scalar_lea.vmem [#allocation2], 24
      %2741 = vst [vmem:[%s2740 + $0x1] sm:$0xff] %v2654
      %2742 = vst [vmem:[%s2740 + $0x9] sm:$0xff] %v2655
      %2743 = vst [vmem:[%s2740 + $0x19] sm:$0xff] %v2656
      %2744 = vst [vmem:[%s2740 + $0x21] sm:$0xff] %v2657
      %2745 = vst [vmem:[%s2740 + $0x31] sm:$0xff] %v2658
      %2746 = vst [vmem:[%s2740 + $0x39] sm:$0xff] %v2659
      %2747 = vst [vmem:[%s2740 + $0x49] sm:$0xff] %v2660
      %2748 = vst [vmem:[%s2740 + $0x51] sm:$0xff] %v2661
      %2749 = vst [vmem:[%s2740 + $0x61] sm:$0xff] %v2662
      %2750 = vst [vmem:[%s2740 + $0x69] sm:$0xff] %v2663
      %2751 = vst [vmem:[%s2740 + $0x79] sm:$0xff] %v2664
      %2752 = vst [vmem:[%s2740 + $0x81] sm:$0xff] %v2665
      %2753 = vst [vmem:[%s2740 + $0x91] sm:$0xff] %v2666
      %2754 = vst [vmem:[%s2740 + $0x99] sm:$0xff] %v2667
      %2755 = vst [vmem:[%s2740 + $0xa9] sm:$0xff] %v2668
      %2756 = vst [vmem:[%s2740 + $0xb1] sm:$0xff] %v2669
      %2757 = vst [vmem:[%s2740 + $0xc1] sm:$0xff] %v2670
      %2758 = vst [vmem:[%s2740 + $0xc9] sm:$0xff] %v2671
      %2759 = vst [vmem:[%s2740 + $0xd9] sm:$0xff] %v2672
      %2760 = vst [vmem:[%s2740 + $0xe1] sm:$0xff] %v2673
      %2761 = vst [vmem:[%s2740 + $0xf1] sm:$0xff] %v2674
      %2762 = vst [vmem:[%s2740 + $0xf9] sm:$0xff] %v2675
      %2763 = vst [vmem:[%s2740 + $0x109] sm:$0xff] %v2676
      %2764 = vst [vmem:[%s2740 + $0x111] sm:$0xff] %v2677
      %2765 = vst [vmem:[%s2740 + $0x121] sm:$0xff] %v2678
      %2766 = vst [vmem:[%s2740 + $0x129] sm:$0xff] %v2679
      %2767 = vst [vmem:[%s2740 + $0x139] sm:$0xff] %v2680
      %2768 = vst [vmem:[%s2740 + $0x141] sm:$0xff] %v2681
      %2769 = vst [vmem:[%s2740 + $0x151] sm:$0xff] %v2682
      %2770 = vst [vmem:[%s2740 + $0x159] sm:$0xff] %v2683
      %2771 = vst [vmem:[%s2740 + $0x169] sm:$0xff] %v2684
      %2772 = vst [vmem:[%s2740 + $0x171] sm:$0xff] %v2685
      %v2773 = vld [vmem:[#allocation2] sm:$0xff]
      %v2774 = vld [vmem:[#allocation2 + $0x8] sm:$0xff]
      %v2775 = vld [vmem:[#allocation2 + $0x18] sm:$0xff]
      %v2776 = vld [vmem:[#allocation2 + $0x20] sm:$0xff]
      %v2777 = vld [vmem:[#allocation2 + $0x30] sm:$0xff]
      %v2778 = vld [vmem:[#allocation2 + $0x38] sm:$0xff]
      %v2779 = vld [vmem:[#allocation2 + $0x48] sm:$0xff]
      %v2780 = vld [vmem:[#allocation2 + $0x50] sm:$0xff]
      %v2781 = vld [vmem:[#allocation2 + $0x60] sm:$0xff]
      %v2782 = vld [vmem:[#allocation2 + $0x68] sm:$0xff]
      %v2783 = vld [vmem:[#allocation2 + $0x78] sm:$0xff]
      %v2784 = vld [vmem:[#allocation2 + $0x80] sm:$0xff]
      %v2785 = vld [vmem:[#allocation2 + $0x90] sm:$0xff]
      %v2786 = vld [vmem:[#allocation2 + $0x98] sm:$0xff]
      %v2787 = vld [vmem:[#allocation2 + $0xa8] sm:$0xff]
      %v2788 = vld [vmem:[#allocation2 + $0xb0] sm:$0xff]
      %v2789 = vld [vmem:[#allocation2 + $0xc0] sm:$0xff]
      %v2790 = vld [vmem:[#allocation2 + $0xc8] sm:$0xff]
      %v2791 = vld [vmem:[#allocation2 + $0xd8] sm:$0xff]
      %v2792 = vld [vmem:[#allocation2 + $0xe0] sm:$0xff]
      %v2793 = vld [vmem:[#allocation2 + $0xf0] sm:$0xff]
      %v2794 = vld [vmem:[#allocation2 + $0xf8] sm:$0xff]
      %v2795 = vld [vmem:[#allocation2 + $0x108] sm:$0xff]
      %v2796 = vld [vmem:[#allocation2 + $0x110] sm:$0xff]
      %v2797 = vld [vmem:[#allocation2 + $0x120] sm:$0xff]
      %v2798 = vld [vmem:[#allocation2 + $0x128] sm:$0xff]
      %v2799 = vld [vmem:[#allocation2 + $0x138] sm:$0xff]
      %v2800 = vld [vmem:[#allocation2 + $0x140] sm:$0xff]
      %v2801 = vld [vmem:[#allocation2 + $0x150] sm:$0xff]
      %v2802 = vld [vmem:[#allocation2 + $0x158] sm:$0xff]
      %v2803 = vld [vmem:[#allocation2 + $0x168] sm:$0xff]
      %v2804 = vld [vmem:[#allocation2 + $0x170] sm:$0xff]
      %v2805 = vpack.c.bf16 %v2774, %v2773
      %v2806 = vpack.c.bf16 %v2776, %v2775
      %v2807 = vpack.c.bf16 %v2778, %v2777
      %v2808 = vpack.c.bf16 %v2780, %v2779
      %v2809 = vpack.c.bf16 %v2782, %v2781
      %v2810 = vpack.c.bf16 %v2784, %v2783
      %v2811 = vpack.c.bf16 %v2786, %v2785
      %v2812 = vpack.c.bf16 %v2788, %v2787
      %v2813 = vpack.c.bf16 %v2790, %v2789
      %v2814 = vpack.c.bf16 %v2792, %v2791
      %v2815 = vpack.c.bf16 %v2794, %v2793
      %v2816 = vpack.c.bf16 %v2796, %v2795
      %v2817 = vpack.c.bf16 %v2798, %v2797
      %v2818 = vpack.c.bf16 %v2800, %v2799
      %v2819 = vpack.c.bf16 %v2802, %v2801
      %v2820 = vpack.c.bf16 %v2804, %v2803
      %v2821 = vld [vmem:[%s2] sm:$0xf]
      %v2822 = vld [vmem:[%s2 + $0x4] sm:$0xf]
      %v2823 = vld [vmem:[%s2 + $0x8] sm:$0xf]
      %v2824 = vld [vmem:[%s2 + $0xc] sm:$0xf]
      %v2825 = vld [vmem:[%s2 + $0x10] sm:$0xf]
      %v2826 = vld [vmem:[%s2 + $0x14] sm:$0xf]
      %v2827 = vld [vmem:[%s2 + $0x18] sm:$0xf]
      %v2828 = vld [vmem:[%s2 + $0x1c] sm:$0xf]
      %v2829 = vld [vmem:[%s2 + $0x20] sm:$0xf]
      %v2830 = vld [vmem:[%s2 + $0x24] sm:$0xf]
      %v2831 = vld [vmem:[%s2 + $0x28] sm:$0xf]
      %v2832 = vld [vmem:[%s2 + $0x2c] sm:$0xf]
      %v2833 = vld [vmem:[%s2 + $0x30] sm:$0xf]
      %v2834 = vld [vmem:[%s2 + $0x34] sm:$0xf]
      %v2835 = vld [vmem:[%s2 + $0x38] sm:$0xf]
      %v2836 = vld [vmem:[%s2 + $0x3c] sm:$0xf]
      %v2837 = vld [vmem:[#allocation2 + $0x1] sm:$0xff]
      %v2838 = vld [vmem:[#allocation2 + $0x9] sm:$0xff]
      %v2839 = vld [vmem:[#allocation2 + $0x19] sm:$0xff]
      %v2840 = vld [vmem:[#allocation2 + $0x21] sm:$0xff]
      %v2841 = vld [vmem:[#allocation2 + $0x31] sm:$0xff]
      %v2842 = vld [vmem:[#allocation2 + $0x39] sm:$0xff]
      %v2843 = vld [vmem:[#allocation2 + $0x49] sm:$0xff]
      %v2844 = vld [vmem:[#allocation2 + $0x51] sm:$0xff]
      %v2845 = vld [vmem:[#allocation2 + $0x61] sm:$0xff]
      %v2846 = vld [vmem:[#allocation2 + $0x69] sm:$0xff]
      %v2847 = vld [vmem:[#allocation2 + $0x79] sm:$0xff]
      %v2848 = vld [vmem:[#allocation2 + $0x81] sm:$0xff]
      %v2849 = vld [vmem:[#allocation2 + $0x91] sm:$0xff]
      %v2850 = vld [vmem:[#allocation2 + $0x99] sm:$0xff]
      %v2851 = vld [vmem:[#allocation2 + $0xa9] sm:$0xff]
      %v2852 = vld [vmem:[#allocation2 + $0xb1] sm:$0xff]
      %v2853 = vld [vmem:[#allocation2 + $0xc1] sm:$0xff]
      %v2854 = vld [vmem:[#allocation2 + $0xc9] sm:$0xff]
      %v2855 = vld [vmem:[#allocation2 + $0xd9] sm:$0xff]
      %v2856 = vld [vmem:[#allocation2 + $0xe1] sm:$0xff]
      %v2857 = vld [vmem:[#allocation2 + $0xf1] sm:$0xff]
      %v2858 = vld [vmem:[#allocation2 + $0xf9] sm:$0xff]
      %v2859 = vld [vmem:[#allocation2 + $0x109] sm:$0xff]
      %v2860 = vld [vmem:[#allocation2 + $0x111] sm:$0xff]
      %v2861 = vld [vmem:[#allocation2 + $0x121] sm:$0xff]
      %v2862 = vld [vmem:[#allocation2 + $0x129] sm:$0xff]
      %v2863 = vld [vmem:[#allocation2 + $0x139] sm:$0xff]
      %v2864 = vld [vmem:[#allocation2 + $0x141] sm:$0xff]
      %v2865 = vld [vmem:[#allocation2 + $0x151] sm:$0xff]
      %v2866 = vld [vmem:[#allocation2 + $0x159] sm:$0xff]
      %v2867 = vld [vmem:[#allocation2 + $0x169] sm:$0xff]
      %v2868 = vld [vmem:[#allocation2 + $0x171] sm:$0xff]
      %v2869 = vpack.c.bf16 %v2838, %v2837
      %v2870 = vpack.c.bf16 %v2840, %v2839
      %v2871 = vpack.c.bf16 %v2842, %v2841
      %v2872 = vpack.c.bf16 %v2844, %v2843
      %v2873 = vpack.c.bf16 %v2846, %v2845
      %v2874 = vpack.c.bf16 %v2848, %v2847
      %v2875 = vpack.c.bf16 %v2850, %v2849
      %v2876 = vpack.c.bf16 %v2852, %v2851
      %v2877 = vpack.c.bf16 %v2854, %v2853
      %v2878 = vpack.c.bf16 %v2856, %v2855
      %v2879 = vpack.c.bf16 %v2858, %v2857
      %v2880 = vpack.c.bf16 %v2860, %v2859
      %v2881 = vpack.c.bf16 %v2862, %v2861
      %v2882 = vpack.c.bf16 %v2864, %v2863
      %v2883 = vpack.c.bf16 %v2866, %v2865
      %v2884 = vpack.c.bf16 %v2868, %v2867
      %s2885 = scalar_lea.vmem %s2, 64
      %v2886 = vld [vmem:[%s2885] sm:$0xf]
      %v2887 = vld [vmem:[%s2885 + $0x4] sm:$0xf]
      %v2888 = vld [vmem:[%s2885 + $0x8] sm:$0xf]
      %v2889 = vld [vmem:[%s2885 + $0xc] sm:$0xf]
      %v2890 = vld [vmem:[%s2885 + $0x10] sm:$0xf]
      %v2891 = vld [vmem:[%s2885 + $0x14] sm:$0xf]
      %v2892 = vld [vmem:[%s2885 + $0x18] sm:$0xf]
      %v2893 = vld [vmem:[%s2885 + $0x1c] sm:$0xf]
      %v2894 = vld [vmem:[%s2885 + $0x20] sm:$0xf]
      %v2895 = vld [vmem:[%s2885 + $0x24] sm:$0xf]
      %v2896 = vld [vmem:[%s2885 + $0x28] sm:$0xf]
      %v2897 = vld [vmem:[%s2885 + $0x2c] sm:$0xf]
      %v2898 = vld [vmem:[%s2885 + $0x30] sm:$0xf]
      %v2899 = vld [vmem:[%s2885 + $0x34] sm:$0xf]
      %v2900 = vld [vmem:[%s2885 + $0x38] sm:$0xf]
      %v2901 = vld [vmem:[%s2885 + $0x3c] sm:$0xf]
      %v2918 = vunpack.c.l.b16 %v2886
      %v2919 = vunpack.c.l.b16 %v2887
      %v2920 = vunpack.c.l.b16 %v2888
      %v2921 = vunpack.c.l.b16 %v2889
      %v2922 = vunpack.c.l.b16 %v2890
      %v2923 = vunpack.c.l.b16 %v2891
      %v2924 = vunpack.c.l.b16 %v2892
      %v2925 = vunpack.c.l.b16 %v2893
      %v2926 = vunpack.c.l.b16 %v2894
      %v2927 = vunpack.c.l.b16 %v2895
      %v2928 = vunpack.c.l.b16 %v2896
      %v2929 = vunpack.c.l.b16 %v2897
      %v2930 = vunpack.c.l.b16 %v2898
      %v2931 = vunpack.c.l.b16 %v2899
      %v2932 = vunpack.c.l.b16 %v2900
      %v2933 = vunpack.c.l.b16 %v2901
      %v2934 = vpack.c.b16 %v2919, %v2918
      %v2935 = vpack.c.b16 %v2921, %v2920
      %v2936 = vpack.c.b16 %v2923, %v2922
      %v2937 = vpack.c.b16 %v2925, %v2924
      %v2938 = vpack.c.b16 %v2927, %v2926
      %v2939 = vpack.c.b16 %v2929, %v2928
      %v2940 = vpack.c.b16 %v2931, %v2930
      %v2941 = vpack.c.b16 %v2933, %v2932
      %2950 = vmatprep.subr.bf16.mxu0 0
      %2951 = vmatpush1.bf16.msra.mxu0 %v2934
      %2952 = vmatprep.subr.bf16.mxu0 0
      %2953 = vmatpush1.bf16.msra.mxu0 %v2935
      %2954 = vmatprep.subr.bf16.mxu0 0
      %2955 = vmatpush1.bf16.msra.mxu0 %v2936
      %2956 = vmatprep.subr.bf16.mxu0 0
      %2957 = vmatpush1.bf16.msra.mxu0 %v2937
      %2958 = vmatprep.subr.bf16.mxu0 0
      %2959 = vmatpush1.bf16.msra.mxu0 %v2938
      %2960 = vmatprep.subr.bf16.mxu0 0
      %2961 = vmatpush1.bf16.msra.mxu0 %v2939
      %2962 = vmatprep.subr.bf16.mxu0 0
      %2963 = vmatpush1.bf16.msra.mxu0 %v2940
      %2964 = vmatprep.subr.bf16.mxu0 0
      %2965 = vmatpush1.bf16.msra.mxu0 %v2941
      %2966 = vmatprep.subr.bf16.mxu0 0
      %2967 = vmatpush1.bf16.msra.mxu0 0
      %2968 = vmatprep.subr.bf16.mxu0 0
      %2969 = vmatpush1.bf16.msra.mxu0 0
      %2970 = vmatprep.subr.bf16.mxu0 0
      %2971 = vmatpush1.bf16.msra.mxu0 0
      %2972 = vmatprep.subr.bf16.mxu0 0
      %2973 = vmatpush1.bf16.msra.mxu0 0
      %2974 = vmatprep.subr.bf16.mxu0 0
      %2975 = vmatpush1.bf16.msra.mxu0 0
      %2976 = vmatprep.subr.bf16.mxu0 0
      %2977 = vmatpush1.bf16.msra.mxu0 0
      %2978 = vmatprep.subr.bf16.mxu0 0
      %2979 = vmatpush1.bf16.msra.mxu0 0
      %2980 = vmatprep.subr.bf16.mxu0 0
      %2981 = vmatpush1.bf16.msra.mxu0 0
      %2982 = vmatprep.mubr.bf16.mxu0 0
      %2983 = vmatmul.mubr.bf16.gmra.mrb[0].mxu0 %v2869
      %v2984 = vpop.f32.mrb[0].mxu0
      %v2985 = vadd.f32 0.0, %v2984
      %v2986 = vpop.f32.mrb[0].mxu0
      %v2987 = vpop.f32.mrb[0].mxu0
      %v2988 = vadd.f32 0.0, %v2987
      %v2989 = vpop.f32.mrb[0].mxu0
      %2990 = vmatprep.mubr.bf16.mxu0 0
      %2991 = vmatmul.mubr.bf16.gmra.mrb[0].mxu0 %v2870
      %v2992 = vpop.f32.mrb[0].mxu0
      %v2993 = vadd.f32 0.0, %v2992
      %v2994 = vpop.f32.mrb[0].mxu0
      %v2995 = vpop.f32.mrb[0].mxu0
      %v2996 = vadd.f32 0.0, %v2995
      %v2997 = vpop.f32.mrb[0].mxu0
      %2998 = vmatprep.mubr.bf16.mxu0 0
      %2999 = vmatmul.mubr.bf16.gmra.mrb[0].mxu0 %v2871
      %v3000 = vpop.f32.mrb[0].mxu0
      %v3001 = vadd.f32 0.0, %v3000
      %v3002 = vpop.f32.mrb[0].mxu0
      %v3003 = vpop.f32.mrb[0].mxu0
      %v3004 = vadd.f32 0.0, %v3003
      %v3005 = vpop.f32.mrb[0].mxu0
      %3006 = vmatprep.mubr.bf16.mxu0 0
      %3007 = vmatmul.mubr.bf16.gmra.mrb[0].mxu0 %v2872
      %v3008 = vpop.f32.mrb[0].mxu0
      %v3009 = vadd.f32 0.0, %v3008
      %v3010 = vpop.f32.mrb[0].mxu0
      %v3011 = vpop.f32.mrb[0].mxu0
      %v3012 = vadd.f32 0.0, %v3011
      %v3013 = vpop.f32.mrb[0].mxu0
      %3014 = vmatprep.mubr.bf16.mxu0 0
      %3015 = vmatmul.mubr.bf16.gmra.mrb[0].mxu0 %v2873
      %v3016 = vpop.f32.mrb[0].mxu0
      %v3017 = vadd.f32 0.0, %v3016
      %v3018 = vpop.f32.mrb[0].mxu0
      %v3019 = vpop.f32.mrb[0].mxu0
      %v3020 = vadd.f32 0.0, %v3019
      %v3021 = vpop.f32.mrb[0].mxu0
      %3022 = vmatprep.mubr.bf16.mxu0 0
      %3023 = vmatmul.mubr.bf16.gmra.mrb[0].mxu0 %v2874
      %v3024 = vpop.f32.mrb[0].mxu0
      %v3025 = vadd.f32 0.0, %v3024
      %v3026 = vpop.f32.mrb[0].mxu0
      %v3027 = vpop.f32.mrb[0].mxu0
      %v3028 = vadd.f32 0.0, %v3027
      %v3029 = vpop.f32.mrb[0].mxu0
      %3030 = vmatprep.mubr.bf16.mxu0 0
      %3031 = vmatmul.mubr.bf16.gmra.mrb[0].mxu0 %v2875
      %v3032 = vpop.f32.mrb[0].mxu0
      %v3033 = vadd.f32 0.0, %v3032
      %v3034 = vpop.f32.mrb[0].mxu0
      %v3035 = vpop.f32.mrb[0].mxu0
      %v3036 = vadd.f32 0.0, %v3035
      %v3037 = vpop.f32.mrb[0].mxu0
      %3038 = vmatprep.mubr.bf16.mxu0 0
      %3039 = vmatmul.mubr.bf16.gmra.mrb[0].mxu0 %v2876
      %v3040 = vpop.f32.mrb[0].mxu0
      %v3041 = vadd.f32 0.0, %v3040
      %v3042 = vpop.f32.mrb[0].mxu0
      %v3043 = vpop.f32.mrb[0].mxu0
      %v3044 = vadd.f32 0.0, %v3043
      %v3045 = vpop.f32.mrb[0].mxu0
      %3046 = vmatprep.mubr.bf16.mxu0 0
      %3047 = vmatmul.mubr.bf16.gmra.mrb[0].mxu0 %v2877
      %v3048 = vpop.f32.mrb[0].mxu0
      %v3049 = vadd.f32 0.0, %v3048
      %v3050 = vpop.f32.mrb[0].mxu0
      %v3051 = vpop.f32.mrb[0].mxu0
      %v3052 = vadd.f32 0.0, %v3051
      %v3053 = vpop.f32.mrb[0].mxu0
      %3054 = vmatprep.mubr.bf16.mxu0 0
      %3055 = vmatmul.mubr.bf16.gmra.mrb[0].mxu0 %v2878
      %v3056 = vpop.f32.mrb[0].mxu0
      %v3057 = vadd.f32 0.0, %v3056
      %v3058 = vpop.f32.mrb[0].mxu0
      %v3059 = vpop.f32.mrb[0].mxu0
      %v3060 = vadd.f32 0.0, %v3059
      %v3061 = vpop.f32.mrb[0].mxu0
      %3062 = vmatprep.mubr.bf16.mxu0 0
      %3063 = vmatmul.mubr.bf16.gmra.mrb[0].mxu0 %v2879
      %v3064 = vpop.f32.mrb[0].mxu0
      %v3065 = vadd.f32 0.0, %v3064
      %v3066 = vpop.f32.mrb[0].mxu0
      %v3067 = vpop.f32.mrb[0].mxu0
      %v3068 = vadd.f32 0.0, %v3067
      %v3069 = vpop.f32.mrb[0].mxu0
      %3070 = vmatprep.mubr.bf16.mxu0 0
      %3071 = vmatmul.mubr.bf16.gmra.mrb[0].mxu0 %v2880
      %v3072 = vpop.f32.mrb[0].mxu0
      %v3073 = vadd.f32 0.0, %v3072
      %v3074 = vpop.f32.mrb[0].mxu0
      %v3075 = vpop.f32.mrb[0].mxu0
      %v3076 = vadd.f32 0.0, %v3075
      %v3077 = vpop.f32.mrb[0].mxu0
      %3078 = vmatprep.mubr.bf16.mxu0 0
      %3079 = vmatmul.mubr.bf16.gmra.mrb[0].mxu0 %v2881
      %v3080 = vpop.f32.mrb[0].mxu0
      %v3081 = vadd.f32 0.0, %v3080
      %v3082 = vpop.f32.mrb[0].mxu0
      %v3083 = vpop.f32.mrb[0].mxu0
      %v3084 = vadd.f32 0.0, %v3083
      %v3085 = vpop.f32.mrb[0].mxu0
      %3086 = vmatprep.mubr.bf16.mxu0 0
      %3087 = vmatmul.mubr.bf16.gmra.mrb[0].mxu0 %v2882
      %v3088 = vpop.f32.mrb[0].mxu0
      %v3089 = vadd.f32 0.0, %v3088
      %v3090 = vpop.f32.mrb[0].mxu0
      %v3091 = vpop.f32.mrb[0].mxu0
      %v3092 = vadd.f32 0.0, %v3091
      %v3093 = vpop.f32.mrb[0].mxu0
      %3094 = vmatprep.mubr.bf16.mxu0 0
      %3095 = vmatmul.mubr.bf16.gmra.mrb[0].mxu0 %v2883
      %v3096 = vpop.f32.mrb[0].mxu0
      %v3097 = vadd.f32 0.0, %v3096
      %v3098 = vpop.f32.mrb[0].mxu0
      %v3099 = vpop.f32.mrb[0].mxu0
      %v3100 = vadd.f32 0.0, %v3099
      %v3101 = vpop.f32.mrb[0].mxu0
      %3102 = vmatprep.mubr.bf16.mxu0 0
      %3103 = vmatmul.mubr.bf16.gmra.mrb[0].mxu0 %v2884
      %v3104 = vpop.f32.mrb[0].mxu0
      %v3105 = vadd.f32 0.0, %v3104
      %v3106 = vpop.f32.mrb[0].mxu0
      %v3107 = vpop.f32.mrb[0].mxu0
      %v3108 = vadd.f32 0.0, %v3107
      %v3109 = vpop.f32.mrb[0].mxu0
      %3110 = vdwg.mxu0
      %v3127 = vunpack.c.l.b16 %v2821
      %v3128 = vunpack.c.l.b16 %v2822
      %v3129 = vunpack.c.l.b16 %v2823
      %v3130 = vunpack.c.l.b16 %v2824
      %v3131 = vunpack.c.l.b16 %v2825
      %v3132 = vunpack.c.l.b16 %v2826
      %v3133 = vunpack.c.l.b16 %v2827
      %v3134 = vunpack.c.l.b16 %v2828
      %v3135 = vunpack.c.l.b16 %v2829
      %v3136 = vunpack.c.l.b16 %v2830
      %v3137 = vunpack.c.l.b16 %v2831
      %v3138 = vunpack.c.l.b16 %v2832
      %v3139 = vunpack.c.l.b16 %v2833
      %v3140 = vunpack.c.l.b16 %v2834
      %v3141 = vunpack.c.l.b16 %v2835
      %v3142 = vunpack.c.l.b16 %v2836
      %v3143 = vpack.c.b16 %v3128, %v3127
      %v3144 = vpack.c.b16 %v3130, %v3129
      %v3145 = vpack.c.b16 %v3132, %v3131
      %v3146 = vpack.c.b16 %v3134, %v3133
      %v3147 = vpack.c.b16 %v3136, %v3135
      %v3148 = vpack.c.b16 %v3138, %v3137
      %v3149 = vpack.c.b16 %v3140, %v3139
      %v3150 = vpack.c.b16 %v3142, %v3141
      %3159 = vmatprep.subr.bf16.mxu0 0
      %3160 = vmatpush1.bf16.msra.mxu0 %v3143
      %3161 = vmatprep.subr.bf16.mxu0 0
      %3162 = vmatpush1.bf16.msra.mxu0 %v3144
      %3163 = vmatprep.subr.bf16.mxu0 0
      %3164 = vmatpush1.bf16.msra.mxu0 %v3145
      %3165 = vmatprep.subr.bf16.mxu0 0
      %3166 = vmatpush1.bf16.msra.mxu0 %v3146
      %3167 = vmatprep.subr.bf16.mxu0 0
      %3168 = vmatpush1.bf16.msra.mxu0 %v3147
      %3169 = vmatprep.subr.bf16.mxu0 0
      %3170 = vmatpush1.bf16.msra.mxu0 %v3148
      %3171 = vmatprep.subr.bf16.mxu0 0
      %3172 = vmatpush1.bf16.msra.mxu0 %v3149
      %3173 = vmatprep.subr.bf16.mxu0 0
      %3174 = vmatpush1.bf16.msra.mxu0 %v3150
      %3175 = vmatprep.subr.bf16.mxu0 0
      %3176 = vmatpush1.bf16.msra.mxu0 0
      %3177 = vmatprep.subr.bf16.mxu0 0
      %3178 = vmatpush1.bf16.msra.mxu0 0
      %3179 = vmatprep.subr.bf16.mxu0 0
      %3180 = vmatpush1.bf16.msra.mxu0 0
      %3181 = vmatprep.subr.bf16.mxu0 0
      %3182 = vmatpush1.bf16.msra.mxu0 0
      %3183 = vmatprep.subr.bf16.mxu0 0
      %3184 = vmatpush1.bf16.msra.mxu0 0
      %3185 = vmatprep.subr.bf16.mxu0 0
      %3186 = vmatpush1.bf16.msra.mxu0 0
      %3187 = vmatprep.subr.bf16.mxu0 0
      %3188 = vmatpush1.bf16.msra.mxu0 0
      %3189 = vmatprep.subr.bf16.mxu0 0
      %3190 = vmatpush1.bf16.msra.mxu0 0
      %3191 = vmatprep.mubr.bf16.mxu0 0
      %3192 = vmatmul.mubr.bf16.gmra.mrb[0].mxu0 %v2805
      %v3193 = vpop.f32.mrb[0].mxu0
      %v3194 = vadd.f32 %v2985, %v3193
      %v3195 = vpop.f32.mrb[0].mxu0
      %v3196 = vpop.f32.mrb[0].mxu0
      %v3197 = vadd.f32 %v2988, %v3196
      %v3198 = vpop.f32.mrb[0].mxu0
      %3199 = vmatprep.mubr.bf16.mxu0 0
      %3200 = vmatmul.mubr.bf16.gmra.mrb[0].mxu0 %v2806
      %v3201 = vpop.f32.mrb[0].mxu0
      %v3202 = vadd.f32 %v2993, %v3201
      %v3203 = vpop.f32.mrb[0].mxu0
      %v3204 = vpop.f32.mrb[0].mxu0
      %v3205 = vadd.f32 %v2996, %v3204
      %v3206 = vpop.f32.mrb[0].mxu0
      %3207 = vmatprep.mubr.bf16.mxu0 0
      %3208 = vmatmul.mubr.bf16.gmra.mrb[0].mxu0 %v2807
      %v3209 = vpop.f32.mrb[0].mxu0
      %v3210 = vadd.f32 %v3001, %v3209
      %v3211 = vpop.f32.mrb[0].mxu0
      %v3212 = vpop.f32.mrb[0].mxu0
      %v3213 = vadd.f32 %v3004, %v3212
      %v3214 = vpop.f32.mrb[0].mxu0
      %3215 = vmatprep.mubr.bf16.mxu0 0
      %3216 = vmatmul.mubr.bf16.gmra.mrb[0].mxu0 %v2808
      %v3217 = vpop.f32.mrb[0].mxu0
      %v3218 = vadd.f32 %v3009, %v3217
      %v3219 = vpop.f32.mrb[0].mxu0
      %v3220 = vpop.f32.mrb[0].mxu0
      %v3221 = vadd.f32 %v3012, %v3220
      %v3222 = vpop.f32.mrb[0].mxu0
      %3223 = vmatprep.mubr.bf16.mxu0 0
      %3224 = vmatmul.mubr.bf16.gmra.mrb[0].mxu0 %v2809
      %v3225 = vpop.f32.mrb[0].mxu0
      %v3226 = vadd.f32 %v3017, %v3225
      %v3227 = vpop.f32.mrb[0].mxu0
      %v3228 = vpop.f32.mrb[0].mxu0
      %v3229 = vadd.f32 %v3020, %v3228
      %v3230 = vpop.f32.mrb[0].mxu0
      %3231 = vmatprep.mubr.bf16.mxu0 0
      %3232 = vmatmul.mubr.bf16.gmra.mrb[0].mxu0 %v2810
      %v3233 = vpop.f32.mrb[0].mxu0
      %v3234 = vadd.f32 %v3025, %v3233
      %v3235 = vpop.f32.mrb[0].mxu0
      %v3236 = vpop.f32.mrb[0].mxu0
      %v3237 = vadd.f32 %v3028, %v3236
      %v3238 = vpop.f32.mrb[0].mxu0
      %3239 = vmatprep.mubr.bf16.mxu0 0
      %3240 = vmatmul.mubr.bf16.gmra.mrb[0].mxu0 %v2811
      %v3241 = vpop.f32.mrb[0].mxu0
      %v3242 = vadd.f32 %v3033, %v3241
      %v3243 = vpop.f32.mrb[0].mxu0
      %v3244 = vpop.f32.mrb[0].mxu0
      %v3245 = vadd.f32 %v3036, %v3244
      %v3246 = vpop.f32.mrb[0].mxu0
      %3247 = vmatprep.mubr.bf16.mxu0 0
      %3248 = vmatmul.mubr.bf16.gmra.mrb[0].mxu0 %v2812
      %v3249 = vpop.f32.mrb[0].mxu0
      %v3250 = vadd.f32 %v3041, %v3249
      %v3251 = vpop.f32.mrb[0].mxu0
      %v3252 = vpop.f32.mrb[0].mxu0
      %v3253 = vadd.f32 %v3044, %v3252
      %v3254 = vpop.f32.mrb[0].mxu0
      %3255 = vmatprep.mubr.bf16.mxu0 0
      %3256 = vmatmul.mubr.bf16.gmra.mrb[0].mxu0 %v2813
      %v3257 = vpop.f32.mrb[0].mxu0
      %v3258 = vadd.f32 %v3049, %v3257
      %v3259 = vpop.f32.mrb[0].mxu0
      %v3260 = vpop.f32.mrb[0].mxu0
      %v3261 = vadd.f32 %v3052, %v3260
      %v3262 = vpop.f32.mrb[0].mxu0
      %3263 = vmatprep.mubr.bf16.mxu0 0
      %3264 = vmatmul.mubr.bf16.gmra.mrb[0].mxu0 %v2814
      %v3265 = vpop.f32.mrb[0].mxu0
      %v3266 = vadd.f32 %v3057, %v3265
      %v3267 = vpop.f32.mrb[0].mxu0
      %v3268 = vpop.f32.mrb[0].mxu0
      %v3269 = vadd.f32 %v3060, %v3268
      %v3270 = vpop.f32.mrb[0].mxu0
      %3271 = vmatprep.mubr.bf16.mxu0 0
      %3272 = vmatmul.mubr.bf16.gmra.mrb[0].mxu0 %v2815
      %v3273 = vpop.f32.mrb[0].mxu0
      %v3274 = vadd.f32 %v3065, %v3273
      %v3275 = vpop.f32.mrb[0].mxu0
      %v3276 = vpop.f32.mrb[0].mxu0
      %v3277 = vadd.f32 %v3068, %v3276
      %v3278 = vpop.f32.mrb[0].mxu0
      %3279 = vmatprep.mubr.bf16.mxu0 0
      %3280 = vmatmul.mubr.bf16.gmra.mrb[0].mxu0 %v2816
      %v3281 = vpop.f32.mrb[0].mxu0
      %v3282 = vadd.f32 %v3073, %v3281
      %v3283 = vpop.f32.mrb[0].mxu0
      %v3284 = vpop.f32.mrb[0].mxu0
      %v3285 = vadd.f32 %v3076, %v3284
      %v3286 = vpop.f32.mrb[0].mxu0
      %3287 = vmatprep.mubr.bf16.mxu0 0
      %3288 = vmatmul.mubr.bf16.gmra.mrb[0].mxu0 %v2817
      %v3289 = vpop.f32.mrb[0].mxu0
      %v3290 = vadd.f32 %v3081, %v3289
      %v3291 = vpop.f32.mrb[0].mxu0
      %v3292 = vpop.f32.mrb[0].mxu0
      %v3293 = vadd.f32 %v3084, %v3292
      %v3294 = vpop.f32.mrb[0].mxu0
      %3295 = vmatprep.mubr.bf16.mxu0 0
      %3296 = vmatmul.mubr.bf16.gmra.mrb[0].mxu0 %v2818
      %v3297 = vpop.f32.mrb[0].mxu0
      %v3298 = vadd.f32 %v3089, %v3297
      %v3299 = vpop.f32.mrb[0].mxu0
      %v3300 = vpop.f32.mrb[0].mxu0
      %v3301 = vadd.f32 %v3092, %v3300
      %v3302 = vpop.f32.mrb[0].mxu0
      %3303 = vmatprep.mubr.bf16.mxu0 0
      %3304 = vmatmul.mubr.bf16.gmra.mrb[0].mxu0 %v2819
      %v3305 = vpop.f32.mrb[0].mxu0
      %v3306 = vadd.f32 %v3097, %v3305
      %v3307 = vpop.f32.mrb[0].mxu0
      %v3308 = vpop.f32.mrb[0].mxu0
      %v3309 = vadd.f32 %v3100, %v3308
      %v3310 = vpop.f32.mrb[0].mxu0
      %3311 = vmatprep.mubr.bf16.mxu0 0
      %3312 = vmatmul.mubr.bf16.gmra.mrb[0].mxu0 %v2820
      %v3313 = vpop.f32.mrb[0].mxu0
      %v3314 = vadd.f32 %v3105, %v3313
      %v3315 = vpop.f32.mrb[0].mxu0
      %v3316 = vpop.f32.mrb[0].mxu0
      %v3317 = vadd.f32 %v3108, %v3316
      %v3318 = vpop.f32.mrb[0].mxu0
      %3319 = vdwg.mxu0
      %v3320 = vld [vmem:[#allocation2 + $0x2] sm:$0xff]
      %v3321 = vld [vmem:[#allocation2 + $0xa] sm:$0xff]
      %v3322 = vld [vmem:[#allocation2 + $0x1a] sm:$0xff]
      %v3323 = vld [vmem:[#allocation2 + $0x22] sm:$0xff]
      %v3324 = vld [vmem:[#allocation2 + $0x32] sm:$0xff]
      %v3325 = vld [vmem:[#allocation2 + $0x3a] sm:$0xff]
      %v3326 = vld [vmem:[#allocation2 + $0x4a] sm:$0xff]
      %v3327 = vld [vmem:[#allocation2 + $0x52] sm:$0xff]
      %v3328 = vld [vmem:[#allocation2 + $0x62] sm:$0xff]
      %v3329 = vld [vmem:[#allocation2 + $0x6a] sm:$0xff]
      %v3330 = vld [vmem:[#allocation2 + $0x7a] sm:$0xff]
      %v3331 = vld [vmem:[#allocation2 + $0x82] sm:$0xff]
      %v3332 = vld [vmem:[#allocation2 + $0x92] sm:$0xff]
      %v3333 = vld [vmem:[#allocation2 + $0x9a] sm:$0xff]
      %v3334 = vld [vmem:[#allocation2 + $0xaa] sm:$0xff]
      %v3335 = vld [vmem:[#allocation2 + $0xb2] sm:$0xff]
      %v3336 = vld [vmem:[#allocation2 + $0xc2] sm:$0xff]
      %v3337 = vld [vmem:[#allocation2 + $0xca] sm:$0xff]
      %v3338 = vld [vmem:[#allocation2 + $0xda] sm:$0xff]
      %v3339 = vld [vmem:[#allocation2 + $0xe2] sm:$0xff]
      %v3340 = vld [vmem:[#allocation2 + $0xf2] sm:$0xff]
      %v3341 = vld [vmem:[#allocation2 + $0xfa] sm:$0xff]
      %v3342 = vld [vmem:[#allocation2 + $0x10a] sm:$0xff]
      %v3343 = vld [vmem:[#allocation2 + $0x112] sm:$0xff]
      %v3344 = vld [vmem:[#allocation2 + $0x122] sm:$0xff]
      %v3345 = vld [vmem:[#allocation2 + $0x12a] sm:$0xff]
      %v3346 = vld [vmem:[#allocation2 + $0x13a] sm:$0xff]
      %v3347 = vld [vmem:[#allocation2 + $0x142] sm:$0xff]
      %v3348 = vld [vmem:[#allocation2 + $0x152] sm:$0xff]
      %v3349 = vld [vmem:[#allocation2 + $0x15a] sm:$0xff]
      %v3350 = vld [vmem:[#allocation2 + $0x16a] sm:$0xff]
      %v3351 = vld [vmem:[#allocation2 + $0x172] sm:$0xff]
      %v3352 = vpack.c.bf16 %v3321, %v3320
      %v3353 = vpack.c.bf16 %v3323, %v3322
      %v3354 = vpack.c.bf16 %v3325, %v3324
      %v3355 = vpack.c.bf16 %v3327, %v3326
      %v3356 = vpack.c.bf16 %v3329, %v3328
      %v3357 = vpack.c.bf16 %v3331, %v3330
      %v3358 = vpack.c.bf16 %v3333, %v3332
      %v3359 = vpack.c.bf16 %v3335, %v3334
      %v3360 = vpack.c.bf16 %v3337, %v3336
      %v3361 = vpack.c.bf16 %v3339, %v3338
      %v3362 = vpack.c.bf16 %v3341, %v3340
      %v3363 = vpack.c.bf16 %v3343, %v3342
      %v3364 = vpack.c.bf16 %v3345, %v3344
      %v3365 = vpack.c.bf16 %v3347, %v3346
      %v3366 = vpack.c.bf16 %v3349, %v3348
      %v3367 = vpack.c.bf16 %v3351, %v3350
      %s3368 = scalar_lea.vmem %s2, 128
      %v3369 = vld [vmem:[%s3368] sm:$0xf]
      %v3370 = vld [vmem:[%s3368 + $0x4] sm:$0xf]
      %v3371 = vld [vmem:[%s3368 + $0x8] sm:$0xf]
      %v3372 = vld [vmem:[%s3368 + $0xc] sm:$0xf]
      %v3373 = vld [vmem:[%s3368 + $0x10] sm:$0xf]
      %v3374 = vld [vmem:[%s3368 + $0x14] sm:$0xf]
      %v3375 = vld [vmem:[%s3368 + $0x18] sm:$0xf]
      %v3376 = vld [vmem:[%s3368 + $0x1c] sm:$0xf]
      %v3377 = vld [vmem:[%s3368 + $0x20] sm:$0xf]
      %v3378 = vld [vmem:[%s3368 + $0x24] sm:$0xf]
      %v3379 = vld [vmem:[%s3368 + $0x28] sm:$0xf]
      %v3380 = vld [vmem:[%s3368 + $0x2c] sm:$0xf]
      %v3381 = vld [vmem:[%s3368 + $0x30] sm:$0xf]
      %v3382 = vld [vmem:[%s3368 + $0x34] sm:$0xf]
      %v3383 = vld [vmem:[%s3368 + $0x38] sm:$0xf]
      %v3384 = vld [vmem:[%s3368 + $0x3c] sm:$0xf]
      %v3401 = vunpack.c.l.b16 %v3369
      %v3402 = vunpack.c.l.b16 %v3370
      %v3403 = vunpack.c.l.b16 %v3371
      %v3404 = vunpack.c.l.b16 %v3372
      %v3405 = vunpack.c.l.b16 %v3373
      %v3406 = vunpack.c.l.b16 %v3374
      %v3407 = vunpack.c.l.b16 %v3375
      %v3408 = vunpack.c.l.b16 %v3376
      %v3409 = vunpack.c.l.b16 %v3377
      %v3410 = vunpack.c.l.b16 %v3378
      %v3411 = vunpack.c.l.b16 %v3379
      %v3412 = vunpack.c.l.b16 %v3380
      %v3413 = vunpack.c.l.b16 %v3381
      %v3414 = vunpack.c.l.b16 %v3382
      %v3415 = vunpack.c.l.b16 %v3383
      %v3416 = vunpack.c.l.b16 %v3384
      %v3417 = vpack.c.b16 %v3402, %v3401
      %v3418 = vpack.c.b16 %v3404, %v3403
      %v3419 = vpack.c.b16 %v3406, %v3405
      %v3420 = vpack.c.b16 %v3408, %v3407
      %v3421 = vpack.c.b16 %v3410, %v3409
      %v3422 = vpack.c.b16 %v3412, %v3411
      %v3423 = vpack.c.b16 %v3414, %v3413
      %v3424 = vpack.c.b16 %v3416, %v3415
      %3433 = vmatprep.subr.bf16.mxu0 0
      %3434 = vmatpush1.bf16.msra.mxu0 %v3417
      %3435 = vmatprep.subr.bf16.mxu0 0
      %3436 = vmatpush1.bf16.msra.mxu0 %v3418
      %3437 = vmatprep.subr.bf16.mxu0 0
      %3438 = vmatpush1.bf16.msra.mxu0 %v3419
      %3439 = vmatprep.subr.bf16.mxu0 0
      %3440 = vmatpush1.bf16.msra.mxu0 %v3420
      %3441 = vmatprep.subr.bf16.mxu0 0
      %3442 = vmatpush1.bf16.msra.mxu0 %v3421
      %3443 = vmatprep.subr.bf16.mxu0 0
      %3444 = vmatpush1.bf16.msra.mxu0 %v3422
      %3445 = vmatprep.subr.bf16.mxu0 0
      %3446 = vmatpush1.bf16.msra.mxu0 %v3423
      %3447 = vmatprep.subr.bf16.mxu0 0
      %3448 = vmatpush1.bf16.msra.mxu0 %v3424
      %3449 = vmatprep.subr.bf16.mxu0 0
      %3450 = vmatpush1.bf16.msra.mxu0 0
      %3451 = vmatprep.subr.bf16.mxu0 0
      %3452 = vmatpush1.bf16.msra.mxu0 0
      %3453 = vmatprep.subr.bf16.mxu0 0
      %3454 = vmatpush1.bf16.msra.mxu0 0
      %3455 = vmatprep.subr.bf16.mxu0 0
      %3456 = vmatpush1.bf16.msra.mxu0 0
      %3457 = vmatprep.subr.bf16.mxu0 0
      %3458 = vmatpush1.bf16.msra.mxu0 0
      %3459 = vmatprep.subr.bf16.mxu0 0
      %3460 = vmatpush1.bf16.msra.mxu0 0
      %3461 = vmatprep.subr.bf16.mxu0 0
      %3462 = vmatpush1.bf16.msra.mxu0 0
      %3463 = vmatprep.subr.bf16.mxu0 0
      %3464 = vmatpush1.bf16.msra.mxu0 0
      %3465 = vmatprep.mubr.bf16.mxu0 0
      %3466 = vmatmul.mubr.bf16.gmra.mrb[0].mxu0 %v3352
      %v3467 = vpop.f32.mrb[0].mxu0
      %v3468 = vadd.f32 0.0, %v3467
      %v3469 = vpop.f32.mrb[0].mxu0
      %v3470 = vpop.f32.mrb[0].mxu0
      %v3471 = vadd.f32 0.0, %v3470
      %v3472 = vpop.f32.mrb[0].mxu0
      %3473 = vmatprep.mubr.bf16.mxu0 0
      %3474 = vmatmul.mubr.bf16.gmra.mrb[0].mxu0 %v3353
      %v3475 = vpop.f32.mrb[0].mxu0
      %v3476 = vadd.f32 0.0, %v3475
      %v3477 = vpop.f32.mrb[0].mxu0
      %v3478 = vpop.f32.mrb[0].mxu0
      %v3479 = vadd.f32 0.0, %v3478
      %v3480 = vpop.f32.mrb[0].mxu0
      %3481 = vmatprep.mubr.bf16.mxu0 0
      %3482 = vmatmul.mubr.bf16.gmra.mrb[0].mxu0 %v3354
      %v3483 = vpop.f32.mrb[0].mxu0
      %v3484 = vadd.f32 0.0, %v3483
      %v3485 = vpop.f32.mrb[0].mxu0
      %v3486 = vpop.f32.mrb[0].mxu0
      %v3487 = vadd.f32 0.0, %v3486
      %v3488 = vpop.f32.mrb[0].mxu0
      %3489 = vmatprep.mubr.bf16.mxu0 0
      %3490 = vmatmul.mubr.bf16.gmra.mrb[0].mxu0 %v3355
      %v3491 = vpop.f32.mrb[0].mxu0
      %v3492 = vadd.f32 0.0, %v3491
      %v3493 = vpop.f32.mrb[0].mxu0
      %v3494 = vpop.f32.mrb[0].mxu0
      %v3495 = vadd.f32 0.0, %v3494
      %v3496 = vpop.f32.mrb[0].mxu0
      %3497 = vmatprep.mubr.bf16.mxu0 0
      %3498 = vmatmul.mubr.bf16.gmra.mrb[0].mxu0 %v3356
      %v3499 = vpop.f32.mrb[0].mxu0
      %v3500 = vadd.f32 0.0, %v3499
      %v3501 = vpop.f32.mrb[0].mxu0
      %v3502 = vpop.f32.mrb[0].mxu0
      %v3503 = vadd.f32 0.0, %v3502
      %v3504 = vpop.f32.mrb[0].mxu0
      %3505 = vmatprep.mubr.bf16.mxu0 0
      %3506 = vmatmul.mubr.bf16.gmra.mrb[0].mxu0 %v3357
      %v3507 = vpop.f32.mrb[0].mxu0
      %v3508 = vadd.f32 0.0, %v3507
      %v3509 = vpop.f32.mrb[0].mxu0
      %v3510 = vpop.f32.mrb[0].mxu0
      %v3511 = vadd.f32 0.0, %v3510
      %v3512 = vpop.f32.mrb[0].mxu0
      %3513 = vmatprep.mubr.bf16.mxu0 0
      %3514 = vmatmul.mubr.bf16.gmra.mrb[0].mxu0 %v3358
      %v3515 = vpop.f32.mrb[0].mxu0
      %v3516 = vadd.f32 0.0, %v3515
      %v3517 = vpop.f32.mrb[0].mxu0
      %v3518 = vpop.f32.mrb[0].mxu0
      %v3519 = vadd.f32 0.0, %v3518
      %v3520 = vpop.f32.mrb[0].mxu0
      %3521 = vmatprep.mubr.bf16.mxu0 0
      %3522 = vmatmul.mubr.bf16.gmra.mrb[0].mxu0 %v3359
      %v3523 = vpop.f32.mrb[0].mxu0
      %v3524 = vadd.f32 0.0, %v3523
      %v3525 = vpop.f32.mrb[0].mxu0
      %v3526 = vpop.f32.mrb[0].mxu0
      %v3527 = vadd.f32 0.0, %v3526
      %v3528 = vpop.f32.mrb[0].mxu0
      %3529 = vmatprep.mubr.bf16.mxu0 0
      %3530 = vmatmul.mubr.bf16.gmra.mrb[0].mxu0 %v3360
      %v3531 = vpop.f32.mrb[0].mxu0
      %v3532 = vadd.f32 0.0, %v3531
      %v3533 = vpop.f32.mrb[0].mxu0
      %v3534 = vpop.f32.mrb[0].mxu0
      %v3535 = vadd.f32 0.0, %v3534
      %v3536 = vpop.f32.mrb[0].mxu0
      %3537 = vmatprep.mubr.bf16.mxu0 0
      %3538 = vmatmul.mubr.bf16.gmra.mrb[0].mxu0 %v3361
      %v3539 = vpop.f32.mrb[0].mxu0
      %v3540 = vadd.f32 0.0, %v3539
      %v3541 = vpop.f32.mrb[0].mxu0
      %v3542 = vpop.f32.mrb[0].mxu0
      %v3543 = vadd.f32 0.0, %v3542
      %v3544 = vpop.f32.mrb[0].mxu0
      %3545 = vmatprep.mubr.bf16.mxu0 0
      %3546 = vmatmul.mubr.bf16.gmra.mrb[0].mxu0 %v3362
      %v3547 = vpop.f32.mrb[0].mxu0
      %v3548 = vadd.f32 0.0, %v3547
      %v3549 = vpop.f32.mrb[0].mxu0
      %v3550 = vpop.f32.mrb[0].mxu0
      %v3551 = vadd.f32 0.0, %v3550
      %v3552 = vpop.f32.mrb[0].mxu0
      %3553 = vmatprep.mubr.bf16.mxu0 0
      %3554 = vmatmul.mubr.bf16.gmra.mrb[0].mxu0 %v3363
      %v3555 = vpop.f32.mrb[0].mxu0
      %v3556 = vadd.f32 0.0, %v3555
      %v3557 = vpop.f32.mrb[0].mxu0
      %v3558 = vpop.f32.mrb[0].mxu0
      %v3559 = vadd.f32 0.0, %v3558
      %v3560 = vpop.f32.mrb[0].mxu0
      %3561 = vmatprep.mubr.bf16.mxu0 0
      %3562 = vmatmul.mubr.bf16.gmra.mrb[0].mxu0 %v3364
      %v3563 = vpop.f32.mrb[0].mxu0
      %v3564 = vadd.f32 0.0, %v3563
      %v3565 = vpop.f32.mrb[0].mxu0
      %v3566 = vpop.f32.mrb[0].mxu0
      %v3567 = vadd.f32 0.0, %v3566
      %v3568 = vpop.f32.mrb[0].mxu0
      %3569 = vmatprep.mubr.bf16.mxu0 0
      %3570 = vmatmul.mubr.bf16.gmra.mrb[0].mxu0 %v3365
      %v3571 = vpop.f32.mrb[0].mxu0
      %v3572 = vadd.f32 0.0, %v3571
      %v3573 = vpop.f32.mrb[0].mxu0
      %v3574 = vpop.f32.mrb[0].mxu0
      %v3575 = vadd.f32 0.0, %v3574
      %v3576 = vpop.f32.mrb[0].mxu0
      %3577 = vmatprep.mubr.bf16.mxu0 0
      %3578 = vmatmul.mubr.bf16.gmra.mrb[0].mxu0 %v3366
      %v3579 = vpop.f32.mrb[0].mxu0
      %v3580 = vadd.f32 0.0, %v3579
      %v3581 = vpop.f32.mrb[0].mxu0
      %v3582 = vpop.f32.mrb[0].mxu0
      %v3583 = vadd.f32 0.0, %v3582
      %v3584 = vpop.f32.mrb[0].mxu0
      %3585 = vmatprep.mubr.bf16.mxu0 0
      %3586 = vmatmul.mubr.bf16.gmra.mrb[0].mxu0 %v3367
      %v3587 = vpop.f32.mrb[0].mxu0
      %v3588 = vadd.f32 0.0, %v3587
      %v3589 = vpop.f32.mrb[0].mxu0
      %v3590 = vpop.f32.mrb[0].mxu0
      %v3591 = vadd.f32 0.0, %v3590
      %v3592 = vpop.f32.mrb[0].mxu0
      %3593 = vdwg.mxu0
      %v3594 = vadd.f32 %v3194, %v3468
      %v3595 = vadd.f32 %v3197, %v3471
      %v3596 = vadd.f32 %v3202, %v3476
      %v3597 = vadd.f32 %v3205, %v3479
      %v3598 = vadd.f32 %v3210, %v3484
      %v3599 = vadd.f32 %v3213, %v3487
      %v3600 = vadd.f32 %v3218, %v3492
      %v3601 = vadd.f32 %v3221, %v3495
      %v3602 = vadd.f32 %v3226, %v3500
      %v3603 = vadd.f32 %v3229, %v3503
      %v3604 = vadd.f32 %v3234, %v3508
      %v3605 = vadd.f32 %v3237, %v3511
      %v3606 = vadd.f32 %v3242, %v3516
      %v3607 = vadd.f32 %v3245, %v3519
      %v3608 = vadd.f32 %v3250, %v3524
      %v3609 = vadd.f32 %v3253, %v3527
      %v3610 = vadd.f32 %v3258, %v3532
      %v3611 = vadd.f32 %v3261, %v3535
      %v3612 = vadd.f32 %v3266, %v3540
      %v3613 = vadd.f32 %v3269, %v3543
      %v3614 = vadd.f32 %v3274, %v3548
      %v3615 = vadd.f32 %v3277, %v3551
      %v3616 = vadd.f32 %v3282, %v3556
      %v3617 = vadd.f32 %v3285, %v3559
      %v3618 = vadd.f32 %v3290, %v3564
      %v3619 = vadd.f32 %v3293, %v3567
      %v3620 = vadd.f32 %v3298, %v3572
      %v3621 = vadd.f32 %v3301, %v3575
      %v3622 = vadd.f32 %v3306, %v3580
      %v3623 = vadd.f32 %v3309, %v3583
      %v3624 = vadd.f32 %v3314, %v3588
      %v3625 = vadd.f32 %v3317, %v3591
      %v3626 = vld [vmem:[%s2740] sm:$0xff]
      %v3627 = vld [vmem:[%s2740 + $0x8] sm:$0xff]
      %v3628 = vld [vmem:[%s2740 + $0x18] sm:$0xff]
      %v3629 = vld [vmem:[%s2740 + $0x20] sm:$0xff]
      %v3630 = vld [vmem:[%s2740 + $0x30] sm:$0xff]
      %v3631 = vld [vmem:[%s2740 + $0x38] sm:$0xff]
      %v3632 = vld [vmem:[%s2740 + $0x48] sm:$0xff]
      %v3633 = vld [vmem:[%s2740 + $0x50] sm:$0xff]
      %v3634 = vld [vmem:[%s2740 + $0x60] sm:$0xff]
      %v3635 = vld [vmem:[%s2740 + $0x68] sm:$0xff]
      %v3636 = vld [vmem:[%s2740 + $0x78] sm:$0xff]
      %v3637 = vld [vmem:[%s2740 + $0x80] sm:$0xff]
      %v3638 = vld [vmem:[%s2740 + $0x90] sm:$0xff]
      %v3639 = vld [vmem:[%s2740 + $0x98] sm:$0xff]
      %v3640 = vld [vmem:[%s2740 + $0xa8] sm:$0xff]
      %v3641 = vld [vmem:[%s2740 + $0xb0] sm:$0xff]
      %v3642 = vld [vmem:[%s2740 + $0xc0] sm:$0xff]
      %v3643 = vld [vmem:[%s2740 + $0xc8] sm:$0xff]
      %v3644 = vld [vmem:[%s2740 + $0xd8] sm:$0xff]
      %v3645 = vld [vmem:[%s2740 + $0xe0] sm:$0xff]
      %v3646 = vld [vmem:[%s2740 + $0xf0] sm:$0xff]
      %v3647 = vld [vmem:[%s2740 + $0xf8] sm:$0xff]
      %v3648 = vld [vmem:[%s2740 + $0x108] sm:$0xff]
      %v3649 = vld [vmem:[%s2740 + $0x110] sm:$0xff]
      %v3650 = vld [vmem:[%s2740 + $0x120] sm:$0xff]
      %v3651 = vld [vmem:[%s2740 + $0x128] sm:$0xff]
      %v3652 = vld [vmem:[%s2740 + $0x138] sm:$0xff]
      %v3653 = vld [vmem:[%s2740 + $0x140] sm:$0xff]
      %v3654 = vld [vmem:[%s2740 + $0x150] sm:$0xff]
      %v3655 = vld [vmem:[%s2740 + $0x158] sm:$0xff]
      %v3656 = vld [vmem:[%s2740 + $0x168] sm:$0xff]
      %v3657 = vld [vmem:[%s2740 + $0x170] sm:$0xff]
      %v3658 = vpack.c.bf16 %v3627, %v3626
      %v3659 = vpack.c.bf16 %v3629, %v3628
      %v3660 = vpack.c.bf16 %v3631, %v3630
      %v3661 = vpack.c.bf16 %v3633, %v3632
      %v3662 = vpack.c.bf16 %v3635, %v3634
      %v3663 = vpack.c.bf16 %v3637, %v3636
      %v3664 = vpack.c.bf16 %v3639, %v3638
      %v3665 = vpack.c.bf16 %v3641, %v3640
      %v3666 = vpack.c.bf16 %v3643, %v3642
      %v3667 = vpack.c.bf16 %v3645, %v3644
      %v3668 = vpack.c.bf16 %v3647, %v3646
      %v3669 = vpack.c.bf16 %v3649, %v3648
      %v3670 = vpack.c.bf16 %v3651, %v3650
      %v3671 = vpack.c.bf16 %v3653, %v3652
      %v3672 = vpack.c.bf16 %v3655, %v3654
      %v3673 = vpack.c.bf16 %v3657, %v3656
      %s3674 = scalar_lea.vmem %s2, 192
      %v3675 = vld [vmem:[%s3674] sm:$0xf]
      %v3676 = vld [vmem:[%s3674 + $0x4] sm:$0xf]
      %v3677 = vld [vmem:[%s3674 + $0x8] sm:$0xf]
      %v3678 = vld [vmem:[%s3674 + $0xc] sm:$0xf]
      %v3679 = vld [vmem:[%s3674 + $0x10] sm:$0xf]
      %v3680 = vld [vmem:[%s3674 + $0x14] sm:$0xf]
      %v3681 = vld [vmem:[%s3674 + $0x18] sm:$0xf]
      %v3682 = vld [vmem:[%s3674 + $0x1c] sm:$0xf]
      %v3683 = vld [vmem:[%s3674 + $0x20] sm:$0xf]
      %v3684 = vld [vmem:[%s3674 + $0x24] sm:$0xf]
      %v3685 = vld [vmem:[%s3674 + $0x28] sm:$0xf]
      %v3686 = vld [vmem:[%s3674 + $0x2c] sm:$0xf]
      %v3687 = vld [vmem:[%s3674 + $0x30] sm:$0xf]
      %v3688 = vld [vmem:[%s3674 + $0x34] sm:$0xf]
      %v3689 = vld [vmem:[%s3674 + $0x38] sm:$0xf]
      %v3690 = vld [vmem:[%s3674 + $0x3c] sm:$0xf]
      %v3707 = vunpack.c.l.b16 %v3675
      %v3708 = vunpack.c.l.b16 %v3676
      %v3709 = vunpack.c.l.b16 %v3677
      %v3710 = vunpack.c.l.b16 %v3678
      %v3711 = vunpack.c.l.b16 %v3679
      %v3712 = vunpack.c.l.b16 %v3680
      %v3713 = vunpack.c.l.b16 %v3681
      %v3714 = vunpack.c.l.b16 %v3682
      %v3715 = vunpack.c.l.b16 %v3683
      %v3716 = vunpack.c.l.b16 %v3684
      %v3717 = vunpack.c.l.b16 %v3685
      %v3718 = vunpack.c.l.b16 %v3686
      %v3719 = vunpack.c.l.b16 %v3687
      %v3720 = vunpack.c.l.b16 %v3688
      %v3721 = vunpack.c.l.b16 %v3689
      %v3722 = vunpack.c.l.b16 %v3690
      %v3723 = vpack.c.b16 %v3708, %v3707
      %v3724 = vpack.c.b16 %v3710, %v3709
      %v3725 = vpack.c.b16 %v3712, %v3711
      %v3726 = vpack.c.b16 %v3714, %v3713
      %v3727 = vpack.c.b16 %v3716, %v3715
      %v3728 = vpack.c.b16 %v3718, %v3717
      %v3729 = vpack.c.b16 %v3720, %v3719
      %v3730 = vpack.c.b16 %v3722, %v3721
      %3739 = vmatprep.subr.bf16.mxu0 0
      %3740 = vmatpush1.bf16.msra.mxu0 %v3723
      %3741 = vmatprep.subr.bf16.mxu0 0
      %3742 = vmatpush1.bf16.msra.mxu0 %v3724
      %3743 = vmatprep.subr.bf16.mxu0 0
      %3744 = vmatpush1.bf16.msra.mxu0 %v3725
      %3745 = vmatprep.subr.bf16.mxu0 0
      %3746 = vmatpush1.bf16.msra.mxu0 %v3726
      %3747 = vmatprep.subr.bf16.mxu0 0
      %3748 = vmatpush1.bf16.msra.mxu0 %v3727
      %3749 = vmatprep.subr.bf16.mxu0 0
      %3750 = vmatpush1.bf16.msra.mxu0 %v3728
      %3751 = vmatprep.subr.bf16.mxu0 0
      %3752 = vmatpush1.bf16.msra.mxu0 %v3729
      %3753 = vmatprep.subr.bf16.mxu0 0
      %3754 = vmatpush1.bf16.msra.mxu0 %v3730
      %3755 = vmatprep.subr.bf16.mxu0 0
      %3756 = vmatpush1.bf16.msra.mxu0 0
      %3757 = vmatprep.subr.bf16.mxu0 0
      %3758 = vmatpush1.bf16.msra.mxu0 0
      %3759 = vmatprep.subr.bf16.mxu0 0
      %3760 = vmatpush1.bf16.msra.mxu0 0
      %3761 = vmatprep.subr.bf16.mxu0 0
      %3762 = vmatpush1.bf16.msra.mxu0 0
      %3763 = vmatprep.subr.bf16.mxu0 0
      %3764 = vmatpush1.bf16.msra.mxu0 0
      %3765 = vmatprep.subr.bf16.mxu0 0
      %3766 = vmatpush1.bf16.msra.mxu0 0
      %3767 = vmatprep.subr.bf16.mxu0 0
      %3768 = vmatpush1.bf16.msra.mxu0 0
      %3769 = vmatprep.subr.bf16.mxu0 0
      %3770 = vmatpush1.bf16.msra.mxu0 0
      %3771 = vmatprep.mubr.bf16.mxu0 0
      %3772 = vmatmul.mubr.bf16.gmra.mrb[0].mxu0 %v3658
      %v3773 = vpop.f32.mrb[0].mxu0
      %v3774 = vadd.f32 0.0, %v3773
      %v3775 = vpop.f32.mrb[0].mxu0
      %v3776 = vpop.f32.mrb[0].mxu0
      %v3777 = vadd.f32 0.0, %v3776
      %v3778 = vpop.f32.mrb[0].mxu0
      %3779 = vmatprep.mubr.bf16.mxu0 0
      %3780 = vmatmul.mubr.bf16.gmra.mrb[0].mxu0 %v3659
      %v3781 = vpop.f32.mrb[0].mxu0
      %v3782 = vadd.f32 0.0, %v3781
      %v3783 = vpop.f32.mrb[0].mxu0
      %v3784 = vpop.f32.mrb[0].mxu0
      %v3785 = vadd.f32 0.0, %v3784
      %v3786 = vpop.f32.mrb[0].mxu0
      %3787 = vmatprep.mubr.bf16.mxu0 0
      %3788 = vmatmul.mubr.bf16.gmra.mrb[0].mxu0 %v3660
      %v3789 = vpop.f32.mrb[0].mxu0
      %v3790 = vadd.f32 0.0, %v3789
      %v3791 = vpop.f32.mrb[0].mxu0
      %v3792 = vpop.f32.mrb[0].mxu0
      %v3793 = vadd.f32 0.0, %v3792
      %v3794 = vpop.f32.mrb[0].mxu0
      %3795 = vmatprep.mubr.bf16.mxu0 0
      %3796 = vmatmul.mubr.bf16.gmra.mrb[0].mxu0 %v3661
      %v3797 = vpop.f32.mrb[0].mxu0
      %v3798 = vadd.f32 0.0, %v3797
      %v3799 = vpop.f32.mrb[0].mxu0
      %v3800 = vpop.f32.mrb[0].mxu0
      %v3801 = vadd.f32 0.0, %v3800
      %v3802 = vpop.f32.mrb[0].mxu0
      %3803 = vmatprep.mubr.bf16.mxu0 0
      %3804 = vmatmul.mubr.bf16.gmra.mrb[0].mxu0 %v3662
      %v3805 = vpop.f32.mrb[0].mxu0
      %v3806 = vadd.f32 0.0, %v3805
      %v3807 = vpop.f32.mrb[0].mxu0
      %v3808 = vpop.f32.mrb[0].mxu0
      %v3809 = vadd.f32 0.0, %v3808
      %v3810 = vpop.f32.mrb[0].mxu0
      %3811 = vmatprep.mubr.bf16.mxu0 0
      %3812 = vmatmul.mubr.bf16.gmra.mrb[0].mxu0 %v3663
      %v3813 = vpop.f32.mrb[0].mxu0
      %v3814 = vadd.f32 0.0, %v3813
      %v3815 = vpop.f32.mrb[0].mxu0
      %v3816 = vpop.f32.mrb[0].mxu0
      %v3817 = vadd.f32 0.0, %v3816
      %v3818 = vpop.f32.mrb[0].mxu0
      %3819 = vmatprep.mubr.bf16.mxu0 0
      %3820 = vmatmul.mubr.bf16.gmra.mrb[0].mxu0 %v3664
      %v3821 = vpop.f32.mrb[0].mxu0
      %v3822 = vadd.f32 0.0, %v3821
      %v3823 = vpop.f32.mrb[0].mxu0
      %v3824 = vpop.f32.mrb[0].mxu0
      %v3825 = vadd.f32 0.0, %v3824
      %v3826 = vpop.f32.mrb[0].mxu0
      %3827 = vmatprep.mubr.bf16.mxu0 0
      %3828 = vmatmul.mubr.bf16.gmra.mrb[0].mxu0 %v3665
      %v3829 = vpop.f32.mrb[0].mxu0
      %v3830 = vadd.f32 0.0, %v3829
      %v3831 = vpop.f32.mrb[0].mxu0
      %v3832 = vpop.f32.mrb[0].mxu0
      %v3833 = vadd.f32 0.0, %v3832
      %v3834 = vpop.f32.mrb[0].mxu0
      %3835 = vmatprep.mubr.bf16.mxu0 0
      %3836 = vmatmul.mubr.bf16.gmra.mrb[0].mxu0 %v3666
      %v3837 = vpop.f32.mrb[0].mxu0
      %v3838 = vadd.f32 0.0, %v3837
      %v3839 = vpop.f32.mrb[0].mxu0
      %v3840 = vpop.f32.mrb[0].mxu0
      %v3841 = vadd.f32 0.0, %v3840
      %v3842 = vpop.f32.mrb[0].mxu0
      %3843 = vmatprep.mubr.bf16.mxu0 0
      %3844 = vmatmul.mubr.bf16.gmra.mrb[0].mxu0 %v3667
      %v3845 = vpop.f32.mrb[0].mxu0
      %v3846 = vadd.f32 0.0, %v3845
      %v3847 = vpop.f32.mrb[0].mxu0
      %v3848 = vpop.f32.mrb[0].mxu0
      %v3849 = vadd.f32 0.0, %v3848
      %v3850 = vpop.f32.mrb[0].mxu0
      %3851 = vmatprep.mubr.bf16.mxu0 0
      %3852 = vmatmul.mubr.bf16.gmra.mrb[0].mxu0 %v3668
      %v3853 = vpop.f32.mrb[0].mxu0
      %v3854 = vadd.f32 0.0, %v3853
      %v3855 = vpop.f32.mrb[0].mxu0
      %v3856 = vpop.f32.mrb[0].mxu0
      %v3857 = vadd.f32 0.0, %v3856
      %v3858 = vpop.f32.mrb[0].mxu0
      %3859 = vmatprep.mubr.bf16.mxu0 0
      %3860 = vmatmul.mubr.bf16.gmra.mrb[0].mxu0 %v3669
      %v3861 = vpop.f32.mrb[0].mxu0
      %v3862 = vadd.f32 0.0, %v3861
      %v3863 = vpop.f32.mrb[0].mxu0
      %v3864 = vpop.f32.mrb[0].mxu0
      %v3865 = vadd.f32 0.0, %v3864
      %v3866 = vpop.f32.mrb[0].mxu0
      %3867 = vmatprep.mubr.bf16.mxu0 0
      %3868 = vmatmul.mubr.bf16.gmra.mrb[0].mxu0 %v3670
      %v3869 = vpop.f32.mrb[0].mxu0
      %v3870 = vadd.f32 0.0, %v3869
      %v3871 = vpop.f32.mrb[0].mxu0
      %v3872 = vpop.f32.mrb[0].mxu0
      %v3873 = vadd.f32 0.0, %v3872
      %v3874 = vpop.f32.mrb[0].mxu0
      %3875 = vmatprep.mubr.bf16.mxu0 0
      %3876 = vmatmul.mubr.bf16.gmra.mrb[0].mxu0 %v3671
      %v3877 = vpop.f32.mrb[0].mxu0
      %v3878 = vadd.f32 0.0, %v3877
      %v3879 = vpop.f32.mrb[0].mxu0
      %v3880 = vpop.f32.mrb[0].mxu0
      %v3881 = vadd.f32 0.0, %v3880
      %v3882 = vpop.f32.mrb[0].mxu0
      %3883 = vmatprep.mubr.bf16.mxu0 0
      %3884 = vmatmul.mubr.bf16.gmra.mrb[0].mxu0 %v3672
      %v3885 = vpop.f32.mrb[0].mxu0
      %v3886 = vadd.f32 0.0, %v3885
      %v3887 = vpop.f32.mrb[0].mxu0
      %v3888 = vpop.f32.mrb[0].mxu0
      %v3889 = vadd.f32 0.0, %v3888
      %v3890 = vpop.f32.mrb[0].mxu0
      %3891 = vmatprep.mubr.bf16.mxu0 0
      %3892 = vmatmul.mubr.bf16.gmra.mrb[0].mxu0 %v3673
      %v3893 = vpop.f32.mrb[0].mxu0
      %v3894 = vadd.f32 0.0, %v3893
      %v3895 = vpop.f32.mrb[0].mxu0
      %v3896 = vpop.f32.mrb[0].mxu0
      %v3897 = vadd.f32 0.0, %v3896
      %v3898 = vpop.f32.mrb[0].mxu0
      %3899 = vdwg.mxu0
      %v3900 = vadd.f32 %v3594, %v3774
      %v3901 = vadd.f32 %v3595, %v3777
      %v3902 = vadd.f32 %v3596, %v3782
      %v3903 = vadd.f32 %v3597, %v3785
      %v3904 = vadd.f32 %v3598, %v3790
      %v3905 = vadd.f32 %v3599, %v3793
      %v3906 = vadd.f32 %v3600, %v3798
      %v3907 = vadd.f32 %v3601, %v3801
      %v3908 = vadd.f32 %v3602, %v3806
      %v3909 = vadd.f32 %v3603, %v3809
      %v3910 = vadd.f32 %v3604, %v3814
      %v3911 = vadd.f32 %v3605, %v3817
      %v3912 = vadd.f32 %v3606, %v3822
      %v3913 = vadd.f32 %v3607, %v3825
      %v3914 = vadd.f32 %v3608, %v3830
      %v3915 = vadd.f32 %v3609, %v3833
      %v3916 = vadd.f32 %v3610, %v3838
      %v3917 = vadd.f32 %v3611, %v3841
      %v3918 = vadd.f32 %v3612, %v3846
      %v3919 = vadd.f32 %v3613, %v3849
      %v3920 = vadd.f32 %v3614, %v3854
      %v3921 = vadd.f32 %v3615, %v3857
      %v3922 = vadd.f32 %v3616, %v3862
      %v3923 = vadd.f32 %v3617, %v3865
      %v3924 = vadd.f32 %v3618, %v3870
      %v3925 = vadd.f32 %v3619, %v3873
      %v3926 = vadd.f32 %v3620, %v3878
      %v3927 = vadd.f32 %v3621, %v3881
      %v3928 = vadd.f32 %v3622, %v3886
      %v3929 = vadd.f32 %v3623, %v3889
      %v3930 = vadd.f32 %v3624, %v3894
      %v3931 = vadd.f32 %v3625, %v3897
      %v3932 = vld [vmem:[%s2740 + $0x1] sm:$0xff]
      %v3933 = vld [vmem:[%s2740 + $0x9] sm:$0xff]
      %v3934 = vld [vmem:[%s2740 + $0x19] sm:$0xff]
      %v3935 = vld [vmem:[%s2740 + $0x21] sm:$0xff]
      %v3936 = vld [vmem:[%s2740 + $0x31] sm:$0xff]
      %v3937 = vld [vmem:[%s2740 + $0x39] sm:$0xff]
      %v3938 = vld [vmem:[%s2740 + $0x49] sm:$0xff]
      %v3939 = vld [vmem:[%s2740 + $0x51] sm:$0xff]
      %v3940 = vld [vmem:[%s2740 + $0x61] sm:$0xff]
      %v3941 = vld [vmem:[%s2740 + $0x69] sm:$0xff]
      %v3942 = vld [vmem:[%s2740 + $0x79] sm:$0xff]
      %v3943 = vld [vmem:[%s2740 + $0x81] sm:$0xff]
      %v3944 = vld [vmem:[%s2740 + $0x91] sm:$0xff]
      %v3945 = vld [vmem:[%s2740 + $0x99] sm:$0xff]
      %v3946 = vld [vmem:[%s2740 + $0xa9] sm:$0xff]
      %v3947 = vld [vmem:[%s2740 + $0xb1] sm:$0xff]
      %v3948 = vld [vmem:[%s2740 + $0xc1] sm:$0xff]
      %v3949 = vld [vmem:[%s2740 + $0xc9] sm:$0xff]
      %v3950 = vld [vmem:[%s2740 + $0xd9] sm:$0xff]
      %v3951 = vld [vmem:[%s2740 + $0xe1] sm:$0xff]
      %v3952 = vld [vmem:[%s2740 + $0xf1] sm:$0xff]
      %v3953 = vld [vmem:[%s2740 + $0xf9] sm:$0xff]
      %v3954 = vld [vmem:[%s2740 + $0x109] sm:$0xff]
      %v3955 = vld [vmem:[%s2740 + $0x111] sm:$0xff]
      %v3956 = vld [vmem:[%s2740 + $0x121] sm:$0xff]
      %v3957 = vld [vmem:[%s2740 + $0x129] sm:$0xff]
      %v3958 = vld [vmem:[%s2740 + $0x139] sm:$0xff]
      %v3959 = vld [vmem:[%s2740 + $0x141] sm:$0xff]
      %v3960 = vld [vmem:[%s2740 + $0x151] sm:$0xff]
      %v3961 = vld [vmem:[%s2740 + $0x159] sm:$0xff]
      %v3962 = vld [vmem:[%s2740 + $0x169] sm:$0xff]
      %v3963 = vld [vmem:[%s2740 + $0x171] sm:$0xff]
      %v3964 = vpack.c.bf16 %v3933, %v3932
      %v3965 = vpack.c.bf16 %v3935, %v3934
      %v3966 = vpack.c.bf16 %v3937, %v3936
      %v3967 = vpack.c.bf16 %v3939, %v3938
      %v3968 = vpack.c.bf16 %v3941, %v3940
      %v3969 = vpack.c.bf16 %v3943, %v3942
      %v3970 = vpack.c.bf16 %v3945, %v3944
      %v3971 = vpack.c.bf16 %v3947, %v3946
      %v3972 = vpack.c.bf16 %v3949, %v3948
      %v3973 = vpack.c.bf16 %v3951, %v3950
      %v3974 = vpack.c.bf16 %v3953, %v3952
      %v3975 = vpack.c.bf16 %v3955, %v3954
      %v3976 = vpack.c.bf16 %v3957, %v3956
      %v3977 = vpack.c.bf16 %v3959, %v3958
      %v3978 = vpack.c.bf16 %v3961, %v3960
      %v3979 = vpack.c.bf16 %v3963, %v3962
      %s3980 = scalar_lea.vmem %s2, 256
      %v3981 = vld [vmem:[%s3980] sm:$0xf]
      %v3982 = vld [vmem:[%s3980 + $0x4] sm:$0xf]
      %v3983 = vld [vmem:[%s3980 + $0x8] sm:$0xf]
      %v3984 = vld [vmem:[%s3980 + $0xc] sm:$0xf]
      %v3985 = vld [vmem:[%s3980 + $0x10] sm:$0xf]
      %v3986 = vld [vmem:[%s3980 + $0x14] sm:$0xf]
      %v3987 = vld [vmem:[%s3980 + $0x18] sm:$0xf]
      %v3988 = vld [vmem:[%s3980 + $0x1c] sm:$0xf]
      %v3989 = vld [vmem:[%s3980 + $0x20] sm:$0xf]
      %v3990 = vld [vmem:[%s3980 + $0x24] sm:$0xf]
      %v3991 = vld [vmem:[%s3980 + $0x28] sm:$0xf]
      %v3992 = vld [vmem:[%s3980 + $0x2c] sm:$0xf]
      %v3993 = vld [vmem:[%s3980 + $0x30] sm:$0xf]
      %v3994 = vld [vmem:[%s3980 + $0x34] sm:$0xf]
      %v3995 = vld [vmem:[%s3980 + $0x38] sm:$0xf]
      %v3996 = vld [vmem:[%s3980 + $0x3c] sm:$0xf]
      %v4013 = vunpack.c.l.b16 %v3981
      %v4014 = vunpack.c.l.b16 %v3982
      %v4015 = vunpack.c.l.b16 %v3983
      %v4016 = vunpack.c.l.b16 %v3984
      %v4017 = vunpack.c.l.b16 %v3985
      %v4018 = vunpack.c.l.b16 %v3986
      %v4019 = vunpack.c.l.b16 %v3987
      %v4020 = vunpack.c.l.b16 %v3988
      %v4021 = vunpack.c.l.b16 %v3989
      %v4022 = vunpack.c.l.b16 %v3990
      %v4023 = vunpack.c.l.b16 %v3991
      %v4024 = vunpack.c.l.b16 %v3992
      %v4025 = vunpack.c.l.b16 %v3993
      %v4026 = vunpack.c.l.b16 %v3994
      %v4027 = vunpack.c.l.b16 %v3995
      %v4028 = vunpack.c.l.b16 %v3996
      %v4029 = vpack.c.b16 %v4014, %v4013
      %v4030 = vpack.c.b16 %v4016, %v4015
      %v4031 = vpack.c.b16 %v4018, %v4017
      %v4032 = vpack.c.b16 %v4020, %v4019
      %v4033 = vpack.c.b16 %v4022, %v4021
      %v4034 = vpack.c.b16 %v4024, %v4023
      %v4035 = vpack.c.b16 %v4026, %v4025
      %v4036 = vpack.c.b16 %v4028, %v4027
      %4045 = vmatprep.subr.bf16.mxu0 0
      %4046 = vmatpush1.bf16.msra.mxu0 %v4029
      %4047 = vmatprep.subr.bf16.mxu0 0
      %4048 = vmatpush1.bf16.msra.mxu0 %v4030
      %4049 = vmatprep.subr.bf16.mxu0 0
      %4050 = vmatpush1.bf16.msra.mxu0 %v4031
      %4051 = vmatprep.subr.bf16.mxu0 0
      %4052 = vmatpush1.bf16.msra.mxu0 %v4032
      %4053 = vmatprep.subr.bf16.mxu0 0
      %4054 = vmatpush1.bf16.msra.mxu0 %v4033
      %4055 = vmatprep.subr.bf16.mxu0 0
      %4056 = vmatpush1.bf16.msra.mxu0 %v4034
      %4057 = vmatprep.subr.bf16.mxu0 0
      %4058 = vmatpush1.bf16.msra.mxu0 %v4035
      %4059 = vmatprep.subr.bf16.mxu0 0
      %4060 = vmatpush1.bf16.msra.mxu0 %v4036
      %4061 = vmatprep.subr.bf16.mxu0 0
      %4062 = vmatpush1.bf16.msra.mxu0 0
      %4063 = vmatprep.subr.bf16.mxu0 0
      %4064 = vmatpush1.bf16.msra.mxu0 0
      %4065 = vmatprep.subr.bf16.mxu0 0
      %4066 = vmatpush1.bf16.msra.mxu0 0
      %4067 = vmatprep.subr.bf16.mxu0 0
      %4068 = vmatpush1.bf16.msra.mxu0 0
      %4069 = vmatprep.subr.bf16.mxu0 0
      %4070 = vmatpush1.bf16.msra.mxu0 0
      %4071 = vmatprep.subr.bf16.mxu0 0
      %4072 = vmatpush1.bf16.msra.mxu0 0
      %4073 = vmatprep.subr.bf16.mxu0 0
      %4074 = vmatpush1.bf16.msra.mxu0 0
      %4075 = vmatprep.subr.bf16.mxu0 0
      %4076 = vmatpush1.bf16.msra.mxu0 0
      %4077 = vmatprep.mubr.bf16.mxu0 0
      %4078 = vmatmul.mubr.bf16.gmra.mrb[0].mxu0 %v3964
      %v4079 = vpop.f32.mrb[0].mxu0
      %v4080 = vadd.f32 0.0, %v4079
      %v4081 = vpop.f32.mrb[0].mxu0
      %v4082 = vpop.f32.mrb[0].mxu0
      %v4083 = vadd.f32 0.0, %v4082
      %v4084 = vpop.f32.mrb[0].mxu0
      %4085 = vmatprep.mubr.bf16.mxu0 0
      %4086 = vmatmul.mubr.bf16.gmra.mrb[0].mxu0 %v3965
      %v4087 = vpop.f32.mrb[0].mxu0
      %v4088 = vadd.f32 0.0, %v4087
      %v4089 = vpop.f32.mrb[0].mxu0
      %v4090 = vpop.f32.mrb[0].mxu0
      %v4091 = vadd.f32 0.0, %v4090
      %v4092 = vpop.f32.mrb[0].mxu0
      %4093 = vmatprep.mubr.bf16.mxu0 0
      %4094 = vmatmul.mubr.bf16.gmra.mrb[0].mxu0 %v3966
      %v4095 = vpop.f32.mrb[0].mxu0
      %v4096 = vadd.f32 0.0, %v4095
      %v4097 = vpop.f32.mrb[0].mxu0
      %v4098 = vpop.f32.mrb[0].mxu0
      %v4099 = vadd.f32 0.0, %v4098
      %v4100 = vpop.f32.mrb[0].mxu0
      %4101 = vmatprep.mubr.bf16.mxu0 0
      %4102 = vmatmul.mubr.bf16.gmra.mrb[0].mxu0 %v3967
      %v4103 = vpop.f32.mrb[0].mxu0
      %v4104 = vadd.f32 0.0, %v4103
      %v4105 = vpop.f32.mrb[0].mxu0
      %v4106 = vpop.f32.mrb[0].mxu0
      %v4107 = vadd.f32 0.0, %v4106
      %v4108 = vpop.f32.mrb[0].mxu0
      %4109 = vmatprep.mubr.bf16.mxu0 0
      %4110 = vmatmul.mubr.bf16.gmra.mrb[0].mxu0 %v3968
      %v4111 = vpop.f32.mrb[0].mxu0
      %v4112 = vadd.f32 0.0, %v4111
      %v4113 = vpop.f32.mrb[0].mxu0
      %v4114 = vpop.f32.mrb[0].mxu0
      %v4115 = vadd.f32 0.0, %v4114
      %v4116 = vpop.f32.mrb[0].mxu0
      %4117 = vmatprep.mubr.bf16.mxu0 0
      %4118 = vmatmul.mubr.bf16.gmra.mrb[0].mxu0 %v3969
      %v4119 = vpop.f32.mrb[0].mxu0
      %v4120 = vadd.f32 0.0, %v4119
      %v4121 = vpop.f32.mrb[0].mxu0
      %v4122 = vpop.f32.mrb[0].mxu0
      %v4123 = vadd.f32 0.0, %v4122
      %v4124 = vpop.f32.mrb[0].mxu0
      %4125 = vmatprep.mubr.bf16.mxu0 0
      %4126 = vmatmul.mubr.bf16.gmra.mrb[0].mxu0 %v3970
      %v4127 = vpop.f32.mrb[0].mxu0
      %v4128 = vadd.f32 0.0, %v4127
      %v4129 = vpop.f32.mrb[0].mxu0
      %v4130 = vpop.f32.mrb[0].mxu0
      %v4131 = vadd.f32 0.0, %v4130
      %v4132 = vpop.f32.mrb[0].mxu0
      %4133 = vmatprep.mubr.bf16.mxu0 0
      %4134 = vmatmul.mubr.bf16.gmra.mrb[0].mxu0 %v3971
      %v4135 = vpop.f32.mrb[0].mxu0
      %v4136 = vadd.f32 0.0, %v4135
      %v4137 = vpop.f32.mrb[0].mxu0
      %v4138 = vpop.f32.mrb[0].mxu0
      %v4139 = vadd.f32 0.0, %v4138
      %v4140 = vpop.f32.mrb[0].mxu0
      %4141 = vmatprep.mubr.bf16.mxu0 0
      %4142 = vmatmul.mubr.bf16.gmra.mrb[0].mxu0 %v3972
      %v4143 = vpop.f32.mrb[0].mxu0
      %v4144 = vadd.f32 0.0, %v4143
      %v4145 = vpop.f32.mrb[0].mxu0
      %v4146 = vpop.f32.mrb[0].mxu0
      %v4147 = vadd.f32 0.0, %v4146
      %v4148 = vpop.f32.mrb[0].mxu0
      %4149 = vmatprep.mubr.bf16.mxu0 0
      %4150 = vmatmul.mubr.bf16.gmra.mrb[0].mxu0 %v3973
      %v4151 = vpop.f32.mrb[0].mxu0
      %v4152 = vadd.f32 0.0, %v4151
      %v4153 = vpop.f32.mrb[0].mxu0
      %v4154 = vpop.f32.mrb[0].mxu0
      %v4155 = vadd.f32 0.0, %v4154
      %v4156 = vpop.f32.mrb[0].mxu0
      %4157 = vmatprep.mubr.bf16.mxu0 0
      %4158 = vmatmul.mubr.bf16.gmra.mrb[0].mxu0 %v3974
      %v4159 = vpop.f32.mrb[0].mxu0
      %v4160 = vadd.f32 0.0, %v4159
      %v4161 = vpop.f32.mrb[0].mxu0
      %v4162 = vpop.f32.mrb[0].mxu0
      %v4163 = vadd.f32 0.0, %v4162
      %v4164 = vpop.f32.mrb[0].mxu0
      %4165 = vmatprep.mubr.bf16.mxu0 0
      %4166 = vmatmul.mubr.bf16.gmra.mrb[0].mxu0 %v3975
      %v4167 = vpop.f32.mrb[0].mxu0
      %v4168 = vadd.f32 0.0, %v4167
      %v4169 = vpop.f32.mrb[0].mxu0
      %v4170 = vpop.f32.mrb[0].mxu0
      %v4171 = vadd.f32 0.0, %v4170
      %v4172 = vpop.f32.mrb[0].mxu0
      %4173 = vmatprep.mubr.bf16.mxu0 0
      %4174 = vmatmul.mubr.bf16.gmra.mrb[0].mxu0 %v3976
      %v4175 = vpop.f32.mrb[0].mxu0
      %v4176 = vadd.f32 0.0, %v4175
      %v4177 = vpop.f32.mrb[0].mxu0
      %v4178 = vpop.f32.mrb[0].mxu0
      %v4179 = vadd.f32 0.0, %v4178
      %v4180 = vpop.f32.mrb[0].mxu0
      %4181 = vmatprep.mubr.bf16.mxu0 0
      %4182 = vmatmul.mubr.bf16.gmra.mrb[0].mxu0 %v3977
      %v4183 = vpop.f32.mrb[0].mxu0
      %v4184 = vadd.f32 0.0, %v4183
      %v4185 = vpop.f32.mrb[0].mxu0
      %v4186 = vpop.f32.mrb[0].mxu0
      %v4187 = vadd.f32 0.0, %v4186
      %v4188 = vpop.f32.mrb[0].mxu0
      %4189 = vmatprep.mubr.bf16.mxu0 0
      %4190 = vmatmul.mubr.bf16.gmra.mrb[0].mxu0 %v3978
      %v4191 = vpop.f32.mrb[0].mxu0
      %v4192 = vadd.f32 0.0, %v4191
      %v4193 = vpop.f32.mrb[0].mxu0
      %v4194 = vpop.f32.mrb[0].mxu0
      %v4195 = vadd.f32 0.0, %v4194
      %v4196 = vpop.f32.mrb[0].mxu0
      %4197 = vmatprep.mubr.bf16.mxu0 0
      %4198 = vmatmul.mubr.bf16.gmra.mrb[0].mxu0 %v3979
      %v4199 = vpop.f32.mrb[0].mxu0
      %v4200 = vadd.f32 0.0, %v4199
      %v4201 = vpop.f32.mrb[0].mxu0
      %v4202 = vpop.f32.mrb[0].mxu0
      %v4203 = vadd.f32 0.0, %v4202
      %v4204 = vpop.f32.mrb[0].mxu0
      %4205 = vdwg.mxu0
      %v4206 = vadd.f32 %v3900, %v4080
      %v4207 = vadd.f32 %v3901, %v4083
      %v4208 = vadd.f32 %v3902, %v4088
      %v4209 = vadd.f32 %v3903, %v4091
      %v4210 = vadd.f32 %v3904, %v4096
      %v4211 = vadd.f32 %v3905, %v4099
      %v4212 = vadd.f32 %v3906, %v4104
      %v4213 = vadd.f32 %v3907, %v4107
      %v4214 = vadd.f32 %v3908, %v4112
      %v4215 = vadd.f32 %v3909, %v4115
      %v4216 = vadd.f32 %v3910, %v4120
      %v4217 = vadd.f32 %v3911, %v4123
      %v4218 = vadd.f32 %v3912, %v4128
      %v4219 = vadd.f32 %v3913, %v4131
      %v4220 = vadd.f32 %v3914, %v4136
      %v4221 = vadd.f32 %v3915, %v4139
      %v4222 = vadd.f32 %v3916, %v4144
      %v4223 = vadd.f32 %v3917, %v4147
      %v4224 = vadd.f32 %v3918, %v4152
      %v4225 = vadd.f32 %v3919, %v4155
      %v4226 = vadd.f32 %v3920, %v4160
      %v4227 = vadd.f32 %v3921, %v4163
      %v4228 = vadd.f32 %v3922, %v4168
      %v4229 = vadd.f32 %v3923, %v4171
      %v4230 = vadd.f32 %v3924, %v4176
      %v4231 = vadd.f32 %v3925, %v4179
      %v4232 = vadd.f32 %v3926, %v4184
      %v4233 = vadd.f32 %v3927, %v4187
      %v4234 = vadd.f32 %v3928, %v4192
      %v4235 = vadd.f32 %v3929, %v4195
      %v4236 = vadd.f32 %v3930, %v4200
      %v4237 = vadd.f32 %v3931, %v4203
      %v4238 = vld [vmem:[%s2740 + $0x2] sm:$0xff]
      %v4239 = vld [vmem:[%s2740 + $0xa] sm:$0xff]
      %v4240 = vld [vmem:[%s2740 + $0x1a] sm:$0xff]
      %v4241 = vld [vmem:[%s2740 + $0x22] sm:$0xff]
      %v4242 = vld [vmem:[%s2740 + $0x32] sm:$0xff]
      %v4243 = vld [vmem:[%s2740 + $0x3a] sm:$0xff]
      %v4244 = vld [vmem:[%s2740 + $0x4a] sm:$0xff]
      %v4245 = vld [vmem:[%s2740 + $0x52] sm:$0xff]
      %v4246 = vld [vmem:[%s2740 + $0x62] sm:$0xff]
      %v4247 = vld [vmem:[%s2740 + $0x6a] sm:$0xff]
      %v4248 = vld [vmem:[%s2740 + $0x7a] sm:$0xff]
      %v4249 = vld [vmem:[%s2740 + $0x82] sm:$0xff]
      %v4250 = vld [vmem:[%s2740 + $0x92] sm:$0xff]
      %v4251 = vld [vmem:[%s2740 + $0x9a] sm:$0xff]
      %v4252 = vld [vmem:[%s2740 + $0xaa] sm:$0xff]
      %v4253 = vld [vmem:[%s2740 + $0xb2] sm:$0xff]
      %v4254 = vld [vmem:[%s2740 + $0xc2] sm:$0xff]
      %v4255 = vld [vmem:[%s2740 + $0xca] sm:$0xff]
      %v4256 = vld [vmem:[%s2740 + $0xda] sm:$0xff]
      %v4257 = vld [vmem:[%s2740 + $0xe2] sm:$0xff]
      %v4258 = vld [vmem:[%s2740 + $0xf2] sm:$0xff]
      %v4259 = vld [vmem:[%s2740 + $0xfa] sm:$0xff]
      %v4260 = vld [vmem:[%s2740 + $0x10a] sm:$0xff]
      %v4261 = vld [vmem:[%s2740 + $0x112] sm:$0xff]
      %v4262 = vld [vmem:[%s2740 + $0x122] sm:$0xff]
      %v4263 = vld [vmem:[%s2740 + $0x12a] sm:$0xff]
      %v4264 = vld [vmem:[%s2740 + $0x13a] sm:$0xff]
      %v4265 = vld [vmem:[%s2740 + $0x142] sm:$0xff]
      %v4266 = vld [vmem:[%s2740 + $0x152] sm:$0xff]
      %v4267 = vld [vmem:[%s2740 + $0x15a] sm:$0xff]
      %v4268 = vld [vmem:[%s2740 + $0x16a] sm:$0xff]
      %v4269 = vld [vmem:[%s2740 + $0x172] sm:$0xff]
      %v4270 = vpack.c.bf16 %v4239, %v4238
      %v4271 = vpack.c.bf16 %v4241, %v4240
      %v4272 = vpack.c.bf16 %v4243, %v4242
      %v4273 = vpack.c.bf16 %v4245, %v4244
      %v4274 = vpack.c.bf16 %v4247, %v4246
      %v4275 = vpack.c.bf16 %v4249, %v4248
      %v4276 = vpack.c.bf16 %v4251, %v4250
      %v4277 = vpack.c.bf16 %v4253, %v4252
      %v4278 = vpack.c.bf16 %v4255, %v4254
      %v4279 = vpack.c.bf16 %v4257, %v4256
      %v4280 = vpack.c.bf16 %v4259, %v4258
      %v4281 = vpack.c.bf16 %v4261, %v4260
      %v4282 = vpack.c.bf16 %v4263, %v4262
      %v4283 = vpack.c.bf16 %v4265, %v4264
      %v4284 = vpack.c.bf16 %v4267, %v4266
      %v4285 = vpack.c.bf16 %v4269, %v4268
      %s4286 = scalar_lea.vmem %s2, 320
      %v4287 = vld [vmem:[%s4286] sm:$0xf]
      %v4288 = vld [vmem:[%s4286 + $0x4] sm:$0xf]
      %v4289 = vld [vmem:[%s4286 + $0x8] sm:$0xf]
      %v4290 = vld [vmem:[%s4286 + $0xc] sm:$0xf]
      %v4291 = vld [vmem:[%s4286 + $0x10] sm:$0xf]
      %v4292 = vld [vmem:[%s4286 + $0x14] sm:$0xf]
      %v4293 = vld [vmem:[%s4286 + $0x18] sm:$0xf]
      %v4294 = vld [vmem:[%s4286 + $0x1c] sm:$0xf]
      %v4295 = vld [vmem:[%s4286 + $0x20] sm:$0xf]
      %v4296 = vld [vmem:[%s4286 + $0x24] sm:$0xf]
      %v4297 = vld [vmem:[%s4286 + $0x28] sm:$0xf]
      %v4298 = vld [vmem:[%s4286 + $0x2c] sm:$0xf]
      %v4299 = vld [vmem:[%s4286 + $0x30] sm:$0xf]
      %v4300 = vld [vmem:[%s4286 + $0x34] sm:$0xf]
      %v4301 = vld [vmem:[%s4286 + $0x38] sm:$0xf]
      %v4302 = vld [vmem:[%s4286 + $0x3c] sm:$0xf]
      %v4319 = vunpack.c.l.b16 %v4287
      %v4320 = vunpack.c.l.b16 %v4288
      %v4321 = vunpack.c.l.b16 %v4289
      %v4322 = vunpack.c.l.b16 %v4290
      %v4323 = vunpack.c.l.b16 %v4291
      %v4324 = vunpack.c.l.b16 %v4292
      %v4325 = vunpack.c.l.b16 %v4293
      %v4326 = vunpack.c.l.b16 %v4294
      %v4327 = vunpack.c.l.b16 %v4295
      %v4328 = vunpack.c.l.b16 %v4296
      %v4329 = vunpack.c.l.b16 %v4297
      %v4330 = vunpack.c.l.b16 %v4298
      %v4331 = vunpack.c.l.b16 %v4299
      %v4332 = vunpack.c.l.b16 %v4300
      %v4333 = vunpack.c.l.b16 %v4301
      %v4334 = vunpack.c.l.b16 %v4302
      %v4335 = vpack.c.b16 %v4320, %v4319
      %v4336 = vpack.c.b16 %v4322, %v4321
      %v4337 = vpack.c.b16 %v4324, %v4323
      %v4338 = vpack.c.b16 %v4326, %v4325
      %v4339 = vpack.c.b16 %v4328, %v4327
      %v4340 = vpack.c.b16 %v4330, %v4329
      %v4341 = vpack.c.b16 %v4332, %v4331
      %v4342 = vpack.c.b16 %v4334, %v4333
      %4351 = vmatprep.subr.bf16.mxu0 0
      %4352 = vmatpush1.bf16.msra.mxu0 %v4335
      %4353 = vmatprep.subr.bf16.mxu0 0
      %4354 = vmatpush1.bf16.msra.mxu0 %v4336
      %4355 = vmatprep.subr.bf16.mxu0 0
      %4356 = vmatpush1.bf16.msra.mxu0 %v4337
      %4357 = vmatprep.subr.bf16.mxu0 0
      %4358 = vmatpush1.bf16.msra.mxu0 %v4338
      %4359 = vmatprep.subr.bf16.mxu0 0
      %4360 = vmatpush1.bf16.msra.mxu0 %v4339
      %4361 = vmatprep.subr.bf16.mxu0 0
      %4362 = vmatpush1.bf16.msra.mxu0 %v4340
      %4363 = vmatprep.subr.bf16.mxu0 0
      %4364 = vmatpush1.bf16.msra.mxu0 %v4341
      %4365 = vmatprep.subr.bf16.mxu0 0
      %4366 = vmatpush1.bf16.msra.mxu0 %v4342
      %4367 = vmatprep.subr.bf16.mxu0 0
      %4368 = vmatpush1.bf16.msra.mxu0 0
      %4369 = vmatprep.subr.bf16.mxu0 0
      %4370 = vmatpush1.bf16.msra.mxu0 0
      %4371 = vmatprep.subr.bf16.mxu0 0
      %4372 = vmatpush1.bf16.msra.mxu0 0
      %4373 = vmatprep.subr.bf16.mxu0 0
      %4374 = vmatpush1.bf16.msra.mxu0 0
      %4375 = vmatprep.subr.bf16.mxu0 0
      %4376 = vmatpush1.bf16.msra.mxu0 0
      %4377 = vmatprep.subr.bf16.mxu0 0
      %4378 = vmatpush1.bf16.msra.mxu0 0
      %4379 = vmatprep.subr.bf16.mxu0 0
      %4380 = vmatpush1.bf16.msra.mxu0 0
      %4381 = vmatprep.subr.bf16.mxu0 0
      %4382 = vmatpush1.bf16.msra.mxu0 0
      %4383 = vmatprep.mubr.bf16.mxu0 0
      %4384 = vmatmul.mubr.bf16.gmra.mrb[0].mxu0 %v4270
      %v4385 = vpop.f32.mrb[0].mxu0
      %v4386 = vadd.f32 0.0, %v4385
      %v4387 = vpop.f32.mrb[0].mxu0
      %v4388 = vpop.f32.mrb[0].mxu0
      %v4389 = vadd.f32 0.0, %v4388
      %v4390 = vpop.f32.mrb[0].mxu0
      %4391 = vmatprep.mubr.bf16.mxu0 0
      %4392 = vmatmul.mubr.bf16.gmra.mrb[0].mxu0 %v4271
      %v4393 = vpop.f32.mrb[0].mxu0
      %v4394 = vadd.f32 0.0, %v4393
      %v4395 = vpop.f32.mrb[0].mxu0
      %v4396 = vpop.f32.mrb[0].mxu0
      %v4397 = vadd.f32 0.0, %v4396
      %v4398 = vpop.f32.mrb[0].mxu0
      %4399 = vmatprep.mubr.bf16.mxu0 0
      %4400 = vmatmul.mubr.bf16.gmra.mrb[0].mxu0 %v4272
      %v4401 = vpop.f32.mrb[0].mxu0
      %v4402 = vadd.f32 0.0, %v4401
      %v4403 = vpop.f32.mrb[0].mxu0
      %v4404 = vpop.f32.mrb[0].mxu0
      %v4405 = vadd.f32 0.0, %v4404
      %v4406 = vpop.f32.mrb[0].mxu0
      %4407 = vmatprep.mubr.bf16.mxu0 0
      %4408 = vmatmul.mubr.bf16.gmra.mrb[0].mxu0 %v4273
      %v4409 = vpop.f32.mrb[0].mxu0
      %v4410 = vadd.f32 0.0, %v4409
      %v4411 = vpop.f32.mrb[0].mxu0
      %v4412 = vpop.f32.mrb[0].mxu0
      %v4413 = vadd.f32 0.0, %v4412
      %v4414 = vpop.f32.mrb[0].mxu0
      %4415 = vmatprep.mubr.bf16.mxu0 0
      %4416 = vmatmul.mubr.bf16.gmra.mrb[0].mxu0 %v4274
      %v4417 = vpop.f32.mrb[0].mxu0
      %v4418 = vadd.f32 0.0, %v4417
      %v4419 = vpop.f32.mrb[0].mxu0
      %v4420 = vpop.f32.mrb[0].mxu0
      %v4421 = vadd.f32 0.0, %v4420
      %v4422 = vpop.f32.mrb[0].mxu0
      %4423 = vmatprep.mubr.bf16.mxu0 0
      %4424 = vmatmul.mubr.bf16.gmra.mrb[0].mxu0 %v4275
      %v4425 = vpop.f32.mrb[0].mxu0
      %v4426 = vadd.f32 0.0, %v4425
      %v4427 = vpop.f32.mrb[0].mxu0
      %v4428 = vpop.f32.mrb[0].mxu0
      %v4429 = vadd.f32 0.0, %v4428
      %v4430 = vpop.f32.mrb[0].mxu0
      %4431 = vmatprep.mubr.bf16.mxu0 0
      %4432 = vmatmul.mubr.bf16.gmra.mrb[0].mxu0 %v4276
      %v4433 = vpop.f32.mrb[0].mxu0
      %v4434 = vadd.f32 0.0, %v4433
      %v4435 = vpop.f32.mrb[0].mxu0
      %v4436 = vpop.f32.mrb[0].mxu0
      %v4437 = vadd.f32 0.0, %v4436
      %v4438 = vpop.f32.mrb[0].mxu0
      %4439 = vmatprep.mubr.bf16.mxu0 0
      %4440 = vmatmul.mubr.bf16.gmra.mrb[0].mxu0 %v4277
      %v4441 = vpop.f32.mrb[0].mxu0
      %v4442 = vadd.f32 0.0, %v4441
      %v4443 = vpop.f32.mrb[0].mxu0
      %v4444 = vpop.f32.mrb[0].mxu0
      %v4445 = vadd.f32 0.0, %v4444
      %v4446 = vpop.f32.mrb[0].mxu0
      %4447 = vmatprep.mubr.bf16.mxu0 0
      %4448 = vmatmul.mubr.bf16.gmra.mrb[0].mxu0 %v4278
      %v4449 = vpop.f32.mrb[0].mxu0
      %v4450 = vadd.f32 0.0, %v4449
      %v4451 = vpop.f32.mrb[0].mxu0
      %v4452 = vpop.f32.mrb[0].mxu0
      %v4453 = vadd.f32 0.0, %v4452
      %v4454 = vpop.f32.mrb[0].mxu0
      %4455 = vmatprep.mubr.bf16.mxu0 0
      %4456 = vmatmul.mubr.bf16.gmra.mrb[0].mxu0 %v4279
      %v4457 = vpop.f32.mrb[0].mxu0
      %v4458 = vadd.f32 0.0, %v4457
      %v4459 = vpop.f32.mrb[0].mxu0
      %v4460 = vpop.f32.mrb[0].mxu0
      %v4461 = vadd.f32 0.0, %v4460
      %v4462 = vpop.f32.mrb[0].mxu0
      %4463 = vmatprep.mubr.bf16.mxu0 0
      %4464 = vmatmul.mubr.bf16.gmra.mrb[0].mxu0 %v4280
      %v4465 = vpop.f32.mrb[0].mxu0
      %v4466 = vadd.f32 0.0, %v4465
      %v4467 = vpop.f32.mrb[0].mxu0
      %v4468 = vpop.f32.mrb[0].mxu0
      %v4469 = vadd.f32 0.0, %v4468
      %v4470 = vpop.f32.mrb[0].mxu0
      %4471 = vmatprep.mubr.bf16.mxu0 0
      %4472 = vmatmul.mubr.bf16.gmra.mrb[0].mxu0 %v4281
      %v4473 = vpop.f32.mrb[0].mxu0
      %v4474 = vadd.f32 0.0, %v4473
      %v4475 = vpop.f32.mrb[0].mxu0
      %v4476 = vpop.f32.mrb[0].mxu0
      %v4477 = vadd.f32 0.0, %v4476
      %v4478 = vpop.f32.mrb[0].mxu0
      %4479 = vmatprep.mubr.bf16.mxu0 0
      %4480 = vmatmul.mubr.bf16.gmra.mrb[0].mxu0 %v4282
      %v4481 = vpop.f32.mrb[0].mxu0
      %v4482 = vadd.f32 0.0, %v4481
      %v4483 = vpop.f32.mrb[0].mxu0
      %v4484 = vpop.f32.mrb[0].mxu0
      %v4485 = vadd.f32 0.0, %v4484
      %v4486 = vpop.f32.mrb[0].mxu0
      %4487 = vmatprep.mubr.bf16.mxu0 0
      %4488 = vmatmul.mubr.bf16.gmra.mrb[0].mxu0 %v4283
      %v4489 = vpop.f32.mrb[0].mxu0
      %v4490 = vadd.f32 0.0, %v4489
      %v4491 = vpop.f32.mrb[0].mxu0
      %v4492 = vpop.f32.mrb[0].mxu0
      %v4493 = vadd.f32 0.0, %v4492
      %v4494 = vpop.f32.mrb[0].mxu0
      %4495 = vmatprep.mubr.bf16.mxu0 0
      %4496 = vmatmul.mubr.bf16.gmra.mrb[0].mxu0 %v4284
      %v4497 = vpop.f32.mrb[0].mxu0
      %v4498 = vadd.f32 0.0, %v4497
      %v4499 = vpop.f32.mrb[0].mxu0
      %v4500 = vpop.f32.mrb[0].mxu0
      %v4501 = vadd.f32 0.0, %v4500
      %v4502 = vpop.f32.mrb[0].mxu0
      %4503 = vmatprep.mubr.bf16.mxu0 0
      %4504 = vmatmul.mubr.bf16.gmra.mrb[0].mxu0 %v4285
      %v4505 = vpop.f32.mrb[0].mxu0
      %v4506 = vadd.f32 0.0, %v4505
      %v4507 = vpop.f32.mrb[0].mxu0
      %v4508 = vpop.f32.mrb[0].mxu0
      %v4509 = vadd.f32 0.0, %v4508
      %v4510 = vpop.f32.mrb[0].mxu0
      %4511 = vdwg.mxu0
      %v4512 = vadd.f32 %v4206, %v4386
      %v4513 = vadd.f32 %v4207, %v4389
      %v4514 = vadd.f32 %v4208, %v4394
      %v4515 = vadd.f32 %v4209, %v4397
      %v4516 = vadd.f32 %v4210, %v4402
      %v4517 = vadd.f32 %v4211, %v4405
      %v4518 = vadd.f32 %v4212, %v4410
      %v4519 = vadd.f32 %v4213, %v4413
      %v4520 = vadd.f32 %v4214, %v4418
      %v4521 = vadd.f32 %v4215, %v4421
      %v4522 = vadd.f32 %v4216, %v4426
      %v4523 = vadd.f32 %v4217, %v4429
      %v4524 = vadd.f32 %v4218, %v4434
      %v4525 = vadd.f32 %v4219, %v4437
      %v4526 = vadd.f32 %v4220, %v4442
      %v4527 = vadd.f32 %v4221, %v4445
      %v4528 = vadd.f32 %v4222, %v4450
      %v4529 = vadd.f32 %v4223, %v4453
      %v4530 = vadd.f32 %v4224, %v4458
      %v4531 = vadd.f32 %v4225, %v4461
      %v4532 = vadd.f32 %v4226, %v4466
      %v4533 = vadd.f32 %v4227, %v4469
      %v4534 = vadd.f32 %v4228, %v4474
      %v4535 = vadd.f32 %v4229, %v4477
      %v4536 = vadd.f32 %v4230, %v4482
      %v4537 = vadd.f32 %v4231, %v4485
      %v4538 = vadd.f32 %v4232, %v4490
      %v4539 = vadd.f32 %v4233, %v4493
      %v4540 = vadd.f32 %v4234, %v4498
      %v4541 = vadd.f32 %v4235, %v4501
      %v4542 = vadd.f32 %v4236, %v4506
      %v4543 = vadd.f32 %v4237, %v4509
      %s4544 = scalar_lea.vmem [#allocation2], 48
      %v4545 = vld [vmem:[%s4544] sm:$0xff]
      %v4546 = vld [vmem:[%s4544 + $0x8] sm:$0xff]
      %v4547 = vld [vmem:[%s4544 + $0x18] sm:$0xff]
      %v4548 = vld [vmem:[%s4544 + $0x20] sm:$0xff]
      %v4549 = vld [vmem:[%s4544 + $0x30] sm:$0xff]
      %v4550 = vld [vmem:[%s4544 + $0x38] sm:$0xff]
      %v4551 = vld [vmem:[%s4544 + $0x48] sm:$0xff]
      %v4552 = vld [vmem:[%s4544 + $0x50] sm:$0xff]
      %v4553 = vld [vmem:[%s4544 + $0x60] sm:$0xff]
      %v4554 = vld [vmem:[%s4544 + $0x68] sm:$0xff]
      %v4555 = vld [vmem:[%s4544 + $0x78] sm:$0xff]
      %v4556 = vld [vmem:[%s4544 + $0x80] sm:$0xff]
      %v4557 = vld [vmem:[%s4544 + $0x90] sm:$0xff]
      %v4558 = vld [vmem:[%s4544 + $0x98] sm:$0xff]
      %v4559 = vld [vmem:[%s4544 + $0xa8] sm:$0xff]
      %v4560 = vld [vmem:[%s4544 + $0xb0] sm:$0xff]
      %v4561 = vld [vmem:[%s4544 + $0xc0] sm:$0xff]
      %v4562 = vld [vmem:[%s4544 + $0xc8] sm:$0xff]
      %v4563 = vld [vmem:[%s4544 + $0xd8] sm:$0xff]
      %v4564 = vld [vmem:[%s4544 + $0xe0] sm:$0xff]
      %v4565 = vld [vmem:[%s4544 + $0xf0] sm:$0xff]
      %v4566 = vld [vmem:[%s4544 + $0xf8] sm:$0xff]
      %v4567 = vld [vmem:[%s4544 + $0x108] sm:$0xff]
      %v4568 = vld [vmem:[%s4544 + $0x110] sm:$0xff]
      %v4569 = vld [vmem:[%s4544 + $0x120] sm:$0xff]
      %v4570 = vld [vmem:[%s4544 + $0x128] sm:$0xff]
      %v4571 = vld [vmem:[%s4544 + $0x138] sm:$0xff]
      %v4572 = vld [vmem:[%s4544 + $0x140] sm:$0xff]
      %v4573 = vld [vmem:[%s4544 + $0x150] sm:$0xff]
      %v4574 = vld [vmem:[%s4544 + $0x158] sm:$0xff]
      %v4575 = vld [vmem:[%s4544 + $0x168] sm:$0xff]
      %v4576 = vld [vmem:[%s4544 + $0x170] sm:$0xff]
      %v4577 = vpack.c.bf16 %v4546, %v4545
      %v4578 = vpack.c.bf16 %v4548, %v4547
      %v4579 = vpack.c.bf16 %v4550, %v4549
      %v4580 = vpack.c.bf16 %v4552, %v4551
      %v4581 = vpack.c.bf16 %v4554, %v4553
      %v4582 = vpack.c.bf16 %v4556, %v4555
      %v4583 = vpack.c.bf16 %v4558, %v4557
      %v4584 = vpack.c.bf16 %v4560, %v4559
      %v4585 = vpack.c.bf16 %v4562, %v4561
      %v4586 = vpack.c.bf16 %v4564, %v4563
      %v4587 = vpack.c.bf16 %v4566, %v4565
      %v4588 = vpack.c.bf16 %v4568, %v4567
      %v4589 = vpack.c.bf16 %v4570, %v4569
      %v4590 = vpack.c.bf16 %v4572, %v4571
      %v4591 = vpack.c.bf16 %v4574, %v4573
      %v4592 = vpack.c.bf16 %v4576, %v4575
      %s4593 = scalar_lea.vmem %s2, 384
      %v4594 = vld [vmem:[%s4593] sm:$0xf]
      %v4595 = vld [vmem:[%s4593 + $0x4] sm:$0xf]
      %v4596 = vld [vmem:[%s4593 + $0x8] sm:$0xf]
      %v4597 = vld [vmem:[%s4593 + $0xc] sm:$0xf]
      %v4598 = vld [vmem:[%s4593 + $0x10] sm:$0xf]
      %v4599 = vld [vmem:[%s4593 + $0x14] sm:$0xf]
      %v4600 = vld [vmem:[%s4593 + $0x18] sm:$0xf]
      %v4601 = vld [vmem:[%s4593 + $0x1c] sm:$0xf]
      %v4602 = vld [vmem:[%s4593 + $0x20] sm:$0xf]
      %v4603 = vld [vmem:[%s4593 + $0x24] sm:$0xf]
      %v4604 = vld [vmem:[%s4593 + $0x28] sm:$0xf]
      %v4605 = vld [vmem:[%s4593 + $0x2c] sm:$0xf]
      %v4606 = vld [vmem:[%s4593 + $0x30] sm:$0xf]
      %v4607 = vld [vmem:[%s4593 + $0x34] sm:$0xf]
      %v4608 = vld [vmem:[%s4593 + $0x38] sm:$0xf]
      %v4609 = vld [vmem:[%s4593 + $0x3c] sm:$0xf]
      %v4626 = vunpack.c.l.b16 %v4594
      %v4627 = vunpack.c.l.b16 %v4595
      %v4628 = vunpack.c.l.b16 %v4596
      %v4629 = vunpack.c.l.b16 %v4597
      %v4630 = vunpack.c.l.b16 %v4598
      %v4631 = vunpack.c.l.b16 %v4599
      %v4632 = vunpack.c.l.b16 %v4600
      %v4633 = vunpack.c.l.b16 %v4601
      %v4634 = vunpack.c.l.b16 %v4602
      %v4635 = vunpack.c.l.b16 %v4603
      %v4636 = vunpack.c.l.b16 %v4604
      %v4637 = vunpack.c.l.b16 %v4605
      %v4638 = vunpack.c.l.b16 %v4606
      %v4639 = vunpack.c.l.b16 %v4607
      %v4640 = vunpack.c.l.b16 %v4608
      %v4641 = vunpack.c.l.b16 %v4609
      %v4642 = vpack.c.b16 %v4627, %v4626
      %v4643 = vpack.c.b16 %v4629, %v4628
      %v4644 = vpack.c.b16 %v4631, %v4630
      %v4645 = vpack.c.b16 %v4633, %v4632
      %v4646 = vpack.c.b16 %v4635, %v4634
      %v4647 = vpack.c.b16 %v4637, %v4636
      %v4648 = vpack.c.b16 %v4639, %v4638
      %v4649 = vpack.c.b16 %v4641, %v4640
      %4658 = vmatprep.subr.bf16.mxu0 0
      %4659 = vmatpush1.bf16.msra.mxu0 %v4642
      %4660 = vmatprep.subr.bf16.mxu0 0
      %4661 = vmatpush1.bf16.msra.mxu0 %v4643
      %4662 = vmatprep.subr.bf16.mxu0 0
      %4663 = vmatpush1.bf16.msra.mxu0 %v4644
      %4664 = vmatprep.subr.bf16.mxu0 0
      %4665 = vmatpush1.bf16.msra.mxu0 %v4645
      %4666 = vmatprep.subr.bf16.mxu0 0
      %4667 = vmatpush1.bf16.msra.mxu0 %v4646
      %4668 = vmatprep.subr.bf16.mxu0 0
      %4669 = vmatpush1.bf16.msra.mxu0 %v4647
      %4670 = vmatprep.subr.bf16.mxu0 0
      %4671 = vmatpush1.bf16.msra.mxu0 %v4648
      %4672 = vmatprep.subr.bf16.mxu0 0
      %4673 = vmatpush1.bf16.msra.mxu0 %v4649
      %4674 = vmatprep.subr.bf16.mxu0 0
      %4675 = vmatpush1.bf16.msra.mxu0 0
      %4676 = vmatprep.subr.bf16.mxu0 0
      %4677 = vmatpush1.bf16.msra.mxu0 0
      %4678 = vmatprep.subr.bf16.mxu0 0
      %4679 = vmatpush1.bf16.msra.mxu0 0
      %4680 = vmatprep.subr.bf16.mxu0 0
      %4681 = vmatpush1.bf16.msra.mxu0 0
      %4682 = vmatprep.subr.bf16.mxu0 0
      %4683 = vmatpush1.bf16.msra.mxu0 0
      %4684 = vmatprep.subr.bf16.mxu0 0
      %4685 = vmatpush1.bf16.msra.mxu0 0
      %4686 = vmatprep.subr.bf16.mxu0 0
      %4687 = vmatpush1.bf16.msra.mxu0 0
      %4688 = vmatprep.subr.bf16.mxu0 0
      %4689 = vmatpush1.bf16.msra.mxu0 0
      %4690 = vmatprep.mubr.bf16.mxu0 0
      %4691 = vmatmul.mubr.bf16.gmra.mrb[0].mxu0 %v4577
      %v4692 = vpop.f32.mrb[0].mxu0
      %v4693 = vadd.f32 0.0, %v4692
      %v4694 = vpop.f32.mrb[0].mxu0
      %v4695 = vpop.f32.mrb[0].mxu0
      %v4696 = vadd.f32 0.0, %v4695
      %v4697 = vpop.f32.mrb[0].mxu0
      %4698 = vmatprep.mubr.bf16.mxu0 0
      %4699 = vmatmul.mubr.bf16.gmra.mrb[0].mxu0 %v4578
      %v4700 = vpop.f32.mrb[0].mxu0
      %v4701 = vadd.f32 0.0, %v4700
      %v4702 = vpop.f32.mrb[0].mxu0
      %v4703 = vpop.f32.mrb[0].mxu0
      %v4704 = vadd.f32 0.0, %v4703
      %v4705 = vpop.f32.mrb[0].mxu0
      %4706 = vmatprep.mubr.bf16.mxu0 0
      %4707 = vmatmul.mubr.bf16.gmra.mrb[0].mxu0 %v4579
      %v4708 = vpop.f32.mrb[0].mxu0
      %v4709 = vadd.f32 0.0, %v4708
      %v4710 = vpop.f32.mrb[0].mxu0
      %v4711 = vpop.f32.mrb[0].mxu0
      %v4712 = vadd.f32 0.0, %v4711
      %v4713 = vpop.f32.mrb[0].mxu0
      %4714 = vmatprep.mubr.bf16.mxu0 0
      %4715 = vmatmul.mubr.bf16.gmra.mrb[0].mxu0 %v4580
      %v4716 = vpop.f32.mrb[0].mxu0
      %v4717 = vadd.f32 0.0, %v4716
      %v4718 = vpop.f32.mrb[0].mxu0
      %v4719 = vpop.f32.mrb[0].mxu0
      %v4720 = vadd.f32 0.0, %v4719
      %v4721 = vpop.f32.mrb[0].mxu0
      %4722 = vmatprep.mubr.bf16.mxu0 0
      %4723 = vmatmul.mubr.bf16.gmra.mrb[0].mxu0 %v4581
      %v4724 = vpop.f32.mrb[0].mxu0
      %v4725 = vadd.f32 0.0, %v4724
      %v4726 = vpop.f32.mrb[0].mxu0
      %v4727 = vpop.f32.mrb[0].mxu0
      %v4728 = vadd.f32 0.0, %v4727
      %v4729 = vpop.f32.mrb[0].mxu0
      %4730 = vmatprep.mubr.bf16.mxu0 0
      %4731 = vmatmul.mubr.bf16.gmra.mrb[0].mxu0 %v4582
      %v4732 = vpop.f32.mrb[0].mxu0
      %v4733 = vadd.f32 0.0, %v4732
      %v4734 = vpop.f32.mrb[0].mxu0
      %v4735 = vpop.f32.mrb[0].mxu0
      %v4736 = vadd.f32 0.0, %v4735
      %v4737 = vpop.f32.mrb[0].mxu0
      %4738 = vmatprep.mubr.bf16.mxu0 0
      %4739 = vmatmul.mubr.bf16.gmra.mrb[0].mxu0 %v4583
      %v4740 = vpop.f32.mrb[0].mxu0
      %v4741 = vadd.f32 0.0, %v4740
      %v4742 = vpop.f32.mrb[0].mxu0
      %v4743 = vpop.f32.mrb[0].mxu0
      %v4744 = vadd.f32 0.0, %v4743
      %v4745 = vpop.f32.mrb[0].mxu0
      %4746 = vmatprep.mubr.bf16.mxu0 0
      %4747 = vmatmul.mubr.bf16.gmra.mrb[0].mxu0 %v4584
      %v4748 = vpop.f32.mrb[0].mxu0
      %v4749 = vadd.f32 0.0, %v4748
      %v4750 = vpop.f32.mrb[0].mxu0
      %v4751 = vpop.f32.mrb[0].mxu0
      %v4752 = vadd.f32 0.0, %v4751
      %v4753 = vpop.f32.mrb[0].mxu0
      %4754 = vmatprep.mubr.bf16.mxu0 0
      %4755 = vmatmul.mubr.bf16.gmra.mrb[0].mxu0 %v4585
      %v4756 = vpop.f32.mrb[0].mxu0
      %v4757 = vadd.f32 0.0, %v4756
      %v4758 = vpop.f32.mrb[0].mxu0
      %v4759 = vpop.f32.mrb[0].mxu0
      %v4760 = vadd.f32 0.0, %v4759
      %v4761 = vpop.f32.mrb[0].mxu0
      %4762 = vmatprep.mubr.bf16.mxu0 0
      %4763 = vmatmul.mubr.bf16.gmra.mrb[0].mxu0 %v4586
      %v4764 = vpop.f32.mrb[0].mxu0
      %v4765 = vadd.f32 0.0, %v4764
      %v4766 = vpop.f32.mrb[0].mxu0
      %v4767 = vpop.f32.mrb[0].mxu0
      %v4768 = vadd.f32 0.0, %v4767
      %v4769 = vpop.f32.mrb[0].mxu0
      %4770 = vmatprep.mubr.bf16.mxu0 0
      %4771 = vmatmul.mubr.bf16.gmra.mrb[0].mxu0 %v4587
      %v4772 = vpop.f32.mrb[0].mxu0
      %v4773 = vadd.f32 0.0, %v4772
      %v4774 = vpop.f32.mrb[0].mxu0
      %v4775 = vpop.f32.mrb[0].mxu0
      %v4776 = vadd.f32 0.0, %v4775
      %v4777 = vpop.f32.mrb[0].mxu0
      %4778 = vmatprep.mubr.bf16.mxu0 0
      %4779 = vmatmul.mubr.bf16.gmra.mrb[0].mxu0 %v4588
      %v4780 = vpop.f32.mrb[0].mxu0
      %v4781 = vadd.f32 0.0, %v4780
      %v4782 = vpop.f32.mrb[0].mxu0
      %v4783 = vpop.f32.mrb[0].mxu0
      %v4784 = vadd.f32 0.0, %v4783
      %v4785 = vpop.f32.mrb[0].mxu0
      %4786 = vmatprep.mubr.bf16.mxu0 0
      %4787 = vmatmul.mubr.bf16.gmra.mrb[0].mxu0 %v4589
      %v4788 = vpop.f32.mrb[0].mxu0
      %v4789 = vadd.f32 0.0, %v4788
      %v4790 = vpop.f32.mrb[0].mxu0
      %v4791 = vpop.f32.mrb[0].mxu0
      %v4792 = vadd.f32 0.0, %v4791
      %v4793 = vpop.f32.mrb[0].mxu0
      %4794 = vmatprep.mubr.bf16.mxu0 0
      %4795 = vmatmul.mubr.bf16.gmra.mrb[0].mxu0 %v4590
      %v4796 = vpop.f32.mrb[0].mxu0
      %v4797 = vadd.f32 0.0, %v4796
      %v4798 = vpop.f32.mrb[0].mxu0
      %v4799 = vpop.f32.mrb[0].mxu0
      %v4800 = vadd.f32 0.0, %v4799
      %v4801 = vpop.f32.mrb[0].mxu0
      %4802 = vmatprep.mubr.bf16.mxu0 0
      %4803 = vmatmul.mubr.bf16.gmra.mrb[0].mxu0 %v4591
      %v4804 = vpop.f32.mrb[0].mxu0
      %v4805 = vadd.f32 0.0, %v4804
      %v4806 = vpop.f32.mrb[0].mxu0
      %v4807 = vpop.f32.mrb[0].mxu0
      %v4808 = vadd.f32 0.0, %v4807
      %v4809 = vpop.f32.mrb[0].mxu0
      %4810 = vmatprep.mubr.bf16.mxu0 0
      %4811 = vmatmul.mubr.bf16.gmra.mrb[0].mxu0 %v4592
      %v4812 = vpop.f32.mrb[0].mxu0
      %v4813 = vadd.f32 0.0, %v4812
      %v4814 = vpop.f32.mrb[0].mxu0
      %v4815 = vpop.f32.mrb[0].mxu0
      %v4816 = vadd.f32 0.0, %v4815
      %v4817 = vpop.f32.mrb[0].mxu0
      %4818 = vdwg.mxu0
      %v4819 = vadd.f32 %v4512, %v4693
      %v4820 = vadd.f32 %v4513, %v4696
      %v4821 = vadd.f32 %v4514, %v4701
      %v4822 = vadd.f32 %v4515, %v4704
      %v4823 = vadd.f32 %v4516, %v4709
      %v4824 = vadd.f32 %v4517, %v4712
      %v4825 = vadd.f32 %v4518, %v4717
      %v4826 = vadd.f32 %v4519, %v4720
      %v4827 = vadd.f32 %v4520, %v4725
      %v4828 = vadd.f32 %v4521, %v4728
      %v4829 = vadd.f32 %v4522, %v4733
      %v4830 = vadd.f32 %v4523, %v4736
      %v4831 = vadd.f32 %v4524, %v4741
      %v4832 = vadd.f32 %v4525, %v4744
      %v4833 = vadd.f32 %v4526, %v4749
      %v4834 = vadd.f32 %v4527, %v4752
      %v4835 = vadd.f32 %v4528, %v4757
      %v4836 = vadd.f32 %v4529, %v4760
      %v4837 = vadd.f32 %v4530, %v4765
      %v4838 = vadd.f32 %v4531, %v4768
      %v4839 = vadd.f32 %v4532, %v4773
      %v4840 = vadd.f32 %v4533, %v4776
      %v4841 = vadd.f32 %v4534, %v4781
      %v4842 = vadd.f32 %v4535, %v4784
      %v4843 = vadd.f32 %v4536, %v4789
      %v4844 = vadd.f32 %v4537, %v4792
      %v4845 = vadd.f32 %v4538, %v4797
      %v4846 = vadd.f32 %v4539, %v4800
      %v4847 = vadd.f32 %v4540, %v4805
      %v4848 = vadd.f32 %v4541, %v4808
      %v4849 = vadd.f32 %v4542, %v4813
      %v4850 = vadd.f32 %v4543, %v4816
      %v4851 = vld [vmem:[%s4544 + $0x1] sm:$0xff]
      %v4852 = vld [vmem:[%s4544 + $0x9] sm:$0xff]
      %v4853 = vld [vmem:[%s4544 + $0x19] sm:$0xff]
      %v4854 = vld [vmem:[%s4544 + $0x21] sm:$0xff]
      %v4855 = vld [vmem:[%s4544 + $0x31] sm:$0xff]
      %v4856 = vld [vmem:[%s4544 + $0x39] sm:$0xff]
      %v4857 = vld [vmem:[%s4544 + $0x49] sm:$0xff]
      %v4858 = vld [vmem:[%s4544 + $0x51] sm:$0xff]
      %v4859 = vld [vmem:[%s4544 + $0x61] sm:$0xff]
      %v4860 = vld [vmem:[%s4544 + $0x69] sm:$0xff]
      %v4861 = vld [vmem:[%s4544 + $0x79] sm:$0xff]
      %v4862 = vld [vmem:[%s4544 + $0x81] sm:$0xff]
      %v4863 = vld [vmem:[%s4544 + $0x91] sm:$0xff]
      %v4864 = vld [vmem:[%s4544 + $0x99] sm:$0xff]
      %v4865 = vld [vmem:[%s4544 + $0xa9] sm:$0xff]
      %v4866 = vld [vmem:[%s4544 + $0xb1] sm:$0xff]
      %v4867 = vld [vmem:[%s4544 + $0xc1] sm:$0xff]
      %v4868 = vld [vmem:[%s4544 + $0xc9] sm:$0xff]
      %v4869 = vld [vmem:[%s4544 + $0xd9] sm:$0xff]
      %v4870 = vld [vmem:[%s4544 + $0xe1] sm:$0xff]
      %v4871 = vld [vmem:[%s4544 + $0xf1] sm:$0xff]
      %v4872 = vld [vmem:[%s4544 + $0xf9] sm:$0xff]
      %v4873 = vld [vmem:[%s4544 + $0x109] sm:$0xff]
      %v4874 = vld [vmem:[%s4544 + $0x111] sm:$0xff]
      %v4875 = vld [vmem:[%s4544 + $0x121] sm:$0xff]
      %v4876 = vld [vmem:[%s4544 + $0x129] sm:$0xff]
      %v4877 = vld [vmem:[%s4544 + $0x139] sm:$0xff]
      %v4878 = vld [vmem:[%s4544 + $0x141] sm:$0xff]
      %v4879 = vld [vmem:[%s4544 + $0x151] sm:$0xff]
      %v4880 = vld [vmem:[%s4544 + $0x159] sm:$0xff]
      %v4881 = vld [vmem:[%s4544 + $0x169] sm:$0xff]
      %v4882 = vld [vmem:[%s4544 + $0x171] sm:$0xff]
      %v4883 = vpack.c.bf16 %v4852, %v4851
      %v4884 = vpack.c.bf16 %v4854, %v4853
      %v4885 = vpack.c.bf16 %v4856, %v4855
      %v4886 = vpack.c.bf16 %v4858, %v4857
      %v4887 = vpack.c.bf16 %v4860, %v4859
      %v4888 = vpack.c.bf16 %v4862, %v4861
      %v4889 = vpack.c.bf16 %v4864, %v4863
      %v4890 = vpack.c.bf16 %v4866, %v4865
      %v4891 = vpack.c.bf16 %v4868, %v4867
      %v4892 = vpack.c.bf16 %v4870, %v4869
      %v4893 = vpack.c.bf16 %v4872, %v4871
      %v4894 = vpack.c.bf16 %v4874, %v4873
      %v4895 = vpack.c.bf16 %v4876, %v4875
      %v4896 = vpack.c.bf16 %v4878, %v4877
      %v4897 = vpack.c.bf16 %v4880, %v4879
      %v4898 = vpack.c.bf16 %v4882, %v4881
      %s4899 = scalar_lea.vmem %s2, 448
      %v4900 = vld [vmem:[%s4899] sm:$0xf]
      %v4901 = vld [vmem:[%s4899 + $0x4] sm:$0xf]
      %v4902 = vld [vmem:[%s4899 + $0x8] sm:$0xf]
      %v4903 = vld [vmem:[%s4899 + $0xc] sm:$0xf]
      %v4904 = vld [vmem:[%s4899 + $0x10] sm:$0xf]
      %v4905 = vld [vmem:[%s4899 + $0x14] sm:$0xf]
      %v4906 = vld [vmem:[%s4899 + $0x18] sm:$0xf]
      %v4907 = vld [vmem:[%s4899 + $0x1c] sm:$0xf]
      %v4908 = vld [vmem:[%s4899 + $0x20] sm:$0xf]
      %v4909 = vld [vmem:[%s4899 + $0x24] sm:$0xf]
      %v4910 = vld [vmem:[%s4899 + $0x28] sm:$0xf]
      %v4911 = vld [vmem:[%s4899 + $0x2c] sm:$0xf]
      %v4912 = vld [vmem:[%s4899 + $0x30] sm:$0xf]
      %v4913 = vld [vmem:[%s4899 + $0x34] sm:$0xf]
      %v4914 = vld [vmem:[%s4899 + $0x38] sm:$0xf]
      %v4915 = vld [vmem:[%s4899 + $0x3c] sm:$0xf]
      %v4932 = vunpack.c.l.b16 %v4900
      %v4933 = vunpack.c.l.b16 %v4901
      %v4934 = vunpack.c.l.b16 %v4902
      %v4935 = vunpack.c.l.b16 %v4903
      %v4936 = vunpack.c.l.b16 %v4904
      %v4937 = vunpack.c.l.b16 %v4905
      %v4938 = vunpack.c.l.b16 %v4906
      %v4939 = vunpack.c.l.b16 %v4907
      %v4940 = vunpack.c.l.b16 %v4908
      %v4941 = vunpack.c.l.b16 %v4909
      %v4942 = vunpack.c.l.b16 %v4910
      %v4943 = vunpack.c.l.b16 %v4911
      %v4944 = vunpack.c.l.b16 %v4912
      %v4945 = vunpack.c.l.b16 %v4913
      %v4946 = vunpack.c.l.b16 %v4914
      %v4947 = vunpack.c.l.b16 %v4915
      %v4948 = vpack.c.b16 %v4933, %v4932
      %v4949 = vpack.c.b16 %v4935, %v4934
      %v4950 = vpack.c.b16 %v4937, %v4936
      %v4951 = vpack.c.b16 %v4939, %v4938
      %v4952 = vpack.c.b16 %v4941, %v4940
      %v4953 = vpack.c.b16 %v4943, %v4942
      %v4954 = vpack.c.b16 %v4945, %v4944
      %v4955 = vpack.c.b16 %v4947, %v4946
      %4964 = vmatprep.subr.bf16.mxu0 0
      %4965 = vmatpush1.bf16.msra.mxu0 %v4948
      %4966 = vmatprep.subr.bf16.mxu0 0
      %4967 = vmatpush1.bf16.msra.mxu0 %v4949
      %4968 = vmatprep.subr.bf16.mxu0 0
      %4969 = vmatpush1.bf16.msra.mxu0 %v4950
      %4970 = vmatprep.subr.bf16.mxu0 0
      %4971 = vmatpush1.bf16.msra.mxu0 %v4951
      %4972 = vmatprep.subr.bf16.mxu0 0
      %4973 = vmatpush1.bf16.msra.mxu0 %v4952
      %4974 = vmatprep.subr.bf16.mxu0 0
      %4975 = vmatpush1.bf16.msra.mxu0 %v4953
      %4976 = vmatprep.subr.bf16.mxu0 0
      %4977 = vmatpush1.bf16.msra.mxu0 %v4954
      %4978 = vmatprep.subr.bf16.mxu0 0
      %4979 = vmatpush1.bf16.msra.mxu0 %v4955
      %4980 = vmatprep.subr.bf16.mxu0 0
      %4981 = vmatpush1.bf16.msra.mxu0 0
      %4982 = vmatprep.subr.bf16.mxu0 0
      %4983 = vmatpush1.bf16.msra.mxu0 0
      %4984 = vmatprep.subr.bf16.mxu0 0
      %4985 = vmatpush1.bf16.msra.mxu0 0
      %4986 = vmatprep.subr.bf16.mxu0 0
      %4987 = vmatpush1.bf16.msra.mxu0 0
      %4988 = vmatprep.subr.bf16.mxu0 0
      %4989 = vmatpush1.bf16.msra.mxu0 0
      %4990 = vmatprep.subr.bf16.mxu0 0
      %4991 = vmatpush1.bf16.msra.mxu0 0
      %4992 = vmatprep.subr.bf16.mxu0 0
      %4993 = vmatpush1.bf16.msra.mxu0 0
      %4994 = vmatprep.subr.bf16.mxu0 0
      %4995 = vmatpush1.bf16.msra.mxu0 0
      %4996 = vmatprep.mubr.bf16.mxu0 0
      %4997 = vmatmul.mubr.bf16.gmra.mrb[0].mxu0 %v4883
      %v4998 = vpop.f32.mrb[0].mxu0
      %v4999 = vadd.f32 0.0, %v4998
      %v5000 = vpop.f32.mrb[0].mxu0
      %v5001 = vpop.f32.mrb[0].mxu0
      %v5002 = vadd.f32 0.0, %v5001
      %v5003 = vpop.f32.mrb[0].mxu0
      %5004 = vmatprep.mubr.bf16.mxu0 0
      %5005 = vmatmul.mubr.bf16.gmra.mrb[0].mxu0 %v4884
      %v5006 = vpop.f32.mrb[0].mxu0
      %v5007 = vadd.f32 0.0, %v5006
      %v5008 = vpop.f32.mrb[0].mxu0
      %v5009 = vpop.f32.mrb[0].mxu0
      %v5010 = vadd.f32 0.0, %v5009
      %v5011 = vpop.f32.mrb[0].mxu0
      %5012 = vmatprep.mubr.bf16.mxu0 0
      %5013 = vmatmul.mubr.bf16.gmra.mrb[0].mxu0 %v4885
      %v5014 = vpop.f32.mrb[0].mxu0
      %v5015 = vadd.f32 0.0, %v5014
      %v5016 = vpop.f32.mrb[0].mxu0
      %v5017 = vpop.f32.mrb[0].mxu0
      %v5018 = vadd.f32 0.0, %v5017
      %v5019 = vpop.f32.mrb[0].mxu0
      %5020 = vmatprep.mubr.bf16.mxu0 0
      %5021 = vmatmul.mubr.bf16.gmra.mrb[0].mxu0 %v4886
      %v5022 = vpop.f32.mrb[0].mxu0
      %v5023 = vadd.f32 0.0, %v5022
      %v5024 = vpop.f32.mrb[0].mxu0
      %v5025 = vpop.f32.mrb[0].mxu0
      %v5026 = vadd.f32 0.0, %v5025
      %v5027 = vpop.f32.mrb[0].mxu0
      %5028 = vmatprep.mubr.bf16.mxu0 0
      %5029 = vmatmul.mubr.bf16.gmra.mrb[0].mxu0 %v4887
      %v5030 = vpop.f32.mrb[0].mxu0
      %v5031 = vadd.f32 0.0, %v5030
      %v5032 = vpop.f32.mrb[0].mxu0
      %v5033 = vpop.f32.mrb[0].mxu0
      %v5034 = vadd.f32 0.0, %v5033
      %v5035 = vpop.f32.mrb[0].mxu0
      %5036 = vmatprep.mubr.bf16.mxu0 0
      %5037 = vmatmul.mubr.bf16.gmra.mrb[0].mxu0 %v4888
      %v5038 = vpop.f32.mrb[0].mxu0
      %v5039 = vadd.f32 0.0, %v5038
      %v5040 = vpop.f32.mrb[0].mxu0
      %v5041 = vpop.f32.mrb[0].mxu0
      %v5042 = vadd.f32 0.0, %v5041
      %v5043 = vpop.f32.mrb[0].mxu0
      %5044 = vmatprep.mubr.bf16.mxu0 0
      %5045 = vmatmul.mubr.bf16.gmra.mrb[0].mxu0 %v4889
      %v5046 = vpop.f32.mrb[0].mxu0
      %v5047 = vadd.f32 0.0, %v5046
      %v5048 = vpop.f32.mrb[0].mxu0
      %v5049 = vpop.f32.mrb[0].mxu0
      %v5050 = vadd.f32 0.0, %v5049
      %v5051 = vpop.f32.mrb[0].mxu0
      %5052 = vmatprep.mubr.bf16.mxu0 0
      %5053 = vmatmul.mubr.bf16.gmra.mrb[0].mxu0 %v4890
      %v5054 = vpop.f32.mrb[0].mxu0
      %v5055 = vadd.f32 0.0, %v5054
      %v5056 = vpop.f32.mrb[0].mxu0
      %v5057 = vpop.f32.mrb[0].mxu0
      %v5058 = vadd.f32 0.0, %v5057
      %v5059 = vpop.f32.mrb[0].mxu0
      %5060 = vmatprep.mubr.bf16.mxu0 0
      %5061 = vmatmul.mubr.bf16.gmra.mrb[0].mxu0 %v4891
      %v5062 = vpop.f32.mrb[0].mxu0
      %v5063 = vadd.f32 0.0, %v5062
      %v5064 = vpop.f32.mrb[0].mxu0
      %v5065 = vpop.f32.mrb[0].mxu0
      %v5066 = vadd.f32 0.0, %v5065
      %v5067 = vpop.f32.mrb[0].mxu0
      %5068 = vmatprep.mubr.bf16.mxu0 0
      %5069 = vmatmul.mubr.bf16.gmra.mrb[0].mxu0 %v4892
      %v5070 = vpop.f32.mrb[0].mxu0
      %v5071 = vadd.f32 0.0, %v5070
      %v5072 = vpop.f32.mrb[0].mxu0
      %v5073 = vpop.f32.mrb[0].mxu0
      %v5074 = vadd.f32 0.0, %v5073
      %v5075 = vpop.f32.mrb[0].mxu0
      %5076 = vmatprep.mubr.bf16.mxu0 0
      %5077 = vmatmul.mubr.bf16.gmra.mrb[0].mxu0 %v4893
      %v5078 = vpop.f32.mrb[0].mxu0
      %v5079 = vadd.f32 0.0, %v5078
      %v5080 = vpop.f32.mrb[0].mxu0
      %v5081 = vpop.f32.mrb[0].mxu0
      %v5082 = vadd.f32 0.0, %v5081
      %v5083 = vpop.f32.mrb[0].mxu0
      %5084 = vmatprep.mubr.bf16.mxu0 0
      %5085 = vmatmul.mubr.bf16.gmra.mrb[0].mxu0 %v4894
      %v5086 = vpop.f32.mrb[0].mxu0
      %v5087 = vadd.f32 0.0, %v5086
      %v5088 = vpop.f32.mrb[0].mxu0
      %v5089 = vpop.f32.mrb[0].mxu0
      %v5090 = vadd.f32 0.0, %v5089
      %v5091 = vpop.f32.mrb[0].mxu0
      %5092 = vmatprep.mubr.bf16.mxu0 0
      %5093 = vmatmul.mubr.bf16.gmra.mrb[0].mxu0 %v4895
      %v5094 = vpop.f32.mrb[0].mxu0
      %v5095 = vadd.f32 0.0, %v5094
      %v5096 = vpop.f32.mrb[0].mxu0
      %v5097 = vpop.f32.mrb[0].mxu0
      %v5098 = vadd.f32 0.0, %v5097
      %v5099 = vpop.f32.mrb[0].mxu0
      %5100 = vmatprep.mubr.bf16.mxu0 0
      %5101 = vmatmul.mubr.bf16.gmra.mrb[0].mxu0 %v4896
      %v5102 = vpop.f32.mrb[0].mxu0
      %v5103 = vadd.f32 0.0, %v5102
      %v5104 = vpop.f32.mrb[0].mxu0
      %v5105 = vpop.f32.mrb[0].mxu0
      %v5106 = vadd.f32 0.0, %v5105
      %v5107 = vpop.f32.mrb[0].mxu0
      %5108 = vmatprep.mubr.bf16.mxu0 0
      %5109 = vmatmul.mubr.bf16.gmra.mrb[0].mxu0 %v4897
      %v5110 = vpop.f32.mrb[0].mxu0
      %v5111 = vadd.f32 0.0, %v5110
      %v5112 = vpop.f32.mrb[0].mxu0
      %v5113 = vpop.f32.mrb[0].mxu0
      %v5114 = vadd.f32 0.0, %v5113
      %v5115 = vpop.f32.mrb[0].mxu0
      %5116 = vmatprep.mubr.bf16.mxu0 0
      %5117 = vmatmul.mubr.bf16.gmra.mrb[0].mxu0 %v4898
      %v5118 = vpop.f32.mrb[0].mxu0
      %v5119 = vadd.f32 0.0, %v5118
      %v5120 = vpop.f32.mrb[0].mxu0
      %v5121 = vpop.f32.mrb[0].mxu0
      %v5122 = vadd.f32 0.0, %v5121
      %v5123 = vpop.f32.mrb[0].mxu0
      %5124 = vdwg.mxu0
      %v5125 = vadd.f32 %v4819, %v4999
      %v5126 = vadd.f32 %v4820, %v5002
      %v5127 = vadd.f32 %v4821, %v5007
      %v5128 = vadd.f32 %v4822, %v5010
      %v5129 = vadd.f32 %v4823, %v5015
      %v5130 = vadd.f32 %v4824, %v5018
      %v5131 = vadd.f32 %v4825, %v5023
      %v5132 = vadd.f32 %v4826, %v5026
      %v5133 = vadd.f32 %v4827, %v5031
      %v5134 = vadd.f32 %v4828, %v5034
      %v5135 = vadd.f32 %v4829, %v5039
      %v5136 = vadd.f32 %v4830, %v5042
      %v5137 = vadd.f32 %v4831, %v5047
      %v5138 = vadd.f32 %v4832, %v5050
      %v5139 = vadd.f32 %v4833, %v5055
      %v5140 = vadd.f32 %v4834, %v5058
      %v5141 = vadd.f32 %v4835, %v5063
      %v5142 = vadd.f32 %v4836, %v5066
      %v5143 = vadd.f32 %v4837, %v5071
      %v5144 = vadd.f32 %v4838, %v5074
      %v5145 = vadd.f32 %v4839, %v5079
      %v5146 = vadd.f32 %v4840, %v5082
      %v5147 = vadd.f32 %v4841, %v5087
      %v5148 = vadd.f32 %v4842, %v5090
      %v5149 = vadd.f32 %v4843, %v5095
      %v5150 = vadd.f32 %v4844, %v5098
      %v5151 = vadd.f32 %v4845, %v5103
      %v5152 = vadd.f32 %v4846, %v5106
      %v5153 = vadd.f32 %v4847, %v5111
      %v5154 = vadd.f32 %v4848, %v5114
      %v5155 = vadd.f32 %v4849, %v5119
      %v5156 = vadd.f32 %v4850, %v5122
      %v5157 = vld [vmem:[%s4544 + $0x2] sm:$0xff]
      %v5158 = vld [vmem:[%s4544 + $0xa] sm:$0xff]
      %v5159 = vld [vmem:[%s4544 + $0x1a] sm:$0xff]
      %v5160 = vld [vmem:[%s4544 + $0x22] sm:$0xff]
      %v5161 = vld [vmem:[%s4544 + $0x32] sm:$0xff]
      %v5162 = vld [vmem:[%s4544 + $0x3a] sm:$0xff]
      %v5163 = vld [vmem:[%s4544 + $0x4a] sm:$0xff]
      %v5164 = vld [vmem:[%s4544 + $0x52] sm:$0xff]
      %v5165 = vld [vmem:[%s4544 + $0x62] sm:$0xff]
      %v5166 = vld [vmem:[%s4544 + $0x6a] sm:$0xff]
      %v5167 = vld [vmem:[%s4544 + $0x7a] sm:$0xff]
      %v5168 = vld [vmem:[%s4544 + $0x82] sm:$0xff]
      %v5169 = vld [vmem:[%s4544 + $0x92] sm:$0xff]
      %v5170 = vld [vmem:[%s4544 + $0x9a] sm:$0xff]
      %v5171 = vld [vmem:[%s4544 + $0xaa] sm:$0xff]
      %v5172 = vld [vmem:[%s4544 + $0xb2] sm:$0xff]
      %v5173 = vld [vmem:[%s4544 + $0xc2] sm:$0xff]
      %v5174 = vld [vmem:[%s4544 + $0xca] sm:$0xff]
      %v5175 = vld [vmem:[%s4544 + $0xda] sm:$0xff]
      %v5176 = vld [vmem:[%s4544 + $0xe2] sm:$0xff]
      %v5177 = vld [vmem:[%s4544 + $0xf2] sm:$0xff]
      %v5178 = vld [vmem:[%s4544 + $0xfa] sm:$0xff]
      %v5179 = vld [vmem:[%s4544 + $0x10a] sm:$0xff]
      %v5180 = vld [vmem:[%s4544 + $0x112] sm:$0xff]
      %v5181 = vld [vmem:[%s4544 + $0x122] sm:$0xff]
      %v5182 = vld [vmem:[%s4544 + $0x12a] sm:$0xff]
      %v5183 = vld [vmem:[%s4544 + $0x13a] sm:$0xff]
      %v5184 = vld [vmem:[%s4544 + $0x142] sm:$0xff]
      %v5185 = vld [vmem:[%s4544 + $0x152] sm:$0xff]
      %v5186 = vld [vmem:[%s4544 + $0x15a] sm:$0xff]
      %v5187 = vld [vmem:[%s4544 + $0x16a] sm:$0xff]
      %v5188 = vld [vmem:[%s4544 + $0x172] sm:$0xff]
      %v5189 = vpack.c.bf16 %v5158, %v5157
      %v5190 = vpack.c.bf16 %v5160, %v5159
      %v5191 = vpack.c.bf16 %v5162, %v5161
      %v5192 = vpack.c.bf16 %v5164, %v5163
      %v5193 = vpack.c.bf16 %v5166, %v5165
      %v5194 = vpack.c.bf16 %v5168, %v5167
      %v5195 = vpack.c.bf16 %v5170, %v5169
      %v5196 = vpack.c.bf16 %v5172, %v5171
      %v5197 = vpack.c.bf16 %v5174, %v5173
      %v5198 = vpack.c.bf16 %v5176, %v5175
      %v5199 = vpack.c.bf16 %v5178, %v5177
      %v5200 = vpack.c.bf16 %v5180, %v5179
      %v5201 = vpack.c.bf16 %v5182, %v5181
      %v5202 = vpack.c.bf16 %v5184, %v5183
      %v5203 = vpack.c.bf16 %v5186, %v5185
      %v5204 = vpack.c.bf16 %v5188, %v5187
      %s5205 = scalar_lea.vmem %s2, 512
      %v5206 = vld [vmem:[%s5205] sm:$0xf]
      %v5207 = vld [vmem:[%s5205 + $0x4] sm:$0xf]
      %v5208 = vld [vmem:[%s5205 + $0x8] sm:$0xf]
      %v5209 = vld [vmem:[%s5205 + $0xc] sm:$0xf]
      %v5210 = vld [vmem:[%s5205 + $0x10] sm:$0xf]
      %v5211 = vld [vmem:[%s5205 + $0x14] sm:$0xf]
      %v5212 = vld [vmem:[%s5205 + $0x18] sm:$0xf]
      %v5213 = vld [vmem:[%s5205 + $0x1c] sm:$0xf]
      %v5214 = vld [vmem:[%s5205 + $0x20] sm:$0xf]
      %v5215 = vld [vmem:[%s5205 + $0x24] sm:$0xf]
      %v5216 = vld [vmem:[%s5205 + $0x28] sm:$0xf]
      %v5217 = vld [vmem:[%s5205 + $0x2c] sm:$0xf]
      %v5218 = vld [vmem:[%s5205 + $0x30] sm:$0xf]
      %v5219 = vld [vmem:[%s5205 + $0x34] sm:$0xf]
      %v5220 = vld [vmem:[%s5205 + $0x38] sm:$0xf]
      %v5221 = vld [vmem:[%s5205 + $0x3c] sm:$0xf]
      %v5238 = vunpack.c.l.b16 %v5206
      %v5239 = vunpack.c.l.b16 %v5207
      %v5240 = vunpack.c.l.b16 %v5208
      %v5241 = vunpack.c.l.b16 %v5209
      %v5242 = vunpack.c.l.b16 %v5210
      %v5243 = vunpack.c.l.b16 %v5211
      %v5244 = vunpack.c.l.b16 %v5212
      %v5245 = vunpack.c.l.b16 %v5213
      %v5246 = vunpack.c.l.b16 %v5214
      %v5247 = vunpack.c.l.b16 %v5215
      %v5248 = vunpack.c.l.b16 %v5216
      %v5249 = vunpack.c.l.b16 %v5217
      %v5250 = vunpack.c.l.b16 %v5218
      %v5251 = vunpack.c.l.b16 %v5219
      %v5252 = vunpack.c.l.b16 %v5220
      %v5253 = vunpack.c.l.b16 %v5221
      %v5254 = vpack.c.b16 %v5239, %v5238
      %v5255 = vpack.c.b16 %v5241, %v5240
      %v5256 = vpack.c.b16 %v5243, %v5242
      %v5257 = vpack.c.b16 %v5245, %v5244
      %v5258 = vpack.c.b16 %v5247, %v5246
      %v5259 = vpack.c.b16 %v5249, %v5248
      %v5260 = vpack.c.b16 %v5251, %v5250
      %v5261 = vpack.c.b16 %v5253, %v5252
      %5270 = vmatprep.subr.bf16.mxu0 0
      %5271 = vmatpush1.bf16.msra.mxu0 %v5254
      %5272 = vmatprep.subr.bf16.mxu0 0
      %5273 = vmatpush1.bf16.msra.mxu0 %v5255
      %5274 = vmatprep.subr.bf16.mxu0 0
      %5275 = vmatpush1.bf16.msra.mxu0 %v5256
      %5276 = vmatprep.subr.bf16.mxu0 0
      %5277 = vmatpush1.bf16.msra.mxu0 %v5257
      %5278 = vmatprep.subr.bf16.mxu0 0
      %5279 = vmatpush1.bf16.msra.mxu0 %v5258
      %5280 = vmatprep.subr.bf16.mxu0 0
      %5281 = vmatpush1.bf16.msra.mxu0 %v5259
      %5282 = vmatprep.subr.bf16.mxu0 0
      %5283 = vmatpush1.bf16.msra.mxu0 %v5260
      %5284 = vmatprep.subr.bf16.mxu0 0
      %5285 = vmatpush1.bf16.msra.mxu0 %v5261
      %5286 = vmatprep.subr.bf16.mxu0 0
      %5287 = vmatpush1.bf16.msra.mxu0 0
      %5288 = vmatprep.subr.bf16.mxu0 0
      %5289 = vmatpush1.bf16.msra.mxu0 0
      %5290 = vmatprep.subr.bf16.mxu0 0
      %5291 = vmatpush1.bf16.msra.mxu0 0
      %5292 = vmatprep.subr.bf16.mxu0 0
      %5293 = vmatpush1.bf16.msra.mxu0 0
      %5294 = vmatprep.subr.bf16.mxu0 0
      %5295 = vmatpush1.bf16.msra.mxu0 0
      %5296 = vmatprep.subr.bf16.mxu0 0
      %5297 = vmatpush1.bf16.msra.mxu0 0
      %5298 = vmatprep.subr.bf16.mxu0 0
      %5299 = vmatpush1.bf16.msra.mxu0 0
      %5300 = vmatprep.subr.bf16.mxu0 0
      %5301 = vmatpush1.bf16.msra.mxu0 0
      %5302 = vmatprep.mubr.bf16.mxu0 0
      %5303 = vmatmul.mubr.bf16.gmra.mrb[0].mxu0 %v5189
      %v5304 = vpop.f32.mrb[0].mxu0
      %v5305 = vadd.f32 0.0, %v5304
      %v5306 = vpop.f32.mrb[0].mxu0
      %v5307 = vpop.f32.mrb[0].mxu0
      %v5308 = vadd.f32 0.0, %v5307
      %v5309 = vpop.f32.mrb[0].mxu0
      %5310 = vmatprep.mubr.bf16.mxu0 0
      %5311 = vmatmul.mubr.bf16.gmra.mrb[0].mxu0 %v5190
      %v5312 = vpop.f32.mrb[0].mxu0
      %v5313 = vadd.f32 0.0, %v5312
      %v5314 = vpop.f32.mrb[0].mxu0
      %v5315 = vpop.f32.mrb[0].mxu0
      %v5316 = vadd.f32 0.0, %v5315
      %v5317 = vpop.f32.mrb[0].mxu0
      %5318 = vmatprep.mubr.bf16.mxu0 0
      %5319 = vmatmul.mubr.bf16.gmra.mrb[0].mxu0 %v5191
      %v5320 = vpop.f32.mrb[0].mxu0
      %v5321 = vadd.f32 0.0, %v5320
      %v5322 = vpop.f32.mrb[0].mxu0
      %v5323 = vpop.f32.mrb[0].mxu0
      %v5324 = vadd.f32 0.0, %v5323
      %v5325 = vpop.f32.mrb[0].mxu0
      %5326 = vmatprep.mubr.bf16.mxu0 0
      %5327 = vmatmul.mubr.bf16.gmra.mrb[0].mxu0 %v5192
      %v5328 = vpop.f32.mrb[0].mxu0
      %v5329 = vadd.f32 0.0, %v5328
      %v5330 = vpop.f32.mrb[0].mxu0
      %v5331 = vpop.f32.mrb[0].mxu0
      %v5332 = vadd.f32 0.0, %v5331
      %v5333 = vpop.f32.mrb[0].mxu0
      %5334 = vmatprep.mubr.bf16.mxu0 0
      %5335 = vmatmul.mubr.bf16.gmra.mrb[0].mxu0 %v5193
      %v5336 = vpop.f32.mrb[0].mxu0
      %v5337 = vadd.f32 0.0, %v5336
      %v5338 = vpop.f32.mrb[0].mxu0
      %v5339 = vpop.f32.mrb[0].mxu0
      %v5340 = vadd.f32 0.0, %v5339
      %v5341 = vpop.f32.mrb[0].mxu0
      %5342 = vmatprep.mubr.bf16.mxu0 0
      %5343 = vmatmul.mubr.bf16.gmra.mrb[0].mxu0 %v5194
      %v5344 = vpop.f32.mrb[0].mxu0
      %v5345 = vadd.f32 0.0, %v5344
      %v5346 = vpop.f32.mrb[0].mxu0
      %v5347 = vpop.f32.mrb[0].mxu0
      %v5348 = vadd.f32 0.0, %v5347
      %v5349 = vpop.f32.mrb[0].mxu0
      %5350 = vmatprep.mubr.bf16.mxu0 0
      %5351 = vmatmul.mubr.bf16.gmra.mrb[0].mxu0 %v5195
      %v5352 = vpop.f32.mrb[0].mxu0
      %v5353 = vadd.f32 0.0, %v5352
      %v5354 = vpop.f32.mrb[0].mxu0
      %v5355 = vpop.f32.mrb[0].mxu0
      %v5356 = vadd.f32 0.0, %v5355
      %v5357 = vpop.f32.mrb[0].mxu0
      %5358 = vmatprep.mubr.bf16.mxu0 0
      %5359 = vmatmul.mubr.bf16.gmra.mrb[0].mxu0 %v5196
      %v5360 = vpop.f32.mrb[0].mxu0
      %v5361 = vadd.f32 0.0, %v5360
      %v5362 = vpop.f32.mrb[0].mxu0
      %v5363 = vpop.f32.mrb[0].mxu0
      %v5364 = vadd.f32 0.0, %v5363
      %v5365 = vpop.f32.mrb[0].mxu0
      %5366 = vmatprep.mubr.bf16.mxu0 0
      %5367 = vmatmul.mubr.bf16.gmra.mrb[0].mxu0 %v5197
      %v5368 = vpop.f32.mrb[0].mxu0
      %v5369 = vadd.f32 0.0, %v5368
      %v5370 = vpop.f32.mrb[0].mxu0
      %v5371 = vpop.f32.mrb[0].mxu0
      %v5372 = vadd.f32 0.0, %v5371
      %v5373 = vpop.f32.mrb[0].mxu0
      %5374 = vmatprep.mubr.bf16.mxu0 0
      %5375 = vmatmul.mubr.bf16.gmra.mrb[0].mxu0 %v5198
      %v5376 = vpop.f32.mrb[0].mxu0
      %v5377 = vadd.f32 0.0, %v5376
      %v5378 = vpop.f32.mrb[0].mxu0
      %v5379 = vpop.f32.mrb[0].mxu0
      %v5380 = vadd.f32 0.0, %v5379
      %v5381 = vpop.f32.mrb[0].mxu0
      %5382 = vmatprep.mubr.bf16.mxu0 0
      %5383 = vmatmul.mubr.bf16.gmra.mrb[0].mxu0 %v5199
      %v5384 = vpop.f32.mrb[0].mxu0
      %v5385 = vadd.f32 0.0, %v5384
      %v5386 = vpop.f32.mrb[0].mxu0
      %v5387 = vpop.f32.mrb[0].mxu0
      %v5388 = vadd.f32 0.0, %v5387
      %v5389 = vpop.f32.mrb[0].mxu0
      %5390 = vmatprep.mubr.bf16.mxu0 0
      %5391 = vmatmul.mubr.bf16.gmra.mrb[0].mxu0 %v5200
      %v5392 = vpop.f32.mrb[0].mxu0
      %v5393 = vadd.f32 0.0, %v5392
      %v5394 = vpop.f32.mrb[0].mxu0
      %v5395 = vpop.f32.mrb[0].mxu0
      %v5396 = vadd.f32 0.0, %v5395
      %v5397 = vpop.f32.mrb[0].mxu0
      %5398 = vmatprep.mubr.bf16.mxu0 0
      %5399 = vmatmul.mubr.bf16.gmra.mrb[0].mxu0 %v5201
      %v5400 = vpop.f32.mrb[0].mxu0
      %v5401 = vadd.f32 0.0, %v5400
      %v5402 = vpop.f32.mrb[0].mxu0
      %v5403 = vpop.f32.mrb[0].mxu0
      %v5404 = vadd.f32 0.0, %v5403
      %v5405 = vpop.f32.mrb[0].mxu0
      %5406 = vmatprep.mubr.bf16.mxu0 0
      %5407 = vmatmul.mubr.bf16.gmra.mrb[0].mxu0 %v5202
      %v5408 = vpop.f32.mrb[0].mxu0
      %v5409 = vadd.f32 0.0, %v5408
      %v5410 = vpop.f32.mrb[0].mxu0
      %v5411 = vpop.f32.mrb[0].mxu0
      %v5412 = vadd.f32 0.0, %v5411
      %v5413 = vpop.f32.mrb[0].mxu0
      %5414 = vmatprep.mubr.bf16.mxu0 0
      %5415 = vmatmul.mubr.bf16.gmra.mrb[0].mxu0 %v5203
      %v5416 = vpop.f32.mrb[0].mxu0
      %v5417 = vadd.f32 0.0, %v5416
      %v5418 = vpop.f32.mrb[0].mxu0
      %v5419 = vpop.f32.mrb[0].mxu0
      %v5420 = vadd.f32 0.0, %v5419
      %v5421 = vpop.f32.mrb[0].mxu0
      %5422 = vmatprep.mubr.bf16.mxu0 0
      %5423 = vmatmul.mubr.bf16.gmra.mrb[0].mxu0 %v5204
      %v5424 = vpop.f32.mrb[0].mxu0
      %v5425 = vadd.f32 0.0, %v5424
      %v5426 = vpop.f32.mrb[0].mxu0
      %v5427 = vpop.f32.mrb[0].mxu0
      %v5428 = vadd.f32 0.0, %v5427
      %v5429 = vpop.f32.mrb[0].mxu0
      %5430 = vdwg.mxu0
      %v5431 = vadd.f32 %v5125, %v5305
      %v5432 = vadd.f32 %v5126, %v5308
      %v5433 = vadd.f32 %v5127, %v5313
      %v5434 = vadd.f32 %v5128, %v5316
      %v5435 = vadd.f32 %v5129, %v5321
      %v5436 = vadd.f32 %v5130, %v5324
      %v5437 = vadd.f32 %v5131, %v5329
      %v5438 = vadd.f32 %v5132, %v5332
      %v5439 = vadd.f32 %v5133, %v5337
      %v5440 = vadd.f32 %v5134, %v5340
      %v5441 = vadd.f32 %v5135, %v5345
      %v5442 = vadd.f32 %v5136, %v5348
      %v5443 = vadd.f32 %v5137, %v5353
      %v5444 = vadd.f32 %v5138, %v5356
      %v5445 = vadd.f32 %v5139, %v5361
      %v5446 = vadd.f32 %v5140, %v5364
      %v5447 = vadd.f32 %v5141, %v5369
      %v5448 = vadd.f32 %v5142, %v5372
      %v5449 = vadd.f32 %v5143, %v5377
      %v5450 = vadd.f32 %v5144, %v5380
      %v5451 = vadd.f32 %v5145, %v5385
      %v5452 = vadd.f32 %v5146, %v5388
      %v5453 = vadd.f32 %v5147, %v5393
      %v5454 = vadd.f32 %v5148, %v5396
      %v5455 = vadd.f32 %v5149, %v5401
      %v5456 = vadd.f32 %v5150, %v5404
      %v5457 = vadd.f32 %v5151, %v5409
      %v5458 = vadd.f32 %v5152, %v5412
      %v5459 = vadd.f32 %v5153, %v5417
      %v5460 = vadd.f32 %v5154, %v5420
      %v5461 = vadd.f32 %v5155, %v5425
      %v5462 = vadd.f32 %v5156, %v5428
      %v5463 = vlaneseq
      %v5464 = vshrl.u32 %v5463, 7
      %v5465 = vsub.s32 0, %v5464
      %v5466 = vrot.slane %v228, %v5465
      %v5467 = vmul.f32 %v5431, %v5466
      %v5468 = vmul.f32 %v5432, %v5466
      %v5469 = vmul.f32 %v5433, %v5466
      %v5470 = vmul.f32 %v5434, %v5466
      %v5471 = vmul.f32 %v5435, %v5466
      %v5472 = vmul.f32 %v5436, %v5466
      %v5473 = vmul.f32 %v5437, %v5466
      %v5474 = vmul.f32 %v5438, %v5466
      %v5475 = vmul.f32 %v5439, %v5466
      %v5476 = vmul.f32 %v5440, %v5466
      %v5477 = vmul.f32 %v5441, %v5466
      %v5478 = vmul.f32 %v5442, %v5466
      %v5479 = vmul.f32 %v5443, %v5466
      %v5480 = vmul.f32 %v5444, %v5466
      %v5481 = vmul.f32 %v5445, %v5466
      %v5482 = vmul.f32 %v5446, %v5466
      %v5483 = vmul.f32 %v5447, %v5466
      %v5484 = vmul.f32 %v5448, %v5466
      %v5485 = vmul.f32 %v5449, %v5466
      %v5486 = vmul.f32 %v5450, %v5466
      %v5487 = vmul.f32 %v5451, %v5466
      %v5488 = vmul.f32 %v5452, %v5466
      %v5489 = vmul.f32 %v5453, %v5466
      %v5490 = vmul.f32 %v5454, %v5466
      %v5491 = vmul.f32 %v5455, %v5466
      %v5492 = vmul.f32 %v5456, %v5466
      %v5493 = vmul.f32 %v5457, %v5466
      %v5494 = vmul.f32 %v5458, %v5466
      %v5495 = vmul.f32 %v5459, %v5466
      %v5496 = vmul.f32 %v5460, %v5466
      %v5497 = vmul.f32 %v5461, %v5466
      %v5498 = vmul.f32 %v5462, %v5466
      %v5499 = vlaneseq
      %v5500 = vshrl.u32 %v5499, 7
      %v5501 = vsub.s32 0, %v5500
      %v5502 = vrot.slane %v229, %v5501
      %v5503 = vadd.f32 %v5467, %v5502
      %v5504 = vadd.f32 %v5468, %v5502
      %v5505 = vadd.f32 %v5469, %v5502
      %v5506 = vadd.f32 %v5470, %v5502
      %v5507 = vadd.f32 %v5471, %v5502
      %v5508 = vadd.f32 %v5472, %v5502
      %v5509 = vadd.f32 %v5473, %v5502
      %v5510 = vadd.f32 %v5474, %v5502
      %v5511 = vadd.f32 %v5475, %v5502
      %v5512 = vadd.f32 %v5476, %v5502
      %v5513 = vadd.f32 %v5477, %v5502
      %v5514 = vadd.f32 %v5478, %v5502
      %v5515 = vadd.f32 %v5479, %v5502
      %v5516 = vadd.f32 %v5480, %v5502
      %v5517 = vadd.f32 %v5481, %v5502
      %v5518 = vadd.f32 %v5482, %v5502
      %v5519 = vadd.f32 %v5483, %v5502
      %v5520 = vadd.f32 %v5484, %v5502
      %v5521 = vadd.f32 %v5485, %v5502
      %v5522 = vadd.f32 %v5486, %v5502
      %v5523 = vadd.f32 %v5487, %v5502
      %v5524 = vadd.f32 %v5488, %v5502
      %v5525 = vadd.f32 %v5489, %v5502
      %v5526 = vadd.f32 %v5490, %v5502
      %v5527 = vadd.f32 %v5491, %v5502
      %v5528 = vadd.f32 %v5492, %v5502
      %v5529 = vadd.f32 %v5493, %v5502
      %v5530 = vadd.f32 %v5494, %v5502
      %v5531 = vadd.f32 %v5495, %v5502
      %v5532 = vadd.f32 %v5496, %v5502
      %v5533 = vadd.f32 %v5497, %v5502
      %v5534 = vadd.f32 %v5498, %v5502
      %v5535 = vmax.f32 %v5503, 0.0
      %v5536 = vmax.f32 %v5504, 0.0
      %v5537 = vmax.f32 %v5505, 0.0
      %v5538 = vmax.f32 %v5506, 0.0
      %v5539 = vmax.f32 %v5507, 0.0
      %v5540 = vmax.f32 %v5508, 0.0
      %v5541 = vmax.f32 %v5509, 0.0
      %v5542 = vmax.f32 %v5510, 0.0
      %v5543 = vmax.f32 %v5511, 0.0
      %v5544 = vmax.f32 %v5512, 0.0
      %v5545 = vmax.f32 %v5513, 0.0
      %v5546 = vmax.f32 %v5514, 0.0
      %v5547 = vmax.f32 %v5515, 0.0
      %v5548 = vmax.f32 %v5516, 0.0
      %v5549 = vmax.f32 %v5517, 0.0
      %v5550 = vmax.f32 %v5518, 0.0
      %v5551 = vmax.f32 %v5519, 0.0
      %v5552 = vmax.f32 %v5520, 0.0
      %v5553 = vmax.f32 %v5521, 0.0
      %v5554 = vmax.f32 %v5522, 0.0
      %v5555 = vmax.f32 %v5523, 0.0
      %v5556 = vmax.f32 %v5524, 0.0
      %v5557 = vmax.f32 %v5525, 0.0
      %v5558 = vmax.f32 %v5526, 0.0
      %v5559 = vmax.f32 %v5527, 0.0
      %v5560 = vmax.f32 %v5528, 0.0
      %v5561 = vmax.f32 %v5529, 0.0
      %v5562 = vmax.f32 %v5530, 0.0
      %v5563 = vmax.f32 %v5531, 0.0
      %v5564 = vmax.f32 %v5532, 0.0
      %v5565 = vmax.f32 %v5533, 0.0
      %v5566 = vmax.f32 %v5534, 0.0
      %v5567 = vld [vmem:[%s3] sm:$0x3]
      %v5568 = vlaneseq
      %v5569 = vshrl.u32 %v5568, 7
      %v5570 = vsub.s32 0, %v5569
      %v5571 = vrot.slane %v230, %v5570
      %v5573 = vsel %vm584, %v5567, 0
      %5575 = vmatprep.subr.bf16.mxu0 0
      %5576 = vmatpush1.bf16.msra.mxu0 %v5573
      %5577 = vmatprep.subr.bf16.mxu0 0
      %5578 = vmatpush1.bf16.msra.mxu0 0
      %5579 = vmatprep.subr.bf16.mxu0 0
      %5580 = vmatpush1.bf16.msra.mxu0 0
      %5581 = vmatprep.subr.bf16.mxu0 0
      %5582 = vmatpush1.bf16.msra.mxu0 0
      %5583 = vmatprep.subr.bf16.mxu0 0
      %5584 = vmatpush1.bf16.msra.mxu0 0
      %5585 = vmatprep.subr.bf16.mxu0 0
      %5586 = vmatpush1.bf16.msra.mxu0 0
      %5587 = vmatprep.subr.bf16.mxu0 0
      %5588 = vmatpush1.bf16.msra.mxu0 0
      %5589 = vmatprep.subr.bf16.mxu0 0
      %5590 = vmatpush1.bf16.msra.mxu0 0
      %5591 = vmatprep.subr.bf16.mxu0 0
      %5592 = vmatpush1.bf16.msra.mxu0 0
      %5593 = vmatprep.subr.bf16.mxu0 0
      %5594 = vmatpush1.bf16.msra.mxu0 0
      %5595 = vmatprep.subr.bf16.mxu0 0
      %5596 = vmatpush1.bf16.msra.mxu0 0
      %5597 = vmatprep.subr.bf16.mxu0 0
      %5598 = vmatpush1.bf16.msra.mxu0 0
      %5599 = vmatprep.subr.bf16.mxu0 0
      %5600 = vmatpush1.bf16.msra.mxu0 0
      %5601 = vmatprep.subr.bf16.mxu0 0
      %5602 = vmatpush1.bf16.msra.mxu0 0
      %5603 = vmatprep.subr.bf16.mxu0 0
      %5604 = vmatpush1.bf16.msra.mxu0 0
      %5605 = vmatprep.subr.bf16.mxu0 0
      %5606 = vmatpush1.bf16.msra.mxu0 0
      %5607 = vmatprep.mubr.bf16.mxu0 0
      %5608 = vmatmul.mubr.bf16.gmra.mrb[0].mxu0 %v540
      %v5609 = vpop.f32.mrb[0].mxu0
      %v5610 = vadd.f32 %v5571, %v5609
      %v5611 = vpop.f32.mrb[0].mxu0
      %v5612 = vpop.f32.mrb[0].mxu0
      %v5613 = vadd.f32 %v5571, %v5612
      %v5614 = vpop.f32.mrb[0].mxu0
      %5615 = vmatprep.mubr.bf16.mxu0 0
      %5616 = vmatmul.mubr.bf16.gmra.mrb[0].mxu0 %v543
      %v5617 = vpop.f32.mrb[0].mxu0
      %v5618 = vadd.f32 %v5571, %v5617
      %v5619 = vpop.f32.mrb[0].mxu0
      %v5620 = vpop.f32.mrb[0].mxu0
      %v5621 = vadd.f32 %v5571, %v5620
      %v5622 = vpop.f32.mrb[0].mxu0
      %5623 = vmatprep.mubr.bf16.mxu0 0
      %5624 = vmatmul.mubr.bf16.gmra.mrb[0].mxu0 %v546
      %v5625 = vpop.f32.mrb[0].mxu0
      %v5626 = vadd.f32 %v5571, %v5625
      %v5627 = vpop.f32.mrb[0].mxu0
      %v5628 = vpop.f32.mrb[0].mxu0
      %v5629 = vadd.f32 %v5571, %v5628
      %v5630 = vpop.f32.mrb[0].mxu0
      %5631 = vmatprep.mubr.bf16.mxu0 0
      %5632 = vmatmul.mubr.bf16.gmra.mrb[0].mxu0 %v549
      %v5633 = vpop.f32.mrb[0].mxu0
      %v5634 = vadd.f32 %v5571, %v5633
      %v5635 = vpop.f32.mrb[0].mxu0
      %v5636 = vpop.f32.mrb[0].mxu0
      %v5637 = vadd.f32 %v5571, %v5636
      %v5638 = vpop.f32.mrb[0].mxu0
      %5639 = vmatprep.mubr.bf16.mxu0 0
      %5640 = vmatmul.mubr.bf16.gmra.mrb[0].mxu0 %v552
      %v5641 = vpop.f32.mrb[0].mxu0
      %v5642 = vadd.f32 %v5571, %v5641
      %v5643 = vpop.f32.mrb[0].mxu0
      %v5644 = vpop.f32.mrb[0].mxu0
      %v5645 = vadd.f32 %v5571, %v5644
      %v5646 = vpop.f32.mrb[0].mxu0
      %5647 = vmatprep.mubr.bf16.mxu0 0
      %5648 = vmatmul.mubr.bf16.gmra.mrb[0].mxu0 %v555
      %v5649 = vpop.f32.mrb[0].mxu0
      %v5650 = vadd.f32 %v5571, %v5649
      %v5651 = vpop.f32.mrb[0].mxu0
      %v5652 = vpop.f32.mrb[0].mxu0
      %v5653 = vadd.f32 %v5571, %v5652
      %v5654 = vpop.f32.mrb[0].mxu0
      %5655 = vmatprep.mubr.bf16.mxu0 0
      %5656 = vmatmul.mubr.bf16.gmra.mrb[0].mxu0 %v558
      %v5657 = vpop.f32.mrb[0].mxu0
      %v5658 = vadd.f32 %v5571, %v5657
      %v5659 = vpop.f32.mrb[0].mxu0
      %v5660 = vpop.f32.mrb[0].mxu0
      %v5661 = vadd.f32 %v5571, %v5660
      %v5662 = vpop.f32.mrb[0].mxu0
      %5663 = vmatprep.mubr.bf16.mxu0 0
      %5664 = vmatmul.mubr.bf16.gmra.mrb[0].mxu0 %v561
      %v5665 = vpop.f32.mrb[0].mxu0
      %v5666 = vadd.f32 %v5571, %v5665
      %v5667 = vpop.f32.mrb[0].mxu0
      %v5668 = vpop.f32.mrb[0].mxu0
      %v5669 = vadd.f32 %v5571, %v5668
      %v5670 = vpop.f32.mrb[0].mxu0
      %5671 = vmatprep.mubr.bf16.mxu0 0
      %5672 = vmatmul.mubr.bf16.gmra.mrb[0].mxu0 %v564
      %v5673 = vpop.f32.mrb[0].mxu0
      %v5674 = vadd.f32 %v5571, %v5673
      %v5675 = vpop.f32.mrb[0].mxu0
      %v5676 = vpop.f32.mrb[0].mxu0
      %v5677 = vadd.f32 %v5571, %v5676
      %v5678 = vpop.f32.mrb[0].mxu0
      %5679 = vmatprep.mubr.bf16.mxu0 0
      %5680 = vmatmul.mubr.bf16.gmra.mrb[0].mxu0 %v567
      %v5681 = vpop.f32.mrb[0].mxu0
      %v5682 = vadd.f32 %v5571, %v5681
      %v5683 = vpop.f32.mrb[0].mxu0
      %v5684 = vpop.f32.mrb[0].mxu0
      %v5685 = vadd.f32 %v5571, %v5684
      %v5686 = vpop.f32.mrb[0].mxu0
      %5687 = vmatprep.mubr.bf16.mxu0 0
      %5688 = vmatmul.mubr.bf16.gmra.mrb[0].mxu0 %v570
      %v5689 = vpop.f32.mrb[0].mxu0
      %v5690 = vadd.f32 %v5571, %v5689
      %v5691 = vpop.f32.mrb[0].mxu0
      %v5692 = vpop.f32.mrb[0].mxu0
      %v5693 = vadd.f32 %v5571, %v5692
      %v5694 = vpop.f32.mrb[0].mxu0
      %5695 = vmatprep.mubr.bf16.mxu0 0
      %5696 = vmatmul.mubr.bf16.gmra.mrb[0].mxu0 %v573
      %v5697 = vpop.f32.mrb[0].mxu0
      %v5698 = vadd.f32 %v5571, %v5697
      %v5699 = vpop.f32.mrb[0].mxu0
      %v5700 = vpop.f32.mrb[0].mxu0
      %v5701 = vadd.f32 %v5571, %v5700
      %v5702 = vpop.f32.mrb[0].mxu0
      %5703 = vmatprep.mubr.bf16.mxu0 0
      %5704 = vmatmul.mubr.bf16.gmra.mrb[0].mxu0 %v576
      %v5705 = vpop.f32.mrb[0].mxu0
      %v5706 = vadd.f32 %v5571, %v5705
      %v5707 = vpop.f32.mrb[0].mxu0
      %v5708 = vpop.f32.mrb[0].mxu0
      %v5709 = vadd.f32 %v5571, %v5708
      %v5710 = vpop.f32.mrb[0].mxu0
      %5711 = vmatprep.mubr.bf16.mxu0 0
      %5712 = vmatmul.mubr.bf16.gmra.mrb[0].mxu0 %v579
      %v5713 = vpop.f32.mrb[0].mxu0
      %v5714 = vadd.f32 %v5571, %v5713
      %v5715 = vpop.f32.mrb[0].mxu0
      %v5716 = vpop.f32.mrb[0].mxu0
      %v5717 = vadd.f32 %v5571, %v5716
      %v5718 = vpop.f32.mrb[0].mxu0
      %5719 = vmatprep.mubr.bf16.mxu0 0
      %5720 = vmatmul.mubr.bf16.gmra.mrb[0].mxu0 %v582
      %v5721 = vpop.f32.mrb[0].mxu0
      %v5722 = vadd.f32 %v5571, %v5721
      %v5723 = vpop.f32.mrb[0].mxu0
      %v5724 = vpop.f32.mrb[0].mxu0
      %v5725 = vadd.f32 %v5571, %v5724
      %v5726 = vpop.f32.mrb[0].mxu0
      %5727 = vmatprep.mubr.bf16.mxu0 0
      %5728 = vmatmul.mubr.bf16.gmra.mrb[0].mxu0 %v1552
      %v5729 = vpop.f32.mrb[0].mxu0
      %v5730 = vadd.f32 %v5571, %v5729
      %v5731 = vpop.f32.mrb[0].mxu0
      %v5732 = vpop.f32.mrb[0].mxu0
      %v5733 = vadd.f32 %v5571, %v5732
      %v5734 = vpop.f32.mrb[0].mxu0
      %5735 = vdwg.mxu0
      %v5736 = vmax.f32 %v5610, 0.0
      %v5737 = vmax.f32 %v5613, 0.0
      %v5738 = vmax.f32 %v5618, 0.0
      %v5739 = vmax.f32 %v5621, 0.0
      %v5740 = vmax.f32 %v5626, 0.0
      %v5741 = vmax.f32 %v5629, 0.0
      %v5742 = vmax.f32 %v5634, 0.0
      %v5743 = vmax.f32 %v5637, 0.0
      %v5744 = vmax.f32 %v5642, 0.0
      %v5745 = vmax.f32 %v5645, 0.0
      %v5746 = vmax.f32 %v5650, 0.0
      %v5747 = vmax.f32 %v5653, 0.0
      %v5748 = vmax.f32 %v5658, 0.0
      %v5749 = vmax.f32 %v5661, 0.0
      %v5750 = vmax.f32 %v5666, 0.0
      %v5751 = vmax.f32 %v5669, 0.0
      %v5752 = vmax.f32 %v5674, 0.0
      %v5753 = vmax.f32 %v5677, 0.0
      %v5754 = vmax.f32 %v5682, 0.0
      %v5755 = vmax.f32 %v5685, 0.0
      %v5756 = vmax.f32 %v5690, 0.0
      %v5757 = vmax.f32 %v5693, 0.0
      %v5758 = vmax.f32 %v5698, 0.0
      %v5759 = vmax.f32 %v5701, 0.0
      %v5760 = vmax.f32 %v5706, 0.0
      %v5761 = vmax.f32 %v5709, 0.0
      %v5762 = vmax.f32 %v5714, 0.0
      %v5763 = vmax.f32 %v5717, 0.0
      %v5764 = vmax.f32 %v5722, 0.0
      %v5765 = vmax.f32 %v5725, 0.0
      %v5766 = vmax.f32 %v5730, 0.0
      %v5767 = vmax.f32 %v5733, 0.0
      %v5768 = vadd.f32 %v5535, %v5736
      %v5769 = vadd.f32 %v5536, %v5737
      %v5770 = vadd.f32 %v5537, %v5738
      %v5771 = vadd.f32 %v5538, %v5739
      %v5772 = vadd.f32 %v5539, %v5740
      %v5773 = vadd.f32 %v5540, %v5741
      %v5774 = vadd.f32 %v5541, %v5742
      %v5775 = vadd.f32 %v5542, %v5743
      %v5776 = vadd.f32 %v5543, %v5744
      %v5777 = vadd.f32 %v5544, %v5745
      %v5778 = vadd.f32 %v5545, %v5746
      %v5779 = vadd.f32 %v5546, %v5747
      %v5780 = vadd.f32 %v5547, %v5748
      %v5781 = vadd.f32 %v5548, %v5749
      %v5782 = vadd.f32 %v5549, %v5750
      %v5783 = vadd.f32 %v5550, %v5751
      %v5784 = vadd.f32 %v5551, %v5752
      %v5785 = vadd.f32 %v5552, %v5753
      %v5786 = vadd.f32 %v5553, %v5754
      %v5787 = vadd.f32 %v5554, %v5755
      %v5788 = vadd.f32 %v5555, %v5756
      %v5789 = vadd.f32 %v5556, %v5757
      %v5790 = vadd.f32 %v5557, %v5758
      %v5791 = vadd.f32 %v5558, %v5759
      %v5792 = vadd.f32 %v5559, %v5760
      %v5793 = vadd.f32 %v5560, %v5761
      %v5794 = vadd.f32 %v5561, %v5762
      %v5795 = vadd.f32 %v5562, %v5763
      %v5796 = vadd.f32 %v5563, %v5764
      %v5797 = vadd.f32 %v5564, %v5765
      %v5798 = vadd.f32 %v5565, %v5766
      %v5799 = vadd.f32 %v5566, %v5767
      %v5800 = vmax.f32 %v5768, 0.0
      %v5801 = vmax.f32 %v5769, 0.0
      %v5802 = vmax.f32 %v5770, 0.0
      %v5803 = vmax.f32 %v5771, 0.0
      %v5804 = vmax.f32 %v5772, 0.0
      %v5805 = vmax.f32 %v5773, 0.0
      %v5806 = vmax.f32 %v5774, 0.0
      %v5807 = vmax.f32 %v5775, 0.0
      %v5808 = vmax.f32 %v5776, 0.0
      %v5809 = vmax.f32 %v5777, 0.0
      %v5810 = vmax.f32 %v5778, 0.0
      %v5811 = vmax.f32 %v5779, 0.0
      %v5812 = vmax.f32 %v5780, 0.0
      %v5813 = vmax.f32 %v5781, 0.0
      %v5814 = vmax.f32 %v5782, 0.0
      %v5815 = vmax.f32 %v5783, 0.0
      %v5816 = vmax.f32 %v5784, 0.0
      %v5817 = vmax.f32 %v5785, 0.0
      %v5818 = vmax.f32 %v5786, 0.0
      %v5819 = vmax.f32 %v5787, 0.0
      %v5820 = vmax.f32 %v5788, 0.0
      %v5821 = vmax.f32 %v5789, 0.0
      %v5822 = vmax.f32 %v5790, 0.0
      %v5823 = vmax.f32 %v5791, 0.0
      %v5824 = vmax.f32 %v5792, 0.0
      %v5825 = vmax.f32 %v5793, 0.0
      %v5826 = vmax.f32 %v5794, 0.0
      %v5827 = vmax.f32 %v5795, 0.0
      %v5828 = vmax.f32 %v5796, 0.0
      %v5829 = vmax.f32 %v5797, 0.0
      %v5830 = vmax.f32 %v5798, 0.0
      %v5831 = vmax.f32 %v5799, 0.0
      %5832 = vst [vmem:[%s224] sm:$0xff] %v5800
      %5833 = vst [vmem:[%s224 + $0x8] sm:$0xff] %v5801
      %5834 = vst [vmem:[%s224 + $0x10] sm:$0xff] %v5802
      %5835 = vst [vmem:[%s224 + $0x18] sm:$0xff] %v5803
      %5836 = vst [vmem:[%s224 + $0x20] sm:$0xff] %v5804
      %5837 = vst [vmem:[%s224 + $0x28] sm:$0xff] %v5805
      %5838 = vst [vmem:[%s224 + $0x30] sm:$0xff] %v5806
      %5839 = vst [vmem:[%s224 + $0x38] sm:$0xff] %v5807
      %5840 = vst [vmem:[%s224 + $0x40] sm:$0xff] %v5808
      %5841 = vst [vmem:[%s224 + $0x48] sm:$0xff] %v5809
      %5842 = vst [vmem:[%s224 + $0x50] sm:$0xff] %v5810
      %5843 = vst [vmem:[%s224 + $0x58] sm:$0xff] %v5811
      %5844 = vst [vmem:[%s224 + $0x60] sm:$0xff] %v5812
      %5845 = vst [vmem:[%s224 + $0x68] sm:$0xff] %v5813
      %5846 = vst [vmem:[%s224 + $0x70] sm:$0xff] %v5814
      %5847 = vst [vmem:[%s224 + $0x78] sm:$0xff] %v5815
      %5848 = vst [vmem:[%s224 + $0x80] sm:$0xff] %v5816
      %5849 = vst [vmem:[%s224 + $0x88] sm:$0xff] %v5817
      %5850 = vst [vmem:[%s224 + $0x90] sm:$0xff] %v5818
      %5851 = vst [vmem:[%s224 + $0x98] sm:$0xff] %v5819
      %5852 = vst [vmem:[%s224 + $0xa0] sm:$0xff] %v5820
      %5853 = vst [vmem:[%s224 + $0xa8] sm:$0xff] %v5821
      %5854 = vst [vmem:[%s224 + $0xb0] sm:$0xff] %v5822
      %5855 = vst [vmem:[%s224 + $0xb8] sm:$0xff] %v5823
      %5856 = vst [vmem:[%s224 + $0xc0] sm:$0xff] %v5824
      %5857 = vst [vmem:[%s224 + $0xc8] sm:$0xff] %v5825
      %5858 = vst [vmem:[%s224 + $0xd0] sm:$0xff] %v5826
      %5859 = vst [vmem:[%s224 + $0xd8] sm:$0xff] %v5827
      %5860 = vst [vmem:[%s224 + $0xe0] sm:$0xff] %v5828
      %5861 = vst [vmem:[%s224 + $0xe8] sm:$0xff] %v5829
      %5862 = vst [vmem:[%s224 + $0xf0] sm:$0xff] %v5830
      %5863 = vst [vmem:[%s224 + $0xf8] sm:$0xff] %v5831
      %p5864 = scmp.lt.s32.totalorder %s16, 1
      %s5865 = scalar_select %p5864, %s16, 1
      %s5866 = smul.addr %s5865, 32
      %s5867 = smul.addr %s5866, 8
      %s5868 = scalar_lea.vmem %s5, %s5867
      // Predicated region
      $region41: #{res_conv2d_forward.1} parent=39 // pred_check
        %p5869 = pneg %p144
      $region42: #{res_conv2d_forward.1} parent=39 // pred_check_branch
        %5871 = sbr.rel (%p5869) target = $region44
      $region43: #{res_conv2d_forward.1} parent=39 // pred_region
        _
      $region44: #{res_conv2d_forward.1} parent=39 // pred_fallthru
        _
    $region40: #{res_conv2d_forward.1} parent=5 // pred_fallthru
      _
    %p5872 = scmp.le.s32.totalorder 2, %s11
    // Predicated region
    $region45: #{res_conv2d_forward.1} parent=5 // pred_check
      %p5873 = pneg %p5872
    $region46: #{res_conv2d_forward.1} parent=5 // pred_check_branch
      %5875 = sbr.rel (%p5873) target = $region48
    $region47: #{res_conv2d_forward.1} parent=5 // pred_region
      %s5876 = ssub.s32 %s11, 2
      // Predicated region
      $region49: #{res_conv2d_forward.1} parent=47 // pred_check
        %p5877 = pneg %p150
      $region50: #{res_conv2d_forward.1} parent=47 // pred_check_branch
        %5879 = sbr.rel (%p5877) target = $region52
      $region51: #{res_conv2d_forward.1} parent=47 // pred_region
        %p5880 = scmp.lt.s32.totalorder %s17, 1
        %s5881 = scalar_select %p5880, %s17, 1
        %s5882 = smul.addr %s5881, 32
        %s5883 = smul.addr %s5882, 8
        %s5884 = scalar_lea.vmem %s5, %s5883
      $region52: #{res_conv2d_forward.1} parent=47 // pred_fallthru
        _
    $region48: #{res_conv2d_forward.1} parent=5 // pred_fallthru
      _
  $region6: #{res_conv2d_forward.1} parent=0 // loop_footer
    %s15 = sadd.s32 1, %s11
  $region7: #{res_conv2d_forward.1} parent=0 // loop_footer_branch
    %10 = sbr.rel target = $region3
  $region8: #{res_conv2d_forward.1} parent=0 // loop_exit
    _

</llo_original>
